<compile_context>
chip_gen: v7x
topology: tpu7x:2x2x1
jax: 0.10.0
libtpu: 0.0.40
codegen_flags: <defaults>
</compile_context>

<pallas_src>
import functools
import math

import jax
import jax.numpy as jnp
import numpy as np
from jax.experimental import pallas as pl
from jax.experimental.pallas import tpu as pltpu

_CPG = 4  # channels per group: GroupNorm(C//4, C) and DWConv groups = C//4.


def _round_up(x, m):
    return ((x + m - 1) // m) * m


def _gelu_exact(x):
    # nn.GELU() default == exact erf GELU; erf via Abramowitz & Stegun 7.1.26
    # (|err| <= 1.5e-7).  All math in f32 (v5e has no bf16 VPU/EUP).
    a1, a2, a3, a4, a5 = (0.254829592, -0.284496736, 1.421413741,
                          -1.453152027, 1.061405429)
    p = 0.3275911
    z = x * (1.0 / math.sqrt(2.0))
    sgn = jnp.where(z < 0.0, -1.0, 1.0)
    az = jnp.abs(z)
    t = 1.0 / (1.0 + p * az)
    poly = ((((a5 * t + a4) * t + a3) * t + a2) * t + a1) * t
    erf = sgn * (1.0 - poly * jnp.exp(-az * az))                  # EUP exp
    return 0.5 * x * (1.0 + erf)


def _group_norm(h, gamma, beta, avg_mat, block_n, HW, eps=1e-5):
    # h: (block_n*HW, C) f32.  PyTorch GroupNorm semantics: per-sample stats
    # over (C/G, H, W), biased variance, eps=1e-5.
    # Per-sample sums are sublane reductions over a (block_n, HW, C) view;
    # group averaging is a tiny (block_n, C) x (C, C) matmul per moment;
    # normalization is a single fused broadcast fma (no K=block_n matmuls).
    P, C = h.shape
    h3 = h.reshape(block_n, HW, C)
    s1 = jnp.sum(h3, axis=1)                       # (block_n, C)
    s2 = jnp.sum(h3 * h3, axis=1)                  # (block_n, C)
    mean = jnp.dot(s1, avg_mat, preferred_element_type=jnp.float32)
    ex2 = jnp.dot(s2, avg_mat, preferred_element_type=jnp.float32)
    var = ex2 - mean * mean
    inv = jax.lax.rsqrt(var + eps)                 # EUP
    a = inv * gamma                                # (block_n, C)
    b = beta - mean * a                            # (block_n, C)
    out = h3 * a[:, None, :] + b[:, None, :]
    return out.reshape(P, C)


def mlp_kernel(x_ref, w1_ref, b1_ref, g1w_ref, g1b_ref,
               dwt_ref, dwb_ref, g2w_ref, g2b_ref,
               w2_ref, b2_ref, g3w_ref, g3b_ref,
               avgh_ref, avgo_ref, mask_ref,
               o_ref, *, H, W, block_n):
    HW = H * W
    P = block_n * HW

    x = x_ref[...]                                  # (P, Cin) f32

    # ---- fc1: 1x1 conv == channel matmul (bf16 MXU, f32 accumulate) --------
    h = jnp.dot(x.astype(jnp.bfloat16), w1_ref[...],
                preferred_element_type=jnp.float32) + b1_ref[...]
    h = _group_norm(h, g1w_ref[...], g1b_ref[...], avgh_ref[...], block_n, HW)
    # linear=False in the module -> no ReLU here.

    # ---- DWConv: grouped 3x3, stride 1, pad 1 -------------------------------
    # 9 block-diagonal (Chp, Chp) bf16 MXU matmuls; spatial shift = sublane
    # roll (XLU) + precomputed boundary mask; center tap needs no mask.
    mask_all = mask_ref[...]                        # (P, 9)
    acc = jnp.zeros_like(h)
    for dh in (-1, 0, 1):
        for dw in (-1, 0, 1):
            tap = (dh + 1) * 3 + (dw + 1)
            off = dh * W + dw
            # src[p] = h[(p + off) % P]  (np.roll semantics)
            src = pltpu.roll(h, (-off) % P, 0) if off else h
            if off:
                src = src * mask_all[:, tap:tap + 1]
            acc = acc + jnp.dot(src.astype(jnp.bfloat16), dwt_ref[tap],
                                preferred_element_type=jnp.float32)
    h = acc + dwb_ref[...]
    h = _group_norm(h, g2w_ref[...], g2b_ref[...], avgh_ref[...], block_n, HW)
    h = _gelu_exact(h)
    # nn.Dropout(p=0.0) is the identity.

    # ---- fc2: 1x1 conv ------------------------------------------------------
    y = jnp.dot(h.astype(jnp.bfloat16), w2_ref[...],
                preferred_element_type=jnp.float32) + b2_ref[...]
    y = _group_norm(y, g3w_ref[...], g3b_ref[...], avgo_ref[...], block_n, HW)
    o_ref[...] = y.astype(o_ref.dtype)


# ---------------- wrapper-side constants -------------------------------------
def _group_avg_matrix(Cp, denom):
    # A[i, j] = 1/denom if channels i, j share a group of _CPG, else 0.
    idx = np.arange(Cp)
    same = (idx[:, None] // _CPG) == (idx[None, :] // _CPG)
    return jnp.asarray(same.astype(np.float32) / float(denom))


def _boundary_masks(block_n, H, W):
    # masks[p, tap] = 1.0 iff destination position p (within its sample) reads
    # an in-bounds source for 3x3 tap `tap` (zero padding otherwise).
    HW = H * W
    P = block_n * HW
    pos = np.arange(P)
    row = (pos // W) % H
    col = pos % W
    m = np.zeros((P, 9), np.float32)
    for dh in (-1, 0, 1):
        for dw in (-1, 0, 1):
            tap = (dh + 1) * 3 + (dw + 1)
            ok = ((row + dh >= 0) & (row + dh < H) &
                  (col + dw >= 0) & (col + dw < W))
            m[:, tap] = ok.astype(np.float32)
    return jnp.asarray(m)


def _pick_block_n(N, HW, c_max, vmem_budget=24 * 1024 * 1024):
    # Keep ~10 live f32 (block_n*HW, c_max) tiles (activations, rolls, acc,
    # double-buffered in/out) under the budget (conservative for v7x's 64 MiB
    # physical VMEM).  Prefer an even number of grid steps so both v7x TCs stay
    # busy; v5e/v6e are single-TC and extra steps only cost ~0.35us each.
    def fits(bn):
        return 10 * bn * HW * c_max * 4 <= vmem_budget
    divisors = [d for d in range(1, N + 1) if N % d == 0 and fits(d)]
    if not divisors:
        return 1
    even = [d for d in divisors if (N // d) % 2 == 0]
    return max(even) if even else max(divisors)


def mlp_forward(x_nchw, p, *, block_n=None):
    N, Cin, H, W = x_nchw.shape
    HW = H * W
    Chp = p["w1m"].shape[1]
    Coutp = p["w2m"].shape[1]
    Cout = p["Cout"]
    c_max = max(Chp, Coutp)
    if block_n is None:
        block_n = _pick_block_n(N, HW, c_max)
    assert N % block_n == 0 and HW % 8 == 0
    P = block_n * HW

    # NCHW -> (N*H*W, C): spatial on sublanes, channels on lanes.
    x_flat = jnp.transpose(x_nchw, (0, 2, 3, 1)).reshape(N * HW, Cin)

    avg_h = _group_avg_matrix(Chp, HW * _CPG)
    avg_o = _group_avg_matrix(Coutp, HW * _CPG)
    masks = _boundary_masks(block_n, H, W)

    kernel = functools.partial(mlp_kernel, H=H, W=W, block_n=block_n)
    c2 = lambda n: (0, 0)
    c3 = lambda n: (0, 0, 0)

    out_flat = pl.pallas_call(
        kernel,
        out_shape=jax.ShapeDtypeStruct((N * HW, Coutp), jnp.float32),
        grid=(N // block_n,),
        in_specs=[
            pl.BlockSpec((P, Cin), lambda n: (n, 0)),      # x
            pl.BlockSpec((Cin, Chp), c2),                  # w1 (bf16)
            pl.BlockSpec((1, Chp), c2),                    # b1
            pl.BlockSpec((1, Chp), c2),                    # gn1 gamma
            pl.BlockSpec((1, Chp), c2),                    # gn1 beta
            pl.BlockSpec((9, Chp, Chp), c3),               # dwconv taps (bf16)
            pl.BlockSpec((1, Chp), c2),                    # dwconv bias
            pl.BlockSpec((1, Chp), c2),                    # gn2 gamma
            pl.BlockSpec((1, Chp), c2),                    # gn2 beta
            pl.BlockSpec((Chp, Coutp), c2),                # w2 (bf16)
            pl.BlockSpec((1, Coutp), c2),                  # b2
            pl.BlockSpec((1, Coutp), c2),                  # gn3 gamma
            pl.BlockSpec((1, Coutp), c2),                  # gn3 beta
            pl.BlockSpec((Chp, Chp), c2),                  # group-avg (hidden)
            pl.BlockSpec((Coutp, Coutp), c2),              # group-avg (out)
            pl.BlockSpec((P, 9), c2),                      # dwconv masks
        ],
        out_specs=pl.BlockSpec((P, Coutp), lambda n: (n, 0)),
        compiler_params=pltpu.CompilerParams(
            dimension_semantics=("parallel",),
            vmem_limit_bytes=32 * 1024 * 1024),
    )(x_flat, p["w1m"], p["b1p"], p["g1wp"], p["g1bp"],
      p["dwt"], p["dwbp"], p["g2wp"], p["g2bp"],
      p["w2m"], p["b2p"], p["g3wp"], p["g3bp"],
      avg_h, avg_o, masks)

    # TODO(synk): fuse this Cout slice + NHWC->NCHW transpose into the consumer
    #             to avoid an extra HBM round trip when Cout << Coutp.
    out = out_flat[:, :Cout].reshape(N, H, W, Cout)
    return jnp.transpose(out, (0, 3, 1, 2))


def make_params(key, in_features, out_features):
    hidden = out_features // 4
    assert hidden % _CPG == 0 and out_features % _CPG == 0
    groups = hidden // _CPG          # DWConv groups (group_num=4)
    cpg = _CPG

    ks = jax.random.split(key, 9)
    # Conv init: normal(0, sqrt(2/fan_out)), fan_out = kh*kw*out/groups; bias 0.
    w1 = jax.random.normal(ks[0], (hidden, in_features, 1, 1),
                           jnp.float32) * math.sqrt(2.0 / hidden)
    dww = jax.random.normal(ks[1], (hidden, cpg, 3, 3),
                            jnp.float32) * math.sqrt(2.0 / (9 * hidden / groups))
    w2 = jax.random.normal(ks[2], (out_features, hidden, 1, 1),
                           jnp.float32) * math.sqrt(2.0 / out_features)
    b1 = jnp.zeros((hidden,), jnp.float32)
    dwb = jnp.zeros((hidden,), jnp.float32)
    b2 = jnp.zeros((out_features,), jnp.float32)

    # GroupNorm affine params (defaults 1/0; perturb to exercise the path).
    g1w = 1.0 + 0.1 * jax.random.normal(ks[3], (hidden,), jnp.float32)
    g1b = 0.1 * jax.random.normal(ks[4], (hidden,), jnp.float32)
    g2w = 1.0 + 0.1 * jax.random.normal(ks[5], (hidden,), jnp.float32)
    g2b = 0.1 * jax.random.normal(ks[6], (hidden,), jnp.float32)
    g3w = 1.0 + 0.1 * jax.random.normal(ks[7], (out_features,), jnp.float32)
    g3b = 0.1 * jax.random.normal(ks[8], (out_features,), jnp.float32)

    # ---- Pallas-ready forms: channels zero-padded to lane-dense 128 ---------
    Chp = _round_up(hidden, 128)
    Coutp = _round_up(out_features, 128)

    def pad_row(v, C):
        out = np.zeros((1, C), np.float32)
        out[0, :v.shape[0]] = np.asarray(v)
        return jnp.asarray(out)

    w1m = np.zeros((in_features, Chp), np.float32)
    w1m[:, :hidden] = np.asarray(w1)[:, :, 0, 0].T
    w2m = np.zeros((Chp, Coutp), np.float32)
    w2m[:hidden, :out_features] = np.asarray(w2)[:, :, 0, 0].T

    # Dense per-tap block-diagonal DWConv weights (MXU path):
    #   dwt[tap, ci, co] = dww[co, ci - cpg*(co//cpg), tap//3, tap%3]
    # (zero outside co's group of cpg channels and for padded channels).
    dw_np = np.asarray(dww)
    dwt = np.zeros((9, Chp, Chp), np.float32)
    for co in range(hidden):
        g = co // cpg
        for k in range(cpg):
            ci = g * cpg + k
            for kh in range(3):
                for kw in range(3):
                    dwt[kh * 3 + kw, ci, co] = dw_np[co, k, kh, kw]

    return {
        "Ch": hidden, "Cout": out_features, "groups": groups,
        # raw params (used by the pure-JAX reference)
        "w1": w1, "b1": b1, "g1w": g1w, "g1b": g1b,
        "dww": dww, "dwb": dwb, "g2w": g2w, "g2b": g2b,
        "w2": w2, "b2": b2, "g3w": g3w, "g3b": g3b,
        # padded, Pallas-ready params (weights stored bf16: halves DMA/VMEM,
        # matmuls accumulate in f32 anyway)
        "w1m": jnp.asarray(w1m, jnp.bfloat16),
        "w2m": jnp.asarray(w2m, jnp.bfloat16),
        "dwt": jnp.asarray(dwt, jnp.bfloat16),
        "b1p": pad_row(b1, Chp), "dwbp": pad_row(dwb, Chp),
        "b2p": pad_row(b2, Coutp),
        "g1wp": pad_row(g1w, Chp), "g1bp": pad_row(g1b, Chp),
        "g2wp": pad_row(g2w, Chp), "g2bp": pad_row(g2b, Chp),
        "g3wp": pad_row(g3w, Coutp), "g3bp": pad_row(g3b, Coutp),
    }


# ---------------- pure-JAX reference (NCHW, mirrors the PyTorch module) ------
def _ref_group_norm(x, gamma, beta, groups, eps=1e-5):
    N, C, H, W = x.shape
    xg = x.reshape(N, groups, (C // groups) * H * W)
    m = xg.mean(axis=2, keepdims=True)
    v = jnp.mean((xg - m) ** 2, axis=2, keepdims=True)
    xn = ((xg - m) * jax.lax.rsqrt(v + eps)).reshape(N, C, H, W)
    return xn * gamma.reshape(1, C, 1, 1) + beta.reshape(1, C, 1, 1)


def ref_forward(x, p):
    dn = ("NCHW", "OIHW", "NCHW")
    prec = jax.lax.Precision.HIGHEST
    y = jax.lax.conv_general_dilated(x, p["w1"], (1, 1), "VALID",
                                     dimension_numbers=dn, precision=prec)
    y = y + p["b1"].reshape(1, -1, 1, 1)
    y = _ref_group_norm(y, p["g1w"], p["g1b"], p["Ch"] // 4)
    y = jax.lax.conv_general_dilated(y, p["dww"], (1, 1), ((1, 1), (1, 1)),
                                     dimension_numbers=dn,
                                     feature_group_count=p["groups"],
                                     precision=prec)
    y = y + p["dwb"].reshape(1, -1, 1, 1)
    y = _ref_group_norm(y, p["g2w"], p["g2b"], p["Ch"] // 4)
    y = 0.5 * y * (1.0 + jax.lax.erf(y / jnp.sqrt(2.0)))   # exact GELU
    y = jax.lax.conv_general_dilated(y, p["w2"], (1, 1), "VALID",
                                     dimension_numbers=dn, precision=prec)
    y = y + p["b2"].reshape(1, -1, 1, 1)
    y = _ref_group_norm(y, p["g3w"], p["g3b"], p["Cout"] // 4)
    return y


if __name__ == "__main__":
    N, Cin, H, W = 4, 16, 8, 8
    out_features = 32   # hidden = 8, dwconv groups = 2, gn groups = 2/2/8

    key = jax.random.PRNGKey(0)
    kp, kx = jax.random.split(key)
    params = make_params(kp, Cin, out_features)
    x = jax.random.normal(kx, (N, Cin, H, W), jnp.float32)

    out = jax.block_until_ready(mlp_forward(x, params))   # block_n auto -> 2
    ref = jax.block_until_ready(ref_forward(x, params))

    assert out.shape == (N, out_features, H, W)
    # fc1 / dwconv / fc2 run as bf16 x bf16 -> f32 MXU matmuls (per the perf
    # feedback), so compare against the f32/HIGHEST reference at a bf16-level
    # tolerance; a layout/roll/mask bug would produce O(1) errors and still
    # fail this check.
    np.testing.assert_allclose(np.asarray(out), np.asarray(ref),
                               rtol=5e-2, atol=5e-2)
    print("KERNEL_OK")
</pallas_src>

<mosaic_0001>
module attributes {stable_mosaic.version = 11 : i64} {
  func.func @mlp_kernel(%arg0: i32, %arg1: memref<128x16xf32, #tpu.memory_space<vmem>>, %arg2: memref<16x128xbf16, #tpu.memory_space<vmem>>, %arg3: memref<1x128xf32, #tpu.memory_space<vmem>>, %arg4: memref<1x128xf32, #tpu.memory_space<vmem>>, %arg5: memref<1x128xf32, #tpu.memory_space<vmem>>, %arg6: memref<9x128x128xbf16, #tpu.memory_space<vmem>>, %arg7: memref<1x128xf32, #tpu.memory_space<vmem>>, %arg8: memref<1x128xf32, #tpu.memory_space<vmem>>, %arg9: memref<1x128xf32, #tpu.memory_space<vmem>>, %arg10: memref<128x128xbf16, #tpu.memory_space<vmem>>, %arg11: memref<1x128xf32, #tpu.memory_space<vmem>>, %arg12: memref<1x128xf32, #tpu.memory_space<vmem>>, %arg13: memref<1x128xf32, #tpu.memory_space<vmem>>, %arg14: memref<128x128xf32, #tpu.memory_space<vmem>>, %arg15: memref<128x128xf32, #tpu.memory_space<vmem>>, %arg16: memref<128x9xf32, #tpu.memory_space<vmem>>, %arg17: memref<128x128xf32, #tpu.memory_space<vmem>>) attributes {dimension_semantics = [#tpu.dimension_semantics<parallel>], iteration_bounds = array<i64: 2>, scalar_prefetch = 0 : i64, scratch_operands = 0 : i64, tpu.core_type = #tpu.core_type<tc>, window_params = [{transform_indices = @transform_0, window_bounds = array<i64: 128, 16>}, {pipeline_mode = #tpu.pipeline_mode<synchronous>, transform_indices = @transform_1, window_bounds = array<i64: 16, 128>}, {pipeline_mode = #tpu.pipeline_mode<synchronous>, transform_indices = @transform_2, window_bounds = array<i64: 1, 128>}, {pipeline_mode = #tpu.pipeline_mode<synchronous>, transform_indices = @transform_3, window_bounds = array<i64: 1, 128>}, {pipeline_mode = #tpu.pipeline_mode<synchronous>, transform_indices = @transform_4, window_bounds = array<i64: 1, 128>}, {pipeline_mode = #tpu.pipeline_mode<synchronous>, transform_indices = @transform_5, window_bounds = array<i64: 9, 128, 128>}, {pipeline_mode = #tpu.pipeline_mode<synchronous>, transform_indices = @transform_6, window_bounds = array<i64: 1, 128>}, {pipeline_mode = #tpu.pipeline_mode<synchronous>, transform_indices = @transform_7, window_bounds = array<i64: 1, 128>}, {pipeline_mode = #tpu.pipeline_mode<synchronous>, transform_indices = @transform_8, window_bounds = array<i64: 1, 128>}, {pipeline_mode = #tpu.pipeline_mode<synchronous>, transform_indices = @transform_9, window_bounds = array<i64: 128, 128>}, {pipeline_mode = #tpu.pipeline_mode<synchronous>, transform_indices = @transform_10, window_bounds = array<i64: 1, 128>}, {pipeline_mode = #tpu.pipeline_mode<synchronous>, transform_indices = @transform_11, window_bounds = array<i64: 1, 128>}, {pipeline_mode = #tpu.pipeline_mode<synchronous>, transform_indices = @transform_12, window_bounds = array<i64: 1, 128>}, {pipeline_mode = #tpu.pipeline_mode<synchronous>, transform_indices = @transform_13, window_bounds = array<i64: 128, 128>}, {pipeline_mode = #tpu.pipeline_mode<synchronous>, transform_indices = @transform_14, window_bounds = array<i64: 128, 128>}, {pipeline_mode = #tpu.pipeline_mode<synchronous>, transform_indices = @transform_15, window_bounds = array<i64: 128, 9>}, {transform_indices = @transform_16, window_bounds = array<i64: 128, 128>}]} {
    %c0 = arith.constant 0 : index
    %c0_0 = arith.constant 0 : index
    %0 = vector.load %arg1[%c0, %c0_0] : memref<128x16xf32, #tpu.memory_space<vmem>>, vector<128x16xf32>
    %1 = arith.truncf %0 : vector<128x16xf32> to vector<128x16xbf16>
    %c0_1 = arith.constant 0 : index
    %c0_2 = arith.constant 0 : index
    %2 = vector.load %arg2[%c0_1, %c0_2] : memref<16x128xbf16, #tpu.memory_space<vmem>>, vector<16x128xbf16>
    %cst = arith.constant dense<0.000000e+00> : vector<128x128xf32>
    %3 = tpu.matmul %1, %2, %cst {dimension_numbers = #tpu.dot_dimension_numbers<[1], [0], [0], [1], [0, 0, 1, 1], [], []>} : vector<128x16xbf16>, vector<16x128xbf16>, vector<128x128xf32> -> vector<128x128xf32>
    %c0_3 = arith.constant 0 : index
    %c0_4 = arith.constant 0 : index
    %4 = vector.load %arg3[%c0_3, %c0_4] : memref<1x128xf32, #tpu.memory_space<vmem>>, vector<1x128xf32>
    %5 = vector.broadcast %4 : vector<1x128xf32> to vector<128x128xf32>
    %6 = arith.addf %3, %5 : vector<128x128xf32>
    %c0_5 = arith.constant 0 : index
    %c0_6 = arith.constant 0 : index
    %7 = vector.load %arg4[%c0_5, %c0_6] : memref<1x128xf32, #tpu.memory_space<vmem>>, vector<1x128xf32>
    %c0_7 = arith.constant 0 : index
    %c0_8 = arith.constant 0 : index
    %8 = vector.load %arg5[%c0_7, %c0_8] : memref<1x128xf32, #tpu.memory_space<vmem>>, vector<1x128xf32>
    %c0_9 = arith.constant 0 : index
    %c0_10 = arith.constant 0 : index
    %9 = vector.load %arg14[%c0_9, %c0_10] : memref<128x128xf32, #tpu.memory_space<vmem>>, vector<128x128xf32>
    %10 = vector.shape_cast %6 : vector<128x128xf32> to vector<2x64x128xf32>
    %cst_11 = arith.constant dense<0.000000e+00> : vector<2x128xf32>
    %11 = vector.multi_reduction <add>, %10, %cst_11 [1] : vector<2x64x128xf32> to vector<2x128xf32>
    %12 = arith.mulf %10, %10 : vector<2x64x128xf32>
    %cst_12 = arith.constant dense<0.000000e+00> : vector<2x128xf32>
    %13 = vector.multi_reduction <add>, %12, %cst_12 [1] : vector<2x64x128xf32> to vector<2x128xf32>
    %cst_13 = arith.constant dense<0.000000e+00> : vector<2x128xf32>
    %14 = tpu.matmul %11, %9, %cst_13 {dimension_numbers = #tpu.dot_dimension_numbers<[1], [0], [0], [1], [0, 0, 1, 1], [], []>} : vector<2x128xf32>, vector<128x128xf32>, vector<2x128xf32> -> vector<2x128xf32>
    %cst_14 = arith.constant dense<0.000000e+00> : vector<2x128xf32>
    %15 = tpu.matmul %13, %9, %cst_14 {dimension_numbers = #tpu.dot_dimension_numbers<[1], [0], [0], [1], [0, 0, 1, 1], [], []>} : vector<2x128xf32>, vector<128x128xf32>, vector<2x128xf32> -> vector<2x128xf32>
    %16 = arith.mulf %14, %14 : vector<2x128xf32>
    %17 = arith.subf %15, %16 : vector<2x128xf32>
    %cst_15 = arith.constant 9.99999974E-6 : f32
    %18 = vector.broadcast %cst_15 : f32 to vector<2x128xf32>
    %19 = arith.addf %17, %18 : vector<2x128xf32>
    %20 = math.rsqrt %19 : vector<2x128xf32>
    %21 = vector.broadcast %7 : vector<1x128xf32> to vector<2x128xf32>
    %22 = arith.mulf %20, %21 : vector<2x128xf32>
    %23 = arith.mulf %14, %22 : vector<2x128xf32>
    %24 = vector.broadcast %8 : vector<1x128xf32> to vector<2x128xf32>
    %25 = arith.subf %24, %23 : vector<2x128xf32>
    %26 = vector.shape_cast %22 : vector<2x128xf32> to vector<2x1x128xf32>
    %27 = vector.broadcast %26 : vector<2x1x128xf32> to vector<2x64x128xf32>
    %28 = arith.mulf %10, %27 : vector<2x64x128xf32>
    %29 = vector.shape_cast %25 : vector<2x128xf32> to vector<2x1x128xf32>
    %30 = vector.broadcast %29 : vector<2x1x128xf32> to vector<2x64x128xf32>
    %31 = arith.addf %28, %30 : vector<2x64x128xf32>
    %32 = vector.shape_cast %31 : vector<2x64x128xf32> to vector<128x128xf32>
    %c0_16 = arith.constant 0 : index
    %c0_17 = arith.constant 0 : index
    %33 = vector.load %arg16[%c0_16, %c0_17] : memref<128x9xf32, #tpu.memory_space<vmem>>, vector<128x9xf32>
    %cst_18 = arith.constant 0.000000e+00 : f32
    %34 = vector.broadcast %cst_18 : f32 to vector<128x128xf32>
    %c9_i32 = arith.constant 9 : i32
    %35 = tpu.dynamic_rotate %32 by %c9_i32 dim 0 : vector<128x128xf32>, i32 -> vector<128x128xf32>
    %36 = vector.extract_strided_slice %33 {offsets = [0, 0], sizes = [128, 1], strides = [1, 1]} : vector<128x9xf32> to vector<128x1xf32>
    %37 = vector.broadcast %36 : vector<128x1xf32> to vector<128x128xf32>
    %38 = arith.mulf %35, %37 : vector<128x128xf32>
    %39 = arith.truncf %38 : vector<128x128xf32> to vector<128x128xbf16>
    %c0_19 = arith.constant 0 : index
    %c0_20 = arith.constant 0 : index
    %c0_21 = arith.constant 0 : index
    %40 = vector.load %arg6[%c0_19, %c0_20, %c0_21] : memref<9x128x128xbf16, #tpu.memory_space<vmem>>, vector<1x128x128xbf16>
    %41 = vector.shape_cast %40 : vector<1x128x128xbf16> to vector<128x128xbf16>
    %cst_22 = arith.constant dense<0.000000e+00> : vector<128x128xf32>
    %42 = tpu.matmul %39, %41, %cst_22 {dimension_numbers = #tpu.dot_dimension_numbers<[1], [0], [0], [1], [0, 0, 1, 1], [], []>} : vector<128x128xbf16>, vector<128x128xbf16>, vector<128x128xf32> -> vector<128x128xf32>
    %43 = arith.addf %34, %42 : vector<128x128xf32>
    %c8_i32 = arith.constant 8 : i32
    %44 = tpu.dynamic_rotate %32 by %c8_i32 dim 0 : vector<128x128xf32>, i32 -> vector<128x128xf32>
    %45 = vector.extract_strided_slice %33 {offsets = [0, 1], sizes = [128, 1], strides = [1, 1]} : vector<128x9xf32> to vector<128x1xf32>
    %46 = vector.broadcast %45 : vector<128x1xf32> to vector<128x128xf32>
    %47 = arith.mulf %44, %46 : vector<128x128xf32>
    %48 = arith.truncf %47 : vector<128x128xf32> to vector<128x128xbf16>
    %c1 = arith.constant 1 : index
    %c0_23 = arith.constant 0 : index
    %c0_24 = arith.constant 0 : index
    %49 = vector.load %arg6[%c1, %c0_23, %c0_24] : memref<9x128x128xbf16, #tpu.memory_space<vmem>>, vector<1x128x128xbf16>
    %50 = vector.shape_cast %49 : vector<1x128x128xbf16> to vector<128x128xbf16>
    %cst_25 = arith.constant dense<0.000000e+00> : vector<128x128xf32>
    %51 = tpu.matmul %48, %50, %cst_25 {dimension_numbers = #tpu.dot_dimension_numbers<[1], [0], [0], [1], [0, 0, 1, 1], [], []>} : vector<128x128xbf16>, vector<128x128xbf16>, vector<128x128xf32> -> vector<128x128xf32>
    %52 = arith.addf %43, %51 : vector<128x128xf32>
    %c7_i32 = arith.constant 7 : i32
    %53 = tpu.dynamic_rotate %32 by %c7_i32 dim 0 : vector<128x128xf32>, i32 -> vector<128x128xf32>
    %54 = vector.extract_strided_slice %33 {offsets = [0, 2], sizes = [128, 1], strides = [1, 1]} : vector<128x9xf32> to vector<128x1xf32>
    %55 = vector.broadcast %54 : vector<128x1xf32> to vector<128x128xf32>
    %56 = arith.mulf %53, %55 : vector<128x128xf32>
    %57 = arith.truncf %56 : vector<128x128xf32> to vector<128x128xbf16>
    %c2 = arith.constant 2 : index
    %c0_26 = arith.constant 0 : index
    %c0_27 = arith.constant 0 : index
    %58 = vector.load %arg6[%c2, %c0_26, %c0_27] : memref<9x128x128xbf16, #tpu.memory_space<vmem>>, vector<1x128x128xbf16>
    %59 = vector.shape_cast %58 : vector<1x128x128xbf16> to vector<128x128xbf16>
    %cst_28 = arith.constant dense<0.000000e+00> : vector<128x128xf32>
    %60 = tpu.matmul %57, %59, %cst_28 {dimension_numbers = #tpu.dot_dimension_numbers<[1], [0], [0], [1], [0, 0, 1, 1], [], []>} : vector<128x128xbf16>, vector<128x128xbf16>, vector<128x128xf32> -> vector<128x128xf32>
    %61 = arith.addf %52, %60 : vector<128x128xf32>
    %c1_i32 = arith.constant 1 : i32
    %62 = tpu.dynamic_rotate %32 by %c1_i32 dim 0 : vector<128x128xf32>, i32 -> vector<128x128xf32>
    %63 = vector.extract_strided_slice %33 {offsets = [0, 3], sizes = [128, 1], strides = [1, 1]} : vector<128x9xf32> to vector<128x1xf32>
    %64 = vector.broadcast %63 : vector<128x1xf32> to vector<128x128xf32>
    %65 = arith.mulf %62, %64 : vector<128x128xf32>
    %66 = arith.truncf %65 : vector<128x128xf32> to vector<128x128xbf16>
    %c3 = arith.constant 3 : index
    %c0_29 = arith.constant 0 : index
    %c0_30 = arith.constant 0 : index
    %67 = vector.load %arg6[%c3, %c0_29, %c0_30] : memref<9x128x128xbf16, #tpu.memory_space<vmem>>, vector<1x128x128xbf16>
    %68 = vector.shape_cast %67 : vector<1x128x128xbf16> to vector<128x128xbf16>
    %cst_31 = arith.constant dense<0.000000e+00> : vector<128x128xf32>
    %69 = tpu.matmul %66, %68, %cst_31 {dimension_numbers = #tpu.dot_dimension_numbers<[1], [0], [0], [1], [0, 0, 1, 1], [], []>} : vector<128x128xbf16>, vector<128x128xbf16>, vector<128x128xf32> -> vector<128x128xf32>
    %70 = arith.addf %61, %69 : vector<128x128xf32>
    %71 = arith.truncf %32 : vector<128x128xf32> to vector<128x128xbf16>
    %c4 = arith.constant 4 : index
    %c0_32 = arith.constant 0 : index
    %c0_33 = arith.constant 0 : index
    %72 = vector.load %arg6[%c4, %c0_32, %c0_33] : memref<9x128x128xbf16, #tpu.memory_space<vmem>>, vector<1x128x128xbf16>
    %73 = vector.shape_cast %72 : vector<1x128x128xbf16> to vector<128x128xbf16>
    %cst_34 = arith.constant dense<0.000000e+00> : vector<128x128xf32>
    %74 = tpu.matmul %71, %73, %cst_34 {dimension_numbers = #tpu.dot_dimension_numbers<[1], [0], [0], [1], [0, 0, 1, 1], [], []>} : vector<128x128xbf16>, vector<128x128xbf16>, vector<128x128xf32> -> vector<128x128xf32>
    %75 = arith.addf %70, %74 : vector<128x128xf32>
    %c127_i32 = arith.constant 127 : i32
    %76 = tpu.dynamic_rotate %32 by %c127_i32 dim 0 : vector<128x128xf32>, i32 -> vector<128x128xf32>
    %77 = vector.extract_strided_slice %33 {offsets = [0, 5], sizes = [128, 1], strides = [1, 1]} : vector<128x9xf32> to vector<128x1xf32>
    %78 = vector.broadcast %77 : vector<128x1xf32> to vector<128x128xf32>
    %79 = arith.mulf %76, %78 : vector<128x128xf32>
    %80 = arith.truncf %79 : vector<128x128xf32> to vector<128x128xbf16>
    %c5 = arith.constant 5 : index
    %c0_35 = arith.constant 0 : index
    %c0_36 = arith.constant 0 : index
    %81 = vector.load %arg6[%c5, %c0_35, %c0_36] : memref<9x128x128xbf16, #tpu.memory_space<vmem>>, vector<1x128x128xbf16>
    %82 = vector.shape_cast %81 : vector<1x128x128xbf16> to vector<128x128xbf16>
    %cst_37 = arith.constant dense<0.000000e+00> : vector<128x128xf32>
    %83 = tpu.matmul %80, %82, %cst_37 {dimension_numbers = #tpu.dot_dimension_numbers<[1], [0], [0], [1], [0, 0, 1, 1], [], []>} : vector<128x128xbf16>, vector<128x128xbf16>, vector<128x128xf32> -> vector<128x128xf32>
    %84 = arith.addf %75, %83 : vector<128x128xf32>
    %c121_i32 = arith.constant 121 : i32
    %85 = tpu.dynamic_rotate %32 by %c121_i32 dim 0 : vector<128x128xf32>, i32 -> vector<128x128xf32>
    %86 = vector.extract_strided_slice %33 {offsets = [0, 6], sizes = [128, 1], strides = [1, 1]} : vector<128x9xf32> to vector<128x1xf32>
    %87 = vector.broadcast %86 : vector<128x1xf32> to vector<128x128xf32>
    %88 = arith.mulf %85, %87 : vector<128x128xf32>
    %89 = arith.truncf %88 : vector<128x128xf32> to vector<128x128xbf16>
    %c6 = arith.constant 6 : index
    %c0_38 = arith.constant 0 : index
    %c0_39 = arith.constant 0 : index
    %90 = vector.load %arg6[%c6, %c0_38, %c0_39] : memref<9x128x128xbf16, #tpu.memory_space<vmem>>, vector<1x128x128xbf16>
    %91 = vector.shape_cast %90 : vector<1x128x128xbf16> to vector<128x128xbf16>
    %cst_40 = arith.constant dense<0.000000e+00> : vector<128x128xf32>
    %92 = tpu.matmul %89, %91, %cst_40 {dimension_numbers = #tpu.dot_dimension_numbers<[1], [0], [0], [1], [0, 0, 1, 1], [], []>} : vector<128x128xbf16>, vector<128x128xbf16>, vector<128x128xf32> -> vector<128x128xf32>
    %93 = arith.addf %84, %92 : vector<128x128xf32>
    %c120_i32 = arith.constant 120 : i32
    %94 = tpu.dynamic_rotate %32 by %c120_i32 dim 0 : vector<128x128xf32>, i32 -> vector<128x128xf32>
    %95 = vector.extract_strided_slice %33 {offsets = [0, 7], sizes = [128, 1], strides = [1, 1]} : vector<128x9xf32> to vector<128x1xf32>
    %96 = vector.broadcast %95 : vector<128x1xf32> to vector<128x128xf32>
    %97 = arith.mulf %94, %96 : vector<128x128xf32>
    %98 = arith.truncf %97 : vector<128x128xf32> to vector<128x128xbf16>
    %c7 = arith.constant 7 : index
    %c0_41 = arith.constant 0 : index
    %c0_42 = arith.constant 0 : index
    %99 = vector.load %arg6[%c7, %c0_41, %c0_42] : memref<9x128x128xbf16, #tpu.memory_space<vmem>>, vector<1x128x128xbf16>
    %100 = vector.shape_cast %99 : vector<1x128x128xbf16> to vector<128x128xbf16>
    %cst_43 = arith.constant dense<0.000000e+00> : vector<128x128xf32>
    %101 = tpu.matmul %98, %100, %cst_43 {dimension_numbers = #tpu.dot_dimension_numbers<[1], [0], [0], [1], [0, 0, 1, 1], [], []>} : vector<128x128xbf16>, vector<128x128xbf16>, vector<128x128xf32> -> vector<128x128xf32>
    %102 = arith.addf %93, %101 : vector<128x128xf32>
    %c119_i32 = arith.constant 119 : i32
    %103 = tpu.dynamic_rotate %32 by %c119_i32 dim 0 : vector<128x128xf32>, i32 -> vector<128x128xf32>
    %104 = vector.extract_strided_slice %33 {offsets = [0, 8], sizes = [128, 1], strides = [1, 1]} : vector<128x9xf32> to vector<128x1xf32>
    %105 = vector.broadcast %104 : vector<128x1xf32> to vector<128x128xf32>
    %106 = arith.mulf %103, %105 : vector<128x128xf32>
    %107 = arith.truncf %106 : vector<128x128xf32> to vector<128x128xbf16>
    %c8 = arith.constant 8 : index
    %c0_44 = arith.constant 0 : index
    %c0_45 = arith.constant 0 : index
    %108 = vector.load %arg6[%c8, %c0_44, %c0_45] : memref<9x128x128xbf16, #tpu.memory_space<vmem>>, vector<1x128x128xbf16>
    %109 = vector.shape_cast %108 : vector<1x128x128xbf16> to vector<128x128xbf16>
    %cst_46 = arith.constant dense<0.000000e+00> : vector<128x128xf32>
    %110 = tpu.matmul %107, %109, %cst_46 {dimension_numbers = #tpu.dot_dimension_numbers<[1], [0], [0], [1], [0, 0, 1, 1], [], []>} : vector<128x128xbf16>, vector<128x128xbf16>, vector<128x128xf32> -> vector<128x128xf32>
    %111 = arith.addf %102, %110 : vector<128x128xf32>
    %c0_47 = arith.constant 0 : index
    %c0_48 = arith.constant 0 : index
    %112 = vector.load %arg7[%c0_47, %c0_48] : memref<1x128xf32, #tpu.memory_space<vmem>>, vector<1x128xf32>
    %113 = vector.broadcast %112 : vector<1x128xf32> to vector<128x128xf32>
    %114 = arith.addf %111, %113 : vector<128x128xf32>
    %c0_49 = arith.constant 0 : index
    %c0_50 = arith.constant 0 : index
    %115 = vector.load %arg8[%c0_49, %c0_50] : memref<1x128xf32, #tpu.memory_space<vmem>>, vector<1x128xf32>
    %c0_51 = arith.constant 0 : index
    %c0_52 = arith.constant 0 : index
    %116 = vector.load %arg9[%c0_51, %c0_52] : memref<1x128xf32, #tpu.memory_space<vmem>>, vector<1x128xf32>
    %c0_53 = arith.constant 0 : index
    %c0_54 = arith.constant 0 : index
    %117 = vector.load %arg14[%c0_53, %c0_54] : memref<128x128xf32, #tpu.memory_space<vmem>>, vector<128x128xf32>
    %118 = vector.shape_cast %114 : vector<128x128xf32> to vector<2x64x128xf32>
    %cst_55 = arith.constant dense<0.000000e+00> : vector<2x128xf32>
    %119 = vector.multi_reduction <add>, %118, %cst_55 [1] : vector<2x64x128xf32> to vector<2x128xf32>
    %120 = arith.mulf %118, %118 : vector<2x64x128xf32>
    %cst_56 = arith.constant dense<0.000000e+00> : vector<2x128xf32>
    %121 = vector.multi_reduction <add>, %120, %cst_56 [1] : vector<2x64x128xf32> to vector<2x128xf32>
    %cst_57 = arith.constant dense<0.000000e+00> : vector<2x128xf32>
    %122 = tpu.matmul %119, %117, %cst_57 {dimension_numbers = #tpu.dot_dimension_numbers<[1], [0], [0], [1], [0, 0, 1, 1], [], []>} : vector<2x128xf32>, vector<128x128xf32>, vector<2x128xf32> -> vector<2x128xf32>
    %cst_58 = arith.constant dense<0.000000e+00> : vector<2x128xf32>
    %123 = tpu.matmul %121, %117, %cst_58 {dimension_numbers = #tpu.dot_dimension_numbers<[1], [0], [0], [1], [0, 0, 1, 1], [], []>} : vector<2x128xf32>, vector<128x128xf32>, vector<2x128xf32> -> vector<2x128xf32>
    %124 = arith.mulf %122, %122 : vector<2x128xf32>
    %125 = arith.subf %123, %124 : vector<2x128xf32>
    %cst_59 = arith.constant 9.99999974E-6 : f32
    %126 = vector.broadcast %cst_59 : f32 to vector<2x128xf32>
    %127 = arith.addf %125, %126 : vector<2x128xf32>
    %128 = math.rsqrt %127 : vector<2x128xf32>
    %129 = vector.broadcast %115 : vector<1x128xf32> to vector<2x128xf32>
    %130 = arith.mulf %128, %129 : vector<2x128xf32>
    %131 = arith.mulf %122, %130 : vector<2x128xf32>
    %132 = vector.broadcast %116 : vector<1x128xf32> to vector<2x128xf32>
    %133 = arith.subf %132, %131 : vector<2x128xf32>
    %134 = vector.shape_cast %130 : vector<2x128xf32> to vector<2x1x128xf32>
    %135 = vector.broadcast %134 : vector<2x1x128xf32> to vector<2x64x128xf32>
    %136 = arith.mulf %118, %135 : vector<2x64x128xf32>
    %137 = vector.shape_cast %133 : vector<2x128xf32> to vector<2x1x128xf32>
    %138 = vector.broadcast %137 : vector<2x1x128xf32> to vector<2x64x128xf32>
    %139 = arith.addf %136, %138 : vector<2x64x128xf32>
    %140 = vector.shape_cast %139 : vector<2x64x128xf32> to vector<128x128xf32>
    %cst_60 = arith.constant 0.707106769 : f32
    %141 = vector.broadcast %cst_60 : f32 to vector<128x128xf32>
    %142 = arith.mulf %140, %141 : vector<128x128xf32>
    %cst_61 = arith.constant 0.000000e+00 : f32
    %143 = vector.broadcast %cst_61 : f32 to vector<128x128xf32>
    %144 = arith.cmpf olt, %142, %143 : vector<128x128xf32>
    %cst_62 = arith.constant -1.000000e+00 : f32
    %cst_63 = arith.constant 1.000000e+00 : f32
    %145 = vector.broadcast %cst_62 : f32 to vector<128x128xf32>
    %146 = vector.broadcast %cst_63 : f32 to vector<128x128xf32>
    %147 = arith.select %144, %145, %146 : vector<128x128xi1>, vector<128x128xf32>
    %148 = math.absf %142 : vector<128x128xf32>
    %cst_64 = arith.constant 0.327591091 : f32
    %149 = vector.broadcast %cst_64 : f32 to vector<128x128xf32>
    %150 = arith.mulf %149, %148 : vector<128x128xf32>
    %cst_65 = arith.constant 1.000000e+00 : f32
    %151 = vector.broadcast %cst_65 : f32 to vector<128x128xf32>
    %152 = arith.addf %151, %150 : vector<128x128xf32>
    %cst_66 = arith.constant 1.000000e+00 : f32
    %153 = vector.broadcast %cst_66 : f32 to vector<128x128xf32>
    %154 = arith.divf %153, %152 : vector<128x128xf32>
    %cst_67 = arith.constant 1.06140542 : f32
    %155 = vector.broadcast %cst_67 : f32 to vector<128x128xf32>
    %156 = arith.mulf %155, %154 : vector<128x128xf32>
    %cst_68 = arith.constant -1.45315206 : f32
    %157 = vector.broadcast %cst_68 : f32 to vector<128x128xf32>
    %158 = arith.addf %156, %157 : vector<128x128xf32>
    %159 = arith.mulf %158, %154 : vector<128x128xf32>
    %cst_69 = arith.constant 1.42141378 : f32
    %160 = vector.broadcast %cst_69 : f32 to vector<128x128xf32>
    %161 = arith.addf %159, %160 : vector<128x128xf32>
    %162 = arith.mulf %161, %154 : vector<128x128xf32>
    %cst_70 = arith.constant -0.284496725 : f32
    %163 = vector.broadcast %cst_70 : f32 to vector<128x128xf32>
    %164 = arith.addf %162, %163 : vector<128x128xf32>
    %165 = arith.mulf %164, %154 : vector<128x128xf32>
    %cst_71 = arith.constant 0.254829586 : f32
    %166 = vector.broadcast %cst_71 : f32 to vector<128x128xf32>
    %167 = arith.addf %165, %166 : vector<128x128xf32>
    %168 = arith.mulf %167, %154 : vector<128x128xf32>
    %cst_72 = arith.constant 0.000000e+00 : f32
    %169 = vector.broadcast %cst_72 : f32 to vector<128x128xf32>
    %170 = arith.subf %169, %148 : vector<128x128xf32>
    %171 = arith.mulf %170, %148 : vector<128x128xf32>
    %172 = math.exp %171 : vector<128x128xf32>
    %173 = arith.mulf %168, %172 : vector<128x128xf32>
    %cst_73 = arith.constant 1.000000e+00 : f32
    %174 = vector.broadcast %cst_73 : f32 to vector<128x128xf32>
    %175 = arith.subf %174, %173 : vector<128x128xf32>
    %176 = arith.mulf %147, %175 : vector<128x128xf32>
    %cst_74 = arith.constant 5.000000e-01 : f32
    %177 = vector.broadcast %cst_74 : f32 to vector<128x128xf32>
    %178 = arith.mulf %177, %140 : vector<128x128xf32>
    %cst_75 = arith.constant 1.000000e+00 : f32
    %179 = vector.broadcast %cst_75 : f32 to vector<128x128xf32>
    %180 = arith.addf %179, %176 : vector<128x128xf32>
    %181 = arith.mulf %178, %180 : vector<128x128xf32>
    %182 = arith.truncf %181 : vector<128x128xf32> to vector<128x128xbf16>
    %c0_76 = arith.constant 0 : index
    %c0_77 = arith.constant 0 : index
    %183 = vector.load %arg10[%c0_76, %c0_77] : memref<128x128xbf16, #tpu.memory_space<vmem>>, vector<128x128xbf16>
    %cst_78 = arith.constant dense<0.000000e+00> : vector<128x128xf32>
    %184 = tpu.matmul %182, %183, %cst_78 {dimension_numbers = #tpu.dot_dimension_numbers<[1], [0], [0], [1], [0, 0, 1, 1], [], []>} : vector<128x128xbf16>, vector<128x128xbf16>, vector<128x128xf32> -> vector<128x128xf32>
    %c0_79 = arith.constant 0 : index
    %c0_80 = arith.constant 0 : index
    %185 = vector.load %arg11[%c0_79, %c0_80] : memref<1x128xf32, #tpu.memory_space<vmem>>, vector<1x128xf32>
    %186 = vector.broadcast %185 : vector<1x128xf32> to vector<128x128xf32>
    %187 = arith.addf %184, %186 : vector<128x128xf32>
    %c0_81 = arith.constant 0 : index
    %c0_82 = arith.constant 0 : index
    %188 = vector.load %arg12[%c0_81, %c0_82] : memref<1x128xf32, #tpu.memory_space<vmem>>, vector<1x128xf32>
    %c0_83 = arith.constant 0 : index
    %c0_84 = arith.constant 0 : index
    %189 = vector.load %arg13[%c0_83, %c0_84] : memref<1x128xf32, #tpu.memory_space<vmem>>, vector<1x128xf32>
    %c0_85 = arith.constant 0 : index
    %c0_86 = arith.constant 0 : index
    %190 = vector.load %arg15[%c0_85, %c0_86] : memref<128x128xf32, #tpu.memory_space<vmem>>, vector<128x128xf32>
    %191 = vector.shape_cast %187 : vector<128x128xf32> to vector<2x64x128xf32>
    %cst_87 = arith.constant dense<0.000000e+00> : vector<2x128xf32>
    %192 = vector.multi_reduction <add>, %191, %cst_87 [1] : vector<2x64x128xf32> to vector<2x128xf32>
    %193 = arith.mulf %191, %191 : vector<2x64x128xf32>
    %cst_88 = arith.constant dense<0.000000e+00> : vector<2x128xf32>
    %194 = vector.multi_reduction <add>, %193, %cst_88 [1] : vector<2x64x128xf32> to vector<2x128xf32>
    %cst_89 = arith.constant dense<0.000000e+00> : vector<2x128xf32>
    %195 = tpu.matmul %192, %190, %cst_89 {dimension_numbers = #tpu.dot_dimension_numbers<[1], [0], [0], [1], [0, 0, 1, 1], [], []>} : vector<2x128xf32>, vector<128x128xf32>, vector<2x128xf32> -> vector<2x128xf32>
    %cst_90 = arith.constant dense<0.000000e+00> : vector<2x128xf32>
    %196 = tpu.matmul %194, %190, %cst_90 {dimension_numbers = #tpu.dot_dimension_numbers<[1], [0], [0], [1], [0, 0, 1, 1], [], []>} : vector<2x128xf32>, vector<128x128xf32>, vector<2x128xf32> -> vector<2x128xf32>
    %197 = arith.mulf %195, %195 : vector<2x128xf32>
    %198 = arith.subf %196, %197 : vector<2x128xf32>
    %cst_91 = arith.constant 9.99999974E-6 : f32
    %199 = vector.broadcast %cst_91 : f32 to vector<2x128xf32>
    %200 = arith.addf %198, %199 : vector<2x128xf32>
    %201 = math.rsqrt %200 : vector<2x128xf32>
    %202 = vector.broadcast %188 : vector<1x128xf32> to vector<2x128xf32>
    %203 = arith.mulf %201, %202 : vector<2x128xf32>
    %204 = arith.mulf %195, %203 : vector<2x128xf32>
    %205 = vector.broadcast %189 : vector<1x128xf32> to vector<2x128xf32>
    %206 = arith.subf %205, %204 : vector<2x128xf32>
    %207 = vector.shape_cast %203 : vector<2x128xf32> to vector<2x1x128xf32>
    %208 = vector.broadcast %207 : vector<2x1x128xf32> to vector<2x64x128xf32>
    %209 = arith.mulf %191, %208 : vector<2x64x128xf32>
    %210 = vector.shape_cast %206 : vector<2x128xf32> to vector<2x1x128xf32>
    %211 = vector.broadcast %210 : vector<2x1x128xf32> to vector<2x64x128xf32>
    %212 = arith.addf %209, %211 : vector<2x64x128xf32>
    %213 = vector.shape_cast %212 : vector<2x64x128xf32> to vector<128x128xf32>
    %c0_92 = arith.constant 0 : index
    %c0_93 = arith.constant 0 : index
    %214 = vector.load %arg17[%c0_92, %c0_93] : memref<128x128xf32, #tpu.memory_space<vmem>>, vector<128x128xf32>
    tpu.vector_store %arg17[%c0_92, %c0_93], %213 {strides = array<i32>} : memref<128x128xf32, #tpu.memory_space<vmem>>, vector<128x128xf32>,
    return
  }
  func.func @transform_0(%arg0: i32) -> (i32, i32) {
    %c0_i32 = arith.constant 0 : i32
    %c0_i32_0 = arith.constant 0 : i32
    return %arg0, %c0_i32 : i32, i32
  }
  func.func @transform_1(%arg0: i32) -> (i32, i32) {
    %c0_i32 = arith.constant 0 : i32
    %c0_i32_0 = arith.constant 0 : i32
    %c0_i32_1 = arith.constant 0 : i32
    return %c0_i32, %c0_i32_0 : i32, i32
  }
  func.func @transform_2(%arg0: i32) -> (i32, i32) {
    %c0_i32 = arith.constant 0 : i32
    %c0_i32_0 = arith.constant 0 : i32
    %c0_i32_1 = arith.constant 0 : i32
    return %c0_i32, %c0_i32_0 : i32, i32
  }
  func.func @transform_3(%arg0: i32) -> (i32, i32) {
    %c0_i32 = arith.constant 0 : i32
    %c0_i32_0 = arith.constant 0 : i32
    %c0_i32_1 = arith.constant 0 : i32
    return %c0_i32, %c0_i32_0 : i32, i32
  }
  func.func @transform_4(%arg0: i32) -> (i32, i32) {
    %c0_i32 = arith.constant 0 : i32
    %c0_i32_0 = arith.constant 0 : i32
    %c0_i32_1 = arith.constant 0 : i32
    return %c0_i32, %c0_i32_0 : i32, i32
  }
  func.func @transform_5(%arg0: i32) -> (i32, i32, i32) {
    %c0_i32 = arith.constant 0 : i32
    %c0_i32_0 = arith.constant 0 : i32
    %c0_i32_1 = arith.constant 0 : i32
    %c0_i32_2 = arith.constant 0 : i32
    return %c0_i32, %c0_i32_0, %c0_i32_1 : i32, i32, i32
  }
  func.func @transform_6(%arg0: i32) -> (i32, i32) {
    %c0_i32 = arith.constant 0 : i32
    %c0_i32_0 = arith.constant 0 : i32
    %c0_i32_1 = arith.constant 0 : i32
    return %c0_i32, %c0_i32_0 : i32, i32
  }
  func.func @transform_7(%arg0: i32) -> (i32, i32) {
    %c0_i32 = arith.constant 0 : i32
    %c0_i32_0 = arith.constant 0 : i32
    %c0_i32_1 = arith.constant 0 : i32
    return %c0_i32, %c0_i32_0 : i32, i32
  }
  func.func @transform_8(%arg0: i32) -> (i32, i32) {
    %c0_i32 = arith.constant 0 : i32
    %c0_i32_0 = arith.constant 0 : i32
    %c0_i32_1 = arith.constant 0 : i32
    return %c0_i32, %c0_i32_0 : i32, i32
  }
  func.func @transform_9(%arg0: i32) -> (i32, i32) {
    %c0_i32 = arith.constant 0 : i32
    %c0_i32_0 = arith.constant 0 : i32
    %c0_i32_1 = arith.constant 0 : i32
    return %c0_i32, %c0_i32_0 : i32, i32
  }
  func.func @transform_10(%arg0: i32) -> (i32, i32) {
    %c0_i32 = arith.constant 0 : i32
    %c0_i32_0 = arith.constant 0 : i32
    %c0_i32_1 = arith.constant 0 : i32
    return %c0_i32, %c0_i32_0 : i32, i32
  }
  func.func @transform_11(%arg0: i32) -> (i32, i32) {
    %c0_i32 = arith.constant 0 : i32
    %c0_i32_0 = arith.constant 0 : i32
    %c0_i32_1 = arith.constant 0 : i32
    return %c0_i32, %c0_i32_0 : i32, i32
  }
  func.func @transform_12(%arg0: i32) -> (i32, i32) {
    %c0_i32 = arith.constant 0 : i32
    %c0_i32_0 = arith.constant 0 : i32
    %c0_i32_1 = arith.constant 0 : i32
    return %c0_i32, %c0_i32_0 : i32, i32
  }
  func.func @transform_13(%arg0: i32) -> (i32, i32) {
    %c0_i32 = arith.constant 0 : i32
    %c0_i32_0 = arith.constant 0 : i32
    %c0_i32_1 = arith.constant 0 : i32
    return %c0_i32, %c0_i32_0 : i32, i32
  }
  func.func @transform_14(%arg0: i32) -> (i32, i32) {
    %c0_i32 = arith.constant 0 : i32
    %c0_i32_0 = arith.constant 0 : i32
    %c0_i32_1 = arith.constant 0 : i32
    return %c0_i32, %c0_i32_0 : i32, i32
  }
  func.func @transform_15(%arg0: i32) -> (i32, i32) {
    %c0_i32 = arith.constant 0 : i32
    %c0_i32_0 = arith.constant 0 : i32
    %c0_i32_1 = arith.constant 0 : i32
    return %c0_i32, %c0_i32_0 : i32, i32
  }
  func.func @transform_16(%arg0: i32) -> (i32, i32) {
    %c0_i32 = arith.constant 0 : i32
    %c0_i32_0 = arith.constant 0 : i32
    return %arg0, %c0_i32 : i32, i32
  }
}

</mosaic_0001>

<llo_original>
// kernel: tpu_custom_call.1
$region0: #{tpu_custom_call.1}
  #allocation0 [shape = 'u32[]', space=smem, size = 0x4, offset = 0x4, fixed_abs, tag = 'smem constant byte address 0x4 - core index']
  #allocation1 [shape = 'u32[144,128]{1,0:T(1,128)}', space=vmem, size = 0x12000, scoped, tag = 'internal scratch']
  %s0 = inlined_call_operand.vmem [shape: f32[256,16], index: 0, kind: input, shape index: {}]
  %s1 = inlined_call_operand.vmem [shape: bf16[16,128], index: 1, kind: input, shape index: {}]
  %s2 = inlined_call_operand.vmem [shape: f32[1,128], index: 2, kind: input, shape index: {}]
  %s3 = inlined_call_operand.vmem [shape: f32[1,128], index: 3, kind: input, shape index: {}]
  %s4 = inlined_call_operand.vmem [shape: f32[1,128], index: 4, kind: input, shape index: {}]
  %s5 = inlined_call_operand.hbm [shape: bf16[9,128,128], index: 5, kind: input, shape index: {}]
  %s6 = inlined_call_operand.vmem [shape: f32[1,128], index: 6, kind: input, shape index: {}]
  %s7 = inlined_call_operand.vmem [shape: f32[1,128], index: 7, kind: input, shape index: {}]
  %s8 = inlined_call_operand.vmem [shape: f32[1,128], index: 8, kind: input, shape index: {}]
  %s9 = inlined_call_operand.vmem [shape: bf16[128,128], index: 9, kind: input, shape index: {}]
  %s10 = inlined_call_operand.vmem [shape: f32[1,128], index: 10, kind: input, shape index: {}]
  %s11 = inlined_call_operand.vmem [shape: f32[1,128], index: 11, kind: input, shape index: {}]
  %s12 = inlined_call_operand.vmem [shape: f32[1,128], index: 12, kind: input, shape index: {}]
  %s13 = inlined_call_operand.vmem [shape: f32[128,128], index: 13, kind: input, shape index: {}]
  %s14 = inlined_call_operand.vmem [shape: f32[128,128], index: 14, kind: input, shape index: {}]
  %s15 = inlined_call_operand.vmem [shape: f32[128,9], index: 15, kind: input, shape index: {}]
  %s16 = inlined_call_operand.hbm [shape: f32[256,128], index: 16, kind: output, shape index: {}]
  %s17 = sld [smem:[#allocation0]]
  $region101: #{tpu_custom_call.1} parent=0
    _
  %s19 = ssub.s32 1, %s17
  %s20 = scalar_select 0, %s19, %s17
  $region1: #{tpu_custom_call.1} parent=0
    #allocation2 [shape = 'u8[294912]{0}', space=vmem, size = 0x48000, scoped, tag = 'input window, operand 5, single buffered']
    #allocation3 [shape = 's32[2]{0}', space=sflag, size = 0x8, scoped, tag = 'scoped memory for tpu_custom_call.1']
    #allocation4 [shape = 's32[2]{0}', space=sflag, size = 0x8, scoped, tag = 'scoped memory for tpu_custom_call.1']
    #allocation5 [shape = 'u8[131072]{0}', space=vmem, size = 0x20000, scoped, tag = 'output window, operand 0']
    %21 = vsyncpa [#allocation3], 0
    %22 = vsyncpa [#allocation4], 0
    %s23 = scalar_lea.sflag [#allocation4], 1
    %24 = vsyncpa %s23, 0
    loop: start=0, step=1, limit=4
    $region2: #{tpu_custom_call.1} parent=1 // loop_pre_header
      _
    $region3: #{tpu_custom_call.1} parent=1 // loop_header
      %s26 = sphi 0, %s30
      %p27 = scmp.ge.s32.totalorder %s26, 4
      %s36 = sphi 0, %s38
      %s39 = sphi 0, %s36
      %s40 = sphi 0, %s39
      %s56 = sphi 0, %s40
      %s60 = sphi 0, %s60
      %s62 = sphi 0, %s60
      %s63 = sphi 0, %s62
      %s77 = sphi 0, %s63
      %s81 = sphi 0, %s81
      %s83 = sphi 0, %s81
      %s84 = sphi 0, %s83
      %s98 = sphi 0, %s84
      %s102 = sphi 0, %s102
      %s104 = sphi 0, %s102
      %s105 = sphi 0, %s104
      %s119 = sphi 0, %s105
      %s123 = sphi 0, %s123
      %s125 = sphi 0, %s123
      %s126 = sphi 0, %s125
      %s140 = sphi 0, %s126
      %s144 = sphi 0, %s144
      %s146 = sphi 0, %s144
      %s147 = sphi 0, %s146
      %s161 = sphi 0, %s147
      %s165 = sphi 0, %s165
      %s167 = sphi 0, %s165
      %s168 = sphi 0, %s167
      %s182 = sphi 0, %s168
      %s186 = sphi 0, %s186
      %s188 = sphi 0, %s186
      %s189 = sphi 0, %s188
      %s203 = sphi 0, %s189
      %s207 = sphi 0, %s207
      %s209 = sphi 0, %s207
      %s210 = sphi 0, %s209
      %s224 = sphi 0, %s210
      %s228 = sphi 0, %s228
      %s230 = sphi 0, %s228
      %s231 = sphi 0, %s230
      %s245 = sphi 0, %s231
      %s249 = sphi 0, %s249
      %s251 = sphi 0, %s249
      %s252 = sphi 0, %s251
      %s266 = sphi 0, %s252
      %s270 = sphi 0, %s270
      %s272 = sphi 0, %s270
      %s273 = sphi 0, %s272
      %s287 = sphi 0, %s273
      %s291 = sphi 0, %s291
      %s293 = sphi 0, %s291
      %s294 = sphi 0, %s293
      %s308 = sphi 0, %s294
      %s312 = sphi 0, %s312
      %s314 = sphi 0, %s312
      %s315 = sphi 0, %s314
      %s329 = sphi 0, %s315
      %s333 = sphi 0, %s333
      %s335 = sphi 0, %s333
      %s336 = sphi 0, %s335
      %s350 = sphi 0, %s336
      %s354 = sphi 0, %s354
      %s356 = sphi 0, %s354
      %s357 = sphi 0, %s356
      %s371 = sphi 0, %s357
      %s377 = sphi 0, %s379
      %s380 = sphi 0, %s377
      %s381 = sphi 0, %s380
      %s397 = sphi 0, %s381
    $region4: #{tpu_custom_call.1} parent=1 // loop_header_branch
      %29 = sbr.rel (%p27) target = $region8
    $region5: #{tpu_custom_call.1} parent=1 // loop_body
      %s31 = ssub.s32 %s26, 1
      %s32 = ssub.s32 %s26, 2
      %s33 = sadd.s32 %s26, 1
      %s34 = ssub.s32 %s26, %s33
      %p35 = scmp.eq.s32.totalorder %s34, 0
      %s37 = sadd.s32 %s36, 1
      %s38 = scalar_select %p35, %s36, %s37
      %p41 = pneg %p35
      %p42 = scmp.eq.s32.totalorder %s26, 1
      %p43 = por %p41, %p42
      %p44 = scmp.ne.s32.totalorder %s36, %s39
      %p45 = scmp.eq.s32.totalorder %s26, 0
      %p46 = por %p44, %p45
      %p47 = scmp.ne.s32.totalorder %s36, %s39
      %p48 = scmp.eq.s32.totalorder %s31, 1
      %p49 = por %p47, %p48
      %p50 = scmp.ne.s32.totalorder %s39, %s40
      %p51 = scmp.eq.s32.totalorder %s31, 0
      %p52 = por %p50, %p51
      %p53 = scmp.ne.s32.totalorder %s39, %s40
      %p54 = scmp.eq.s32.totalorder %s32, 1
      %p55 = por %p53, %p54
      %p57 = scmp.ne.s32.totalorder %s40, %s56
      %p58 = scmp.eq.s32.totalorder %s32, 0
      %p59 = por %p57, %p58
      %s61 = sadd.s32 %s60, 1
      %p64 = scmp.eq.s32.totalorder %s26, 1
      %p65 = scmp.ne.s32.totalorder %s60, %s62
      %p66 = scmp.eq.s32.totalorder %s26, 0
      %p67 = por %p65, %p66
      %p68 = scmp.ne.s32.totalorder %s60, %s62
      %p69 = scmp.eq.s32.totalorder %s31, 1
      %p70 = por %p68, %p69
      %p71 = scmp.ne.s32.totalorder %s62, %s63
      %p72 = scmp.eq.s32.totalorder %s31, 0
      %p73 = por %p71, %p72
      %p74 = scmp.ne.s32.totalorder %s62, %s63
      %p75 = scmp.eq.s32.totalorder %s32, 1
      %p76 = por %p74, %p75
      %p78 = scmp.ne.s32.totalorder %s63, %s77
      %p79 = scmp.eq.s32.totalorder %s32, 0
      %p80 = por %p78, %p79
      %s82 = sadd.s32 %s81, 1
      %p85 = scmp.eq.s32.totalorder %s26, 1
      %p86 = scmp.ne.s32.totalorder %s81, %s83
      %p87 = scmp.eq.s32.totalorder %s26, 0
      %p88 = por %p86, %p87
      %p89 = scmp.ne.s32.totalorder %s81, %s83
      %p90 = scmp.eq.s32.totalorder %s31, 1
      %p91 = por %p89, %p90
      %p92 = scmp.ne.s32.totalorder %s83, %s84
      %p93 = scmp.eq.s32.totalorder %s31, 0
      %p94 = por %p92, %p93
      %p95 = scmp.ne.s32.totalorder %s83, %s84
      %p96 = scmp.eq.s32.totalorder %s32, 1
      %p97 = por %p95, %p96
      %p99 = scmp.ne.s32.totalorder %s84, %s98
      %p100 = scmp.eq.s32.totalorder %s32, 0
      %p101 = por %p99, %p100
      %s103 = sadd.s32 %s102, 1
      %p106 = scmp.eq.s32.totalorder %s26, 1
      %p107 = scmp.ne.s32.totalorder %s102, %s104
      %p108 = scmp.eq.s32.totalorder %s26, 0
      %p109 = por %p107, %p108
      %p110 = scmp.ne.s32.totalorder %s102, %s104
      %p111 = scmp.eq.s32.totalorder %s31, 1
      %p112 = por %p110, %p111
      %p113 = scmp.ne.s32.totalorder %s104, %s105
      %p114 = scmp.eq.s32.totalorder %s31, 0
      %p115 = por %p113, %p114
      %p116 = scmp.ne.s32.totalorder %s104, %s105
      %p117 = scmp.eq.s32.totalorder %s32, 1
      %p118 = por %p116, %p117
      %p120 = scmp.ne.s32.totalorder %s105, %s119
      %p121 = scmp.eq.s32.totalorder %s32, 0
      %p122 = por %p120, %p121
      %s124 = sadd.s32 %s123, 1
      %p127 = scmp.eq.s32.totalorder %s26, 1
      %p128 = scmp.ne.s32.totalorder %s123, %s125
      %p129 = scmp.eq.s32.totalorder %s26, 0
      %p130 = por %p128, %p129
      %p131 = scmp.ne.s32.totalorder %s123, %s125
      %p132 = scmp.eq.s32.totalorder %s31, 1
      %p133 = por %p131, %p132
      %p134 = scmp.ne.s32.totalorder %s125, %s126
      %p135 = scmp.eq.s32.totalorder %s31, 0
      %p136 = por %p134, %p135
      %p137 = scmp.ne.s32.totalorder %s125, %s126
      %p138 = scmp.eq.s32.totalorder %s32, 1
      %p139 = por %p137, %p138
      %p141 = scmp.ne.s32.totalorder %s126, %s140
      %p142 = scmp.eq.s32.totalorder %s32, 0
      %p143 = por %p141, %p142
      %s145 = sadd.s32 %s144, 1
      %p148 = scmp.eq.s32.totalorder %s26, 1
      %p149 = scmp.ne.s32.totalorder %s144, %s146
      %p150 = scmp.eq.s32.totalorder %s26, 0
      %p151 = por %p149, %p150
      %p152 = scmp.ne.s32.totalorder %s144, %s146
      %p153 = scmp.eq.s32.totalorder %s31, 1
      %p154 = por %p152, %p153
      %p155 = scmp.ne.s32.totalorder %s146, %s147
      %p156 = scmp.eq.s32.totalorder %s31, 0
      %p157 = por %p155, %p156
      %p158 = scmp.ne.s32.totalorder %s146, %s147
      %p159 = scmp.eq.s32.totalorder %s32, 1
      %p160 = por %p158, %p159
      %p162 = scmp.ne.s32.totalorder %s147, %s161
      %p163 = scmp.eq.s32.totalorder %s32, 0
      %p164 = por %p162, %p163
      %s166 = sadd.s32 %s165, 1
      %p169 = scmp.eq.s32.totalorder %s26, 1
      %p170 = scmp.ne.s32.totalorder %s165, %s167
      %p171 = scmp.eq.s32.totalorder %s26, 0
      %p172 = por %p170, %p171
      %p173 = scmp.ne.s32.totalorder %s165, %s167
      %p174 = scmp.eq.s32.totalorder %s31, 1
      %p175 = por %p173, %p174
      %p176 = scmp.ne.s32.totalorder %s167, %s168
      %p177 = scmp.eq.s32.totalorder %s31, 0
      %p178 = por %p176, %p177
      %p179 = scmp.ne.s32.totalorder %s167, %s168
      %p180 = scmp.eq.s32.totalorder %s32, 1
      %p181 = por %p179, %p180
      %p183 = scmp.ne.s32.totalorder %s168, %s182
      %p184 = scmp.eq.s32.totalorder %s32, 0
      %p185 = por %p183, %p184
      %s187 = sadd.s32 %s186, 1
      %p190 = scmp.eq.s32.totalorder %s26, 1
      %p191 = scmp.ne.s32.totalorder %s186, %s188
      %p192 = scmp.eq.s32.totalorder %s26, 0
      %p193 = por %p191, %p192
      %p194 = scmp.ne.s32.totalorder %s186, %s188
      %p195 = scmp.eq.s32.totalorder %s31, 1
      %p196 = por %p194, %p195
      %p197 = scmp.ne.s32.totalorder %s188, %s189
      %p198 = scmp.eq.s32.totalorder %s31, 0
      %p199 = por %p197, %p198
      %p200 = scmp.ne.s32.totalorder %s188, %s189
      %p201 = scmp.eq.s32.totalorder %s32, 1
      %p202 = por %p200, %p201
      %p204 = scmp.ne.s32.totalorder %s189, %s203
      %p205 = scmp.eq.s32.totalorder %s32, 0
      %p206 = por %p204, %p205
      %s208 = sadd.s32 %s207, 1
      %p211 = scmp.eq.s32.totalorder %s26, 1
      %p212 = scmp.ne.s32.totalorder %s207, %s209
      %p213 = scmp.eq.s32.totalorder %s26, 0
      %p214 = por %p212, %p213
      %p215 = scmp.ne.s32.totalorder %s207, %s209
      %p216 = scmp.eq.s32.totalorder %s31, 1
      %p217 = por %p215, %p216
      %p218 = scmp.ne.s32.totalorder %s209, %s210
      %p219 = scmp.eq.s32.totalorder %s31, 0
      %p220 = por %p218, %p219
      %p221 = scmp.ne.s32.totalorder %s209, %s210
      %p222 = scmp.eq.s32.totalorder %s32, 1
      %p223 = por %p221, %p222
      %p225 = scmp.ne.s32.totalorder %s210, %s224
      %p226 = scmp.eq.s32.totalorder %s32, 0
      %p227 = por %p225, %p226
      %s229 = sadd.s32 %s228, 1
      %p232 = scmp.eq.s32.totalorder %s26, 1
      %p233 = scmp.ne.s32.totalorder %s228, %s230
      %p234 = scmp.eq.s32.totalorder %s26, 0
      %p235 = por %p233, %p234
      %p236 = scmp.ne.s32.totalorder %s228, %s230
      %p237 = scmp.eq.s32.totalorder %s31, 1
      %p238 = por %p236, %p237
      %p239 = scmp.ne.s32.totalorder %s230, %s231
      %p240 = scmp.eq.s32.totalorder %s31, 0
      %p241 = por %p239, %p240
      %p242 = scmp.ne.s32.totalorder %s230, %s231
      %p243 = scmp.eq.s32.totalorder %s32, 1
      %p244 = por %p242, %p243
      %p246 = scmp.ne.s32.totalorder %s231, %s245
      %p247 = scmp.eq.s32.totalorder %s32, 0
      %p248 = por %p246, %p247
      %s250 = sadd.s32 %s249, 1
      %p253 = scmp.eq.s32.totalorder %s26, 1
      %p254 = scmp.ne.s32.totalorder %s249, %s251
      %p255 = scmp.eq.s32.totalorder %s26, 0
      %p256 = por %p254, %p255
      %p257 = scmp.ne.s32.totalorder %s249, %s251
      %p258 = scmp.eq.s32.totalorder %s31, 1
      %p259 = por %p257, %p258
      %p260 = scmp.ne.s32.totalorder %s251, %s252
      %p261 = scmp.eq.s32.totalorder %s31, 0
      %p262 = por %p260, %p261
      %p263 = scmp.ne.s32.totalorder %s251, %s252
      %p264 = scmp.eq.s32.totalorder %s32, 1
      %p265 = por %p263, %p264
      %p267 = scmp.ne.s32.totalorder %s252, %s266
      %p268 = scmp.eq.s32.totalorder %s32, 0
      %p269 = por %p267, %p268
      %s271 = sadd.s32 %s270, 1
      %p274 = scmp.eq.s32.totalorder %s26, 1
      %p275 = scmp.ne.s32.totalorder %s270, %s272
      %p276 = scmp.eq.s32.totalorder %s26, 0
      %p277 = por %p275, %p276
      %p278 = scmp.ne.s32.totalorder %s270, %s272
      %p279 = scmp.eq.s32.totalorder %s31, 1
      %p280 = por %p278, %p279
      %p281 = scmp.ne.s32.totalorder %s272, %s273
      %p282 = scmp.eq.s32.totalorder %s31, 0
      %p283 = por %p281, %p282
      %p284 = scmp.ne.s32.totalorder %s272, %s273
      %p285 = scmp.eq.s32.totalorder %s32, 1
      %p286 = por %p284, %p285
      %p288 = scmp.ne.s32.totalorder %s273, %s287
      %p289 = scmp.eq.s32.totalorder %s32, 0
      %p290 = por %p288, %p289
      %s292 = sadd.s32 %s291, 1
      %p295 = scmp.eq.s32.totalorder %s26, 1
      %p296 = scmp.ne.s32.totalorder %s291, %s293
      %p297 = scmp.eq.s32.totalorder %s26, 0
      %p298 = por %p296, %p297
      %p299 = scmp.ne.s32.totalorder %s291, %s293
      %p300 = scmp.eq.s32.totalorder %s31, 1
      %p301 = por %p299, %p300
      %p302 = scmp.ne.s32.totalorder %s293, %s294
      %p303 = scmp.eq.s32.totalorder %s31, 0
      %p304 = por %p302, %p303
      %p305 = scmp.ne.s32.totalorder %s293, %s294
      %p306 = scmp.eq.s32.totalorder %s32, 1
      %p307 = por %p305, %p306
      %p309 = scmp.ne.s32.totalorder %s294, %s308
      %p310 = scmp.eq.s32.totalorder %s32, 0
      %p311 = por %p309, %p310
      %s313 = sadd.s32 %s312, 1
      %p316 = scmp.eq.s32.totalorder %s26, 1
      %p317 = scmp.ne.s32.totalorder %s312, %s314
      %p318 = scmp.eq.s32.totalorder %s26, 0
      %p319 = por %p317, %p318
      %p320 = scmp.ne.s32.totalorder %s312, %s314
      %p321 = scmp.eq.s32.totalorder %s31, 1
      %p322 = por %p320, %p321
      %p323 = scmp.ne.s32.totalorder %s314, %s315
      %p324 = scmp.eq.s32.totalorder %s31, 0
      %p325 = por %p323, %p324
      %p326 = scmp.ne.s32.totalorder %s314, %s315
      %p327 = scmp.eq.s32.totalorder %s32, 1
      %p328 = por %p326, %p327
      %p330 = scmp.ne.s32.totalorder %s315, %s329
      %p331 = scmp.eq.s32.totalorder %s32, 0
      %p332 = por %p330, %p331
      %s334 = sadd.s32 %s333, 1
      %p337 = scmp.eq.s32.totalorder %s26, 1
      %p338 = scmp.ne.s32.totalorder %s333, %s335
      %p339 = scmp.eq.s32.totalorder %s26, 0
      %p340 = por %p338, %p339
      %p341 = scmp.ne.s32.totalorder %s333, %s335
      %p342 = scmp.eq.s32.totalorder %s31, 1
      %p343 = por %p341, %p342
      %p344 = scmp.ne.s32.totalorder %s335, %s336
      %p345 = scmp.eq.s32.totalorder %s31, 0
      %p346 = por %p344, %p345
      %p347 = scmp.ne.s32.totalorder %s335, %s336
      %p348 = scmp.eq.s32.totalorder %s32, 1
      %p349 = por %p347, %p348
      %p351 = scmp.ne.s32.totalorder %s336, %s350
      %p352 = scmp.eq.s32.totalorder %s32, 0
      %p353 = por %p351, %p352
      %s355 = sadd.s32 %s354, 1
      %p358 = scmp.eq.s32.totalorder %s26, 1
      %p359 = scmp.ne.s32.totalorder %s354, %s356
      %p360 = scmp.eq.s32.totalorder %s26, 0
      %p361 = por %p359, %p360
      %p362 = scmp.ne.s32.totalorder %s354, %s356
      %p363 = scmp.eq.s32.totalorder %s31, 1
      %p364 = por %p362, %p363
      %p365 = scmp.ne.s32.totalorder %s356, %s357
      %p366 = scmp.eq.s32.totalorder %s31, 0
      %p367 = por %p365, %p366
      %p368 = scmp.ne.s32.totalorder %s356, %s357
      %p369 = scmp.eq.s32.totalorder %s32, 1
      %p370 = por %p368, %p369
      %p372 = scmp.ne.s32.totalorder %s357, %s371
      %p373 = scmp.eq.s32.totalorder %s32, 0
      %p374 = por %p372, %p373
      %s375 = ssub.s32 %s26, %s33
      %p376 = scmp.eq.s32.totalorder %s375, 0
      %s378 = sadd.s32 %s377, 1
      %s379 = scalar_select %p376, %s377, %s378
      %p382 = pneg %p376
      %p383 = scmp.eq.s32.totalorder %s26, 1
      %p384 = por %p382, %p383
      %p385 = scmp.ne.s32.totalorder %s377, %s380
      %p386 = scmp.eq.s32.totalorder %s26, 0
      %p387 = por %p385, %p386
      %p388 = scmp.ne.s32.totalorder %s377, %s380
      %p389 = scmp.eq.s32.totalorder %s31, 1
      %p390 = por %p388, %p389
      %p391 = scmp.ne.s32.totalorder %s380, %s381
      %p392 = scmp.eq.s32.totalorder %s31, 0
      %p393 = por %p391, %p392
      %p394 = scmp.ne.s32.totalorder %s380, %s381
      %p395 = scmp.eq.s32.totalorder %s32, 1
      %p396 = por %p394, %p395
      %p398 = scmp.ne.s32.totalorder %s381, %s397
      %p399 = scmp.eq.s32.totalorder %s32, 0
      %p400 = por %p398, %p399
      %p401 = scmp.le.s32.totalorder 1, %s26
      %p402 = scmp.lt.s32.totalorder %s26, 3
      %p403 = pnand %p401, %p402
      %p404 = pneg %p403
      // Predicated region
      $region9: #{tpu_custom_call.1} parent=5 // pred_check
        _
      $region10: #{tpu_custom_call.1} parent=5 // pred_check_branch
        %406 = sbr.rel (%p403) target = $region12
      $region11: #{tpu_custom_call.1} parent=5 // pred_region
        %s407 = ssub.s32 %s26, 1
        // Predicated region
        $region13: #{tpu_custom_call.1} parent=11 // pred_check
          %p408 = pneg %p73
        $region14: #{tpu_custom_call.1} parent=11 // pred_check_branch
          %410 = sbr.rel (%p408) target = $region16
        $region15: #{tpu_custom_call.1} parent=11 // pred_region
          _
        $region16: #{tpu_custom_call.1} parent=11 // pred_fallthru
          _
        // Predicated region
        $region17: #{tpu_custom_call.1} parent=11 // pred_check
          %p411 = pneg %p94
        $region18: #{tpu_custom_call.1} parent=11 // pred_check_branch
          %413 = sbr.rel (%p411) target = $region20
        $region19: #{tpu_custom_call.1} parent=11 // pred_region
          _
        $region20: #{tpu_custom_call.1} parent=11 // pred_fallthru
          _
        // Predicated region
        $region21: #{tpu_custom_call.1} parent=11 // pred_check
          %p414 = pneg %p115
        $region22: #{tpu_custom_call.1} parent=11 // pred_check_branch
          %416 = sbr.rel (%p414) target = $region24
        $region23: #{tpu_custom_call.1} parent=11 // pred_region
          _
        $region24: #{tpu_custom_call.1} parent=11 // pred_fallthru
          _
        // Predicated region
        $region25: #{tpu_custom_call.1} parent=11 // pred_check
          %p417 = pneg %p136
        $region26: #{tpu_custom_call.1} parent=11 // pred_check_branch
          %419 = sbr.rel (%p417) target = $region28
        $region27: #{tpu_custom_call.1} parent=11 // pred_region
          _
        $region28: #{tpu_custom_call.1} parent=11 // pred_fallthru
          _
        // Predicated region
        $region29: #{tpu_custom_call.1} parent=11 // pred_check
          %p420 = pneg %p157
        $region30: #{tpu_custom_call.1} parent=11 // pred_check_branch
          %422 = sbr.rel (%p420) target = $region32
        $region31: #{tpu_custom_call.1} parent=11 // pred_region
          %s424 = ssub.s32 9216, 9216
          %425 = vsyncadd [#allocation3], %s424
          %s426 = sshll.u32 [#allocation2], 4
          %s427 = int_to_ptr.vmem [resolvable:$true] %s426
          %432 = dma.hbm_to_vmem [thread:$0]  %s5, 9216, %s427, [#allocation3], 64, 64, 4
        $region32: #{tpu_custom_call.1} parent=11 // pred_fallthru
          _
        // Predicated region
        $region33: #{tpu_custom_call.1} parent=11 // pred_check
          %p433 = pneg %p178
        $region34: #{tpu_custom_call.1} parent=11 // pred_check_branch
          %435 = sbr.rel (%p433) target = $region36
        $region35: #{tpu_custom_call.1} parent=11 // pred_region
          _
        $region36: #{tpu_custom_call.1} parent=11 // pred_fallthru
          _
        // Predicated region
        $region37: #{tpu_custom_call.1} parent=11 // pred_check
          %p436 = pneg %p199
        $region38: #{tpu_custom_call.1} parent=11 // pred_check_branch
          %438 = sbr.rel (%p436) target = $region40
        $region39: #{tpu_custom_call.1} parent=11 // pred_region
          _
        $region40: #{tpu_custom_call.1} parent=11 // pred_fallthru
          _
        // Predicated region
        $region41: #{tpu_custom_call.1} parent=11 // pred_check
          %p439 = pneg %p220
        $region42: #{tpu_custom_call.1} parent=11 // pred_check_branch
          %441 = sbr.rel (%p439) target = $region44
        $region43: #{tpu_custom_call.1} parent=11 // pred_region
          _
        $region44: #{tpu_custom_call.1} parent=11 // pred_fallthru
          _
        // Predicated region
        $region45: #{tpu_custom_call.1} parent=11 // pred_check
          %p442 = pneg %p241
        $region46: #{tpu_custom_call.1} parent=11 // pred_check_branch
          %444 = sbr.rel (%p442) target = $region48
        $region47: #{tpu_custom_call.1} parent=11 // pred_region
          _
        $region48: #{tpu_custom_call.1} parent=11 // pred_fallthru
          _
        // Predicated region
        $region49: #{tpu_custom_call.1} parent=11 // pred_check
          %p445 = pneg %p262
        $region50: #{tpu_custom_call.1} parent=11 // pred_check_branch
          %447 = sbr.rel (%p445) target = $region52
        $region51: #{tpu_custom_call.1} parent=11 // pred_region
          _
        $region52: #{tpu_custom_call.1} parent=11 // pred_fallthru
          _
        // Predicated region
        $region53: #{tpu_custom_call.1} parent=11 // pred_check
          %p448 = pneg %p283
        $region54: #{tpu_custom_call.1} parent=11 // pred_check_branch
          %450 = sbr.rel (%p448) target = $region56
        $region55: #{tpu_custom_call.1} parent=11 // pred_region
          _
        $region56: #{tpu_custom_call.1} parent=11 // pred_fallthru
          _
        // Predicated region
        $region57: #{tpu_custom_call.1} parent=11 // pred_check
          %p451 = pneg %p304
        $region58: #{tpu_custom_call.1} parent=11 // pred_check_branch
          %453 = sbr.rel (%p451) target = $region60
        $region59: #{tpu_custom_call.1} parent=11 // pred_region
          _
        $region60: #{tpu_custom_call.1} parent=11 // pred_fallthru
          _
        // Predicated region
        $region61: #{tpu_custom_call.1} parent=11 // pred_check
          %p454 = pneg %p325
        $region62: #{tpu_custom_call.1} parent=11 // pred_check_branch
          %456 = sbr.rel (%p454) target = $region64
        $region63: #{tpu_custom_call.1} parent=11 // pred_region
          _
        $region64: #{tpu_custom_call.1} parent=11 // pred_fallthru
          _
        // Predicated region
        $region65: #{tpu_custom_call.1} parent=11 // pred_check
          %p457 = pneg %p346
        $region66: #{tpu_custom_call.1} parent=11 // pred_check_branch
          %459 = sbr.rel (%p457) target = $region68
        $region67: #{tpu_custom_call.1} parent=11 // pred_region
          _
        $region68: #{tpu_custom_call.1} parent=11 // pred_fallthru
          _
        // Predicated region
        $region69: #{tpu_custom_call.1} parent=11 // pred_check
          %p460 = pneg %p367
        $region70: #{tpu_custom_call.1} parent=11 // pred_check_branch
          %462 = sbr.rel (%p460) target = $region72
        $region71: #{tpu_custom_call.1} parent=11 // pred_region
          _
        $region72: #{tpu_custom_call.1} parent=11 // pred_fallthru
          _
      $region12: #{tpu_custom_call.1} parent=5 // pred_fallthru
        _
      %p463 = scmp.lt.s32.totalorder %s26, 2
      // Predicated region
      $region73: #{tpu_custom_call.1} parent=5 // pred_check
        %p464 = pneg %p463
      $region74: #{tpu_custom_call.1} parent=5 // pred_check_branch
        %466 = sbr.rel (%p464) target = $region76
      $region75: #{tpu_custom_call.1} parent=5 // pred_region
        // Predicated region
        $region77: #{tpu_custom_call.1} parent=75 // pred_check
          %p467 = pneg %p46
        $region78: #{tpu_custom_call.1} parent=75 // pred_check_branch
          %469 = sbr.rel (%p467) target = $region80
        $region79: #{tpu_custom_call.1} parent=75 // pred_region
          %s470 = smul.u32 16, %s26
          %p471 = scmp.lt.s32.totalorder %s470, 31
          %s472 = scalar_select %p471, %s470, 31
          %s473 = smul.addr %s472, 8
          %s474 = scalar_lea.vmem %s0, %s473
          %s475 = smul.u32 16, %s26
        $region80: #{tpu_custom_call.1} parent=75 // pred_fallthru
          _
      $region76: #{tpu_custom_call.1} parent=5 // pred_fallthru
        _
      %p476 = scmp.le.s32.totalorder 1, %s26
      %p477 = scmp.lt.s32.totalorder %s26, 3
      %p478 = pnand %p476, %p477
      %p479 = pneg %p478
      // Predicated region
      $region81: #{tpu_custom_call.1} parent=5 // pred_check
        _
      $region82: #{tpu_custom_call.1} parent=5 // pred_check_branch
        %481 = sbr.rel (%p478) target = $region84
      $region83: #{tpu_custom_call.1} parent=5 // pred_region
        %s482 = ssub.s32 %s26, 1
        // Predicated region
        $region85: #{tpu_custom_call.1} parent=83 // pred_check
          %p483 = pneg %p157
        $region86: #{tpu_custom_call.1} parent=83 // pred_check_branch
          %485 = sbr.rel (%p483) target = $region88
        $region87: #{tpu_custom_call.1} parent=83 // pred_region
          %486 = dma.done [#allocation3], 9216
        $region88: #{tpu_custom_call.1} parent=83 // pred_fallthru
          _
        %s487 = smul.u32 16, %s31
        %p488 = scmp.lt.s32.totalorder %s487, 31
        %s489 = scalar_select %p488, %s487, 31
        %s490 = smul.addr %s489, 8
        %s491 = scalar_lea.vmem %s0, %s490
        %p492 = pneg %p52
        %p493 = pneg %p49
        %p494 = pneg %p73
        %p495 = pneg %p70
        %p496 = pneg %p94
        %p497 = pneg %p91
        %p498 = pneg %p115
        %p499 = pneg %p112
        %p500 = pneg %p136
        %p501 = pneg %p133
        %p502 = pneg %p157
        %p503 = pneg %p154
        %p504 = pneg %p178
        %p505 = pneg %p175
        %p506 = pneg %p199
        %p507 = pneg %p196
        %p508 = pneg %p220
        %p509 = pneg %p217
        %p510 = pneg %p241
        %p511 = pneg %p238
        %p512 = pneg %p262
        %p513 = pneg %p259
        %p514 = pneg %p283
        %p515 = pneg %p280
        %p516 = pneg %p304
        %p517 = pneg %p301
        %p518 = pneg %p325
        %p519 = pneg %p322
        %p520 = pneg %p346
        %p521 = pneg %p343
        %p522 = pneg %p367
        %p523 = pneg %p364
        %p524 = pneg %p393
        %p525 = pneg %p390
        %s526 = sand.u32 %s380, 1
        %s527 = scalar_lea.sflag [#allocation4], %s526
        %s528 = sand.u32 %s380, 1
        %s529 = smul.addr %s528, 128
        %s530 = scalar_lea.vmem [#allocation5], %s529
        %s531 = smul.u32 16, %s31
        %p532 = scmp.lt.s32.totalorder %s531, 31
        %s533 = scalar_select %p532, %s531, 31
        %s534 = smul.addr %s533, 8
        %s535 = scalar_lea.vmem %s0, %s534
        %s536 = smul.u32 16, %s31
        %s537 = smul.u32 16, %s31
        %v539 = vld [vmem:[%s535] sm:$0xff]
        %v540 = vld [vmem:[%s535 + $0x8] sm:$0xff]
        %v541 = vld [vmem:[%s535 + $0x10] sm:$0xff]
        %v542 = vld [vmem:[%s535 + $0x18] sm:$0xff]
        %v543 = vld [vmem:[%s535 + $0x20] sm:$0xff]
        %v544 = vld [vmem:[%s535 + $0x28] sm:$0xff]
        %v545 = vld [vmem:[%s535 + $0x30] sm:$0xff]
        %v546 = vld [vmem:[%s535 + $0x38] sm:$0xff]
        %v547 = vld [vmem:[%s535 + $0x40] sm:$0xff]
        %v548 = vld [vmem:[%s535 + $0x48] sm:$0xff]
        %v549 = vld [vmem:[%s535 + $0x50] sm:$0xff]
        %v550 = vld [vmem:[%s535 + $0x58] sm:$0xff]
        %v551 = vld [vmem:[%s535 + $0x60] sm:$0xff]
        %v552 = vld [vmem:[%s535 + $0x68] sm:$0xff]
        %v553 = vld [vmem:[%s535 + $0x70] sm:$0xff]
        %v554 = vld [vmem:[%s535 + $0x78] sm:$0xff]
        %v555 = vpack.c.bf16 %v540, %v539
        %v556 = vpack.c.bf16 %v542, %v541
        %v557 = vpack.c.bf16 %v544, %v543
        %v558 = vpack.c.bf16 %v546, %v545
        %v559 = vpack.c.bf16 %v548, %v547
        %v560 = vpack.c.bf16 %v550, %v549
        %v561 = vpack.c.bf16 %v552, %v551
        %v562 = vpack.c.bf16 %v554, %v553
        %v563 = vld [vmem:[%s1] sm:$0xf]
        %v564 = vld [vmem:[%s1 + $0x4] sm:$0xf]
        %v565 = vld [vmem:[%s2] sm:$0x1]
        %v567 = vlaneseq
        %v568 = vshrl.u32 %v567, 7
        %v569 = vsub.s32 0, %v568
        %v570 = vrot.slane %v565, %v569
        %v574 = vunpack.c.l.b16 %v563
        %v575 = vunpack.c.l.b16 %v564
        %v576 = vpack.c.b16 %v575, %v574
        %vm578 = vcmask 130048
        %v580 = vsel %vm578, %v555, 0
        %v583 = vsel %vm578, %v556, 0
        %v586 = vsel %vm578, %v557, 0
        %v589 = vsel %vm578, %v558, 0
        %v592 = vsel %vm578, %v559, 0
        %v595 = vsel %vm578, %v560, 0
        %v598 = vsel %vm578, %v561, 0
        %v601 = vsel %vm578, %v562, 0
        %603 = vmatprep.subr.bf16.mxu0 0
        %604 = vmatpush1.bf16.msra.mxu0 %v576
        %605 = vmatprep.subr.bf16.mxu0 0
        %606 = vmatpush1.bf16.msra.mxu0 0
        %607 = vmatprep.subr.bf16.mxu0 0
        %608 = vmatpush1.bf16.msra.mxu0 0
        %609 = vmatprep.subr.bf16.mxu0 0
        %610 = vmatpush1.bf16.msra.mxu0 0
        %611 = vmatprep.subr.bf16.mxu0 0
        %612 = vmatpush1.bf16.msra.mxu0 0
        %613 = vmatprep.subr.bf16.mxu0 0
        %614 = vmatpush1.bf16.msra.mxu0 0
        %615 = vmatprep.subr.bf16.mxu0 0
        %616 = vmatpush1.bf16.msra.mxu0 0
        %617 = vmatprep.subr.bf16.mxu0 0
        %618 = vmatpush1.bf16.msra.mxu0 0
        %619 = vmatprep.subr.bf16.mxu0 0
        %620 = vmatpush1.bf16.msra.mxu0 0
        %621 = vmatprep.subr.bf16.mxu0 0
        %622 = vmatpush1.bf16.msra.mxu0 0
        %623 = vmatprep.subr.bf16.mxu0 0
        %624 = vmatpush1.bf16.msra.mxu0 0
        %625 = vmatprep.subr.bf16.mxu0 0
        %626 = vmatpush1.bf16.msra.mxu0 0
        %627 = vmatprep.subr.bf16.mxu0 0
        %628 = vmatpush1.bf16.msra.mxu0 0
        %629 = vmatprep.subr.bf16.mxu0 0
        %630 = vmatpush1.bf16.msra.mxu0 0
        %631 = vmatprep.subr.bf16.mxu0 0
        %632 = vmatpush1.bf16.msra.mxu0 0
        %633 = vmatprep.subr.bf16.mxu0 0
        %634 = vmatpush1.bf16.msra.mxu0 0
        %635 = vmatprep.mubr.bf16.mxu0 0
        %636 = vmatmul.mubr.bf16.gmra.mrb[0].mxu0 %v580
        %v637 = vpop.f32.mrb[0].mxu0
        %v638 = vadd.f32 %v570, %v637
        %v639 = vpop.f32.mrb[0].mxu0
        %v640 = vpop.f32.mrb[0].mxu0
        %v641 = vadd.f32 %v570, %v640
        %v642 = vpop.f32.mrb[0].mxu0
        %643 = vmatprep.mubr.bf16.mxu0 0
        %644 = vmatmul.mubr.bf16.gmra.mrb[0].mxu0 %v583
        %v645 = vpop.f32.mrb[0].mxu0
        %v646 = vadd.f32 %v570, %v645
        %v647 = vpop.f32.mrb[0].mxu0
        %v648 = vpop.f32.mrb[0].mxu0
        %v649 = vadd.f32 %v570, %v648
        %v650 = vpop.f32.mrb[0].mxu0
        %651 = vmatprep.mubr.bf16.mxu0 0
        %652 = vmatmul.mubr.bf16.gmra.mrb[0].mxu0 %v586
        %v653 = vpop.f32.mrb[0].mxu0
        %v654 = vadd.f32 %v570, %v653
        %v655 = vpop.f32.mrb[0].mxu0
        %v656 = vpop.f32.mrb[0].mxu0
        %v657 = vadd.f32 %v570, %v656
        %v658 = vpop.f32.mrb[0].mxu0
        %659 = vmatprep.mubr.bf16.mxu0 0
        %660 = vmatmul.mubr.bf16.gmra.mrb[0].mxu0 %v589
        %v661 = vpop.f32.mrb[0].mxu0
        %v662 = vadd.f32 %v570, %v661
        %v663 = vpop.f32.mrb[0].mxu0
        %v664 = vpop.f32.mrb[0].mxu0
        %v665 = vadd.f32 %v570, %v664
        %v666 = vpop.f32.mrb[0].mxu0
        %667 = vmatprep.mubr.bf16.mxu0 0
        %668 = vmatmul.mubr.bf16.gmra.mrb[0].mxu0 %v592
        %v669 = vpop.f32.mrb[0].mxu0
        %v670 = vadd.f32 %v570, %v669
        %v671 = vpop.f32.mrb[0].mxu0
        %v672 = vpop.f32.mrb[0].mxu0
        %v673 = vadd.f32 %v570, %v672
        %v674 = vpop.f32.mrb[0].mxu0
        %675 = vmatprep.mubr.bf16.mxu0 0
        %676 = vmatmul.mubr.bf16.gmra.mrb[0].mxu0 %v595
        %v677 = vpop.f32.mrb[0].mxu0
        %v678 = vadd.f32 %v570, %v677
        %v679 = vpop.f32.mrb[0].mxu0
        %v680 = vpop.f32.mrb[0].mxu0
        %v681 = vadd.f32 %v570, %v680
        %v682 = vpop.f32.mrb[0].mxu0
        %683 = vmatprep.mubr.bf16.mxu0 0
        %684 = vmatmul.mubr.bf16.gmra.mrb[0].mxu0 %v598
        %v685 = vpop.f32.mrb[0].mxu0
        %v686 = vadd.f32 %v570, %v685
        %v687 = vpop.f32.mrb[0].mxu0
        %v688 = vpop.f32.mrb[0].mxu0
        %v689 = vadd.f32 %v570, %v688
        %v690 = vpop.f32.mrb[0].mxu0
        %691 = vmatprep.mubr.bf16.mxu0 0
        %692 = vmatmul.mubr.bf16.gmra.mrb[0].mxu0 %v601
        %v693 = vpop.f32.mrb[0].mxu0
        %v694 = vadd.f32 %v570, %v693
        %v695 = vpop.f32.mrb[0].mxu0
        %v696 = vpop.f32.mrb[0].mxu0
        %v697 = vadd.f32 %v570, %v696
        %v698 = vpop.f32.mrb[0].mxu0
        %699 = vdwg.mxu0
        %v700 = vld [vmem:[%s3] sm:$0x1]
        %v701 = vld [vmem:[%s4] sm:$0x1]
        %v702 = vld [vmem:[%s13] sm:$0xff]
        %v703 = vld [vmem:[%s13 + $0x8] sm:$0xff]
        %v704 = vld [vmem:[%s13 + $0x10] sm:$0xff]
        %v705 = vld [vmem:[%s13 + $0x18] sm:$0xff]
        %v706 = vld [vmem:[%s13 + $0x20] sm:$0xff]
        %v707 = vld [vmem:[%s13 + $0x28] sm:$0xff]
        %v708 = vld [vmem:[%s13 + $0x30] sm:$0xff]
        %v709 = vld [vmem:[%s13 + $0x38] sm:$0xff]
        %v710 = vld [vmem:[%s13 + $0x40] sm:$0xff]
        %v711 = vld [vmem:[%s13 + $0x48] sm:$0xff]
        %v712 = vld [vmem:[%s13 + $0x50] sm:$0xff]
        %v713 = vld [vmem:[%s13 + $0x58] sm:$0xff]
        %v714 = vld [vmem:[%s13 + $0x60] sm:$0xff]
        %v715 = vld [vmem:[%s13 + $0x68] sm:$0xff]
        %v716 = vld [vmem:[%s13 + $0x70] sm:$0xff]
        %v717 = vld [vmem:[%s13 + $0x78] sm:$0xff]
        %v718 = vadd.f32 %v638, %v641
        %v719 = vadd.f32 %v718, %v646
        %v720 = vadd.f32 %v719, %v649
        %v721 = vadd.f32 %v720, %v654
        %v722 = vadd.f32 %v721, %v657
        %v723 = vadd.f32 %v722, %v662
        %v724 = vadd.f32 %v723, %v665
        %v725 = vrot.slane %v724, 4
        %v726 = vadd.f32 %v724, %v725
        %v727 = vrot.slane %v726, 2
        %v728 = vadd.f32 %v726, %v727
        %v729 = vrot.slane %v728, 1
        %v730 = vadd.f32 %v728, %v729
        %v731 = vadd.f32 %v670, %v673
        %v732 = vadd.f32 %v731, %v678
        %v733 = vadd.f32 %v732, %v681
        %v734 = vadd.f32 %v733, %v686
        %v735 = vadd.f32 %v734, %v689
        %v736 = vadd.f32 %v735, %v694
        %v737 = vadd.f32 %v736, %v697
        %v738 = vrot.slane %v737, 4
        %v739 = vadd.f32 %v737, %v738
        %v740 = vrot.slane %v739, 2
        %v741 = vadd.f32 %v739, %v740
        %v742 = vrot.slane %v741, 1
        %v743 = vadd.f32 %v741, %v742
        %v744 = vmul.f32 %v638, %v638
        %v745 = vmul.f32 %v641, %v641
        %v746 = vmul.f32 %v646, %v646
        %v747 = vmul.f32 %v649, %v649
        %v748 = vmul.f32 %v654, %v654
        %v749 = vmul.f32 %v657, %v657
        %v750 = vmul.f32 %v662, %v662
        %v751 = vmul.f32 %v665, %v665
        %v752 = vmul.f32 %v670, %v670
        %v753 = vmul.f32 %v673, %v673
        %v754 = vmul.f32 %v678, %v678
        %v755 = vmul.f32 %v681, %v681
        %v756 = vmul.f32 %v686, %v686
        %v757 = vmul.f32 %v689, %v689
        %v758 = vmul.f32 %v694, %v694
        %v759 = vmul.f32 %v697, %v697
        %v760 = vadd.f32 %v744, %v745
        %v761 = vadd.f32 %v760, %v746
        %v762 = vadd.f32 %v761, %v747
        %v763 = vadd.f32 %v762, %v748
        %v764 = vadd.f32 %v763, %v749
        %v765 = vadd.f32 %v764, %v750
        %v766 = vadd.f32 %v765, %v751
        %v767 = vrot.slane %v766, 4
        %v768 = vadd.f32 %v766, %v767
        %v769 = vrot.slane %v768, 2
        %v770 = vadd.f32 %v768, %v769
        %v771 = vrot.slane %v770, 1
        %v772 = vadd.f32 %v770, %v771
        %v773 = vadd.f32 %v752, %v753
        %v774 = vadd.f32 %v773, %v754
        %v775 = vadd.f32 %v774, %v755
        %v776 = vadd.f32 %v775, %v756
        %v777 = vadd.f32 %v776, %v757
        %v778 = vadd.f32 %v777, %v758
        %v779 = vadd.f32 %v778, %v759
        %v780 = vrot.slane %v779, 4
        %v781 = vadd.f32 %v779, %v780
        %v782 = vrot.slane %v781, 2
        %v783 = vadd.f32 %v781, %v782
        %v784 = vrot.slane %v783, 1
        %v785 = vadd.f32 %v783, %v784
        %vm788 = vcmask 1041409
        %v789 = vsel %vm788, %v743, %v730
        %791 = vmatprep.subr.mxu0 0.0
        %792 = vmatpush1.msra.mxu0 %v702
        %793 = vmatprep.subr.mxu0 0.0
        %794 = vmatpush1.msra.mxu0 %v703
        %795 = vmatprep.subr.mxu0 0.0
        %796 = vmatpush1.msra.mxu0 %v704
        %797 = vmatprep.subr.mxu0 0.0
        %798 = vmatpush1.msra.mxu0 %v705
        %799 = vmatprep.subr.mxu0 0.0
        %800 = vmatpush1.msra.mxu0 %v706
        %801 = vmatprep.subr.mxu0 0.0
        %802 = vmatpush1.msra.mxu0 %v707
        %803 = vmatprep.subr.mxu0 0.0
        %804 = vmatpush1.msra.mxu0 %v708
        %805 = vmatprep.subr.mxu0 0.0
        %806 = vmatpush1.msra.mxu0 %v709
        %807 = vmatprep.subr.mxu0 0.0
        %808 = vmatpush1.msra.mxu0 %v710
        %809 = vmatprep.subr.mxu0 0.0
        %810 = vmatpush1.msra.mxu0 %v711
        %811 = vmatprep.subr.mxu0 0.0
        %812 = vmatpush1.msra.mxu0 %v712
        %813 = vmatprep.subr.mxu0 0.0
        %814 = vmatpush1.msra.mxu0 %v713
        %815 = vmatprep.subr.mxu0 0.0
        %816 = vmatpush1.msra.mxu0 %v714
        %817 = vmatprep.subr.mxu0 0.0
        %818 = vmatpush1.msra.mxu0 %v715
        %819 = vmatprep.subr.mxu0 0.0
        %820 = vmatpush1.msra.mxu0 %v716
        %821 = vmatprep.subr.mxu0 0.0
        %822 = vmatpush1.msra.mxu0 %v717
        %823 = vmatprep.subr.mxu0 0.0
        %824 = vmatpush1.msra.mxu0 0.0
        %825 = vmatprep.subr.mxu0 0.0
        %826 = vmatpush1.msra.mxu0 0.0
        %827 = vmatprep.subr.mxu0 0.0
        %828 = vmatpush1.msra.mxu0 0.0
        %829 = vmatprep.subr.mxu0 0.0
        %830 = vmatpush1.msra.mxu0 0.0
        %831 = vmatprep.subr.mxu0 0.0
        %832 = vmatpush1.msra.mxu0 0.0
        %833 = vmatprep.subr.mxu0 0.0
        %834 = vmatpush1.msra.mxu0 0.0
        %835 = vmatprep.subr.mxu0 0.0
        %836 = vmatpush1.msra.mxu0 0.0
        %837 = vmatprep.subr.mxu0 0.0
        %838 = vmatpush1.msra.mxu0 0.0
        %839 = vmatprep.subr.mxu0 0.0
        %840 = vmatpush1.msra.mxu0 0.0
        %841 = vmatprep.subr.mxu0 0.0
        %842 = vmatpush1.msra.mxu0 0.0
        %843 = vmatprep.subr.mxu0 0.0
        %844 = vmatpush1.msra.mxu0 0.0
        %845 = vmatprep.subr.mxu0 0.0
        %846 = vmatpush1.msra.mxu0 0.0
        %847 = vmatprep.subr.mxu0 0.0
        %848 = vmatpush1.msra.mxu0 0.0
        %849 = vmatprep.subr.mxu0 0.0
        %850 = vmatpush1.msra.mxu0 0.0
        %851 = vmatprep.subr.mxu0 0.0
        %852 = vmatpush1.msra.mxu0 0.0
        %853 = vmatprep.subr.mxu0 0.0
        %854 = vmatpush1.msra.mxu0 0.0
        %855 = vmatprep.mubr.f32.mxu0 0.0
        %856 = vmatmul.mubr.f32.gmra.mrb[0].mxu0 %v789
        %v857 = vpop.f32.mrb[0].mxu0
        %v858 = vadd.f32 0.0, %v857
        %v859 = vpop.f32.mrb[0].mxu0
        %860 = vdwg.mxu0
        %v863 = vsel %vm788, %v785, %v772
        %865 = vmatprep.subr.mxu0 0.0
        %866 = vmatpush1.msra.mxu0 %v702
        %867 = vmatprep.subr.mxu0 0.0
        %868 = vmatpush1.msra.mxu0 %v703
        %869 = vmatprep.subr.mxu0 0.0
        %870 = vmatpush1.msra.mxu0 %v704
        %871 = vmatprep.subr.mxu0 0.0
        %872 = vmatpush1.msra.mxu0 %v705
        %873 = vmatprep.subr.mxu0 0.0
        %874 = vmatpush1.msra.mxu0 %v706
        %875 = vmatprep.subr.mxu0 0.0
        %876 = vmatpush1.msra.mxu0 %v707
        %877 = vmatprep.subr.mxu0 0.0
        %878 = vmatpush1.msra.mxu0 %v708
        %879 = vmatprep.subr.mxu0 0.0
        %880 = vmatpush1.msra.mxu0 %v709
        %881 = vmatprep.subr.mxu0 0.0
        %882 = vmatpush1.msra.mxu0 %v710
        %883 = vmatprep.subr.mxu0 0.0
        %884 = vmatpush1.msra.mxu0 %v711
        %885 = vmatprep.subr.mxu0 0.0
        %886 = vmatpush1.msra.mxu0 %v712
        %887 = vmatprep.subr.mxu0 0.0
        %888 = vmatpush1.msra.mxu0 %v713
        %889 = vmatprep.subr.mxu0 0.0
        %890 = vmatpush1.msra.mxu0 %v714
        %891 = vmatprep.subr.mxu0 0.0
        %892 = vmatpush1.msra.mxu0 %v715
        %893 = vmatprep.subr.mxu0 0.0
        %894 = vmatpush1.msra.mxu0 %v716
        %895 = vmatprep.subr.mxu0 0.0
        %896 = vmatpush1.msra.mxu0 %v717
        %897 = vmatprep.subr.mxu0 0.0
        %898 = vmatpush1.msra.mxu0 0.0
        %899 = vmatprep.subr.mxu0 0.0
        %900 = vmatpush1.msra.mxu0 0.0
        %901 = vmatprep.subr.mxu0 0.0
        %902 = vmatpush1.msra.mxu0 0.0
        %903 = vmatprep.subr.mxu0 0.0
        %904 = vmatpush1.msra.mxu0 0.0
        %905 = vmatprep.subr.mxu0 0.0
        %906 = vmatpush1.msra.mxu0 0.0
        %907 = vmatprep.subr.mxu0 0.0
        %908 = vmatpush1.msra.mxu0 0.0
        %909 = vmatprep.subr.mxu0 0.0
        %910 = vmatpush1.msra.mxu0 0.0
        %911 = vmatprep.subr.mxu0 0.0
        %912 = vmatpush1.msra.mxu0 0.0
        %913 = vmatprep.subr.mxu0 0.0
        %914 = vmatpush1.msra.mxu0 0.0
        %915 = vmatprep.subr.mxu0 0.0
        %916 = vmatpush1.msra.mxu0 0.0
        %917 = vmatprep.subr.mxu0 0.0
        %918 = vmatpush1.msra.mxu0 0.0
        %919 = vmatprep.subr.mxu0 0.0
        %920 = vmatpush1.msra.mxu0 0.0
        %921 = vmatprep.subr.mxu0 0.0
        %922 = vmatpush1.msra.mxu0 0.0
        %923 = vmatprep.subr.mxu0 0.0
        %924 = vmatpush1.msra.mxu0 0.0
        %925 = vmatprep.subr.mxu0 0.0
        %926 = vmatpush1.msra.mxu0 0.0
        %927 = vmatprep.subr.mxu0 0.0
        %928 = vmatpush1.msra.mxu0 0.0
        %929 = vmatprep.mubr.f32.mxu0 0.0
        %930 = vmatmul.mubr.f32.gmra.mrb[0].mxu0 %v863
        %v931 = vpop.f32.mrb[0].mxu0
        %v932 = vadd.f32 0.0, %v931
        %v933 = vpop.f32.mrb[0].mxu0
        %934 = vdwg.mxu0
        %v935 = vmul.f32 %v858, %v858
        %v936 = vsub.f32 %v932, %v935
        %v937 = vadd.f32 %v936, 1e-05
        %v938 = vrsqrt.pop %v937
        %v940 = vlaneseq
        %v941 = vshrl.u32 %v940, 7
        %v942 = vsub.s32 0, %v941
        %v943 = vrot.slane %v700, %v942
        %v945 = vmul.f32 %v938, %v943
        %v946 = vmul.f32 %v858, %v945
        %v948 = vlaneseq
        %v949 = vshrl.u32 %v948, 7
        %v950 = vsub.s32 0, %v949
        %v951 = vrot.slane %v701, %v950
        %v953 = vsub.f32 %v951, %v946
        %v956 = vunpack.c.l.s4 1966171168
        %v957 = vunpack.c.0.s8 %v956
        %v958 = vlaneseq
        %v959 = vshrl.u32 %v958, 7
        %v960 = vsub.s32 %v957, %v959
        %v961 = vrot.slane %v945, %v960
        %v962 = vcombine.high %v961, %v961
        %v964 = vunpack.c.l.s4 1966171168
        %v965 = vunpack.c.0.s8 %v964
        %v966 = vlaneseq
        %v967 = vshrl.u32 %v966, 7
        %v968 = vsub.s32 %v965, %v967
        %v969 = vrot.slane %v961, %v968
        %v971 = vunpack.c.l.s4 1966171168
        %v972 = vunpack.c.0.s8 %v971
        %v973 = vlaneseq
        %v974 = vshrl.u32 %v973, 7
        %v975 = vsub.s32 %v972, %v974
        %v976 = vrot.slane %v962, %v975
        %v977 = vlaneseq
        %v978 = vshrl.u32 %v977, 7
        %v979 = vsub.s32 0, %v978
        %v980 = vrot.slane %v969, %v979
        %v981 = vlaneseq
        %v982 = vshrl.u32 %v981, 7
        %v983 = vsub.s32 0, %v982
        %v984 = vrot.slane %v976, %v983
        %v987 = vmul.f32 %v638, %v980
        %v988 = vmul.f32 %v641, %v980
        %v989 = vmul.f32 %v646, %v980
        %v990 = vmul.f32 %v649, %v980
        %v991 = vmul.f32 %v654, %v980
        %v992 = vmul.f32 %v657, %v980
        %v993 = vmul.f32 %v662, %v980
        %v994 = vmul.f32 %v665, %v980
        %v995 = vmul.f32 %v670, %v984
        %v996 = vmul.f32 %v673, %v984
        %v997 = vmul.f32 %v678, %v984
        %v998 = vmul.f32 %v681, %v984
        %v999 = vmul.f32 %v686, %v984
        %v1000 = vmul.f32 %v689, %v984
        %v1001 = vmul.f32 %v694, %v984
        %v1002 = vmul.f32 %v697, %v984
        %v1005 = vunpack.c.l.s4 1966171168
        %v1006 = vunpack.c.0.s8 %v1005
        %v1007 = vlaneseq
        %v1008 = vshrl.u32 %v1007, 7
        %v1009 = vsub.s32 %v1006, %v1008
        %v1010 = vrot.slane %v953, %v1009
        %v1011 = vcombine.high %v1010, %v1010
        %v1013 = vunpack.c.l.s4 1966171168
        %v1014 = vunpack.c.0.s8 %v1013
        %v1015 = vlaneseq
        %v1016 = vshrl.u32 %v1015, 7
        %v1017 = vsub.s32 %v1014, %v1016
        %v1018 = vrot.slane %v1010, %v1017
        %v1020 = vunpack.c.l.s4 1966171168
        %v1021 = vunpack.c.0.s8 %v1020
        %v1022 = vlaneseq
        %v1023 = vshrl.u32 %v1022, 7
        %v1024 = vsub.s32 %v1021, %v1023
        %v1025 = vrot.slane %v1011, %v1024
        %v1026 = vlaneseq
        %v1027 = vshrl.u32 %v1026, 7
        %v1028 = vsub.s32 0, %v1027
        %v1029 = vrot.slane %v1018, %v1028
        %v1030 = vlaneseq
        %v1031 = vshrl.u32 %v1030, 7
        %v1032 = vsub.s32 0, %v1031
        %v1033 = vrot.slane %v1025, %v1032
        %v1036 = vadd.f32 %v987, %v1029
        %v1037 = vadd.f32 %v988, %v1029
        %v1038 = vadd.f32 %v989, %v1029
        %v1039 = vadd.f32 %v990, %v1029
        %v1040 = vadd.f32 %v991, %v1029
        %v1041 = vadd.f32 %v992, %v1029
        %v1042 = vadd.f32 %v993, %v1029
        %v1043 = vadd.f32 %v994, %v1029
        %v1044 = vadd.f32 %v995, %v1033
        %v1045 = vadd.f32 %v996, %v1033
        %v1046 = vadd.f32 %v997, %v1033
        %v1047 = vadd.f32 %v998, %v1033
        %v1048 = vadd.f32 %v999, %v1033
        %v1049 = vadd.f32 %v1000, %v1033
        %v1050 = vadd.f32 %v1001, %v1033
        %v1051 = vadd.f32 %v1002, %v1033
        %v1052 = vld [vmem:[%s15] sm:$0xff]
        %v1053 = vld [vmem:[%s15 + $0x8] sm:$0xff]
        %v1054 = vld [vmem:[%s15 + $0x10] sm:$0xff]
        %v1055 = vld [vmem:[%s15 + $0x18] sm:$0xff]
        %v1056 = vld [vmem:[%s15 + $0x20] sm:$0xff]
        %v1057 = vld [vmem:[%s15 + $0x28] sm:$0xff]
        %v1058 = vld [vmem:[%s15 + $0x30] sm:$0xff]
        %v1059 = vld [vmem:[%s15 + $0x38] sm:$0xff]
        %v1060 = vld [vmem:[%s15 + $0x40] sm:$0xff]
        %v1061 = vld [vmem:[%s15 + $0x48] sm:$0xff]
        %v1062 = vld [vmem:[%s15 + $0x50] sm:$0xff]
        %v1063 = vld [vmem:[%s15 + $0x58] sm:$0xff]
        %v1064 = vld [vmem:[%s15 + $0x60] sm:$0xff]
        %v1065 = vld [vmem:[%s15 + $0x68] sm:$0xff]
        %v1066 = vld [vmem:[%s15 + $0x70] sm:$0xff]
        %v1067 = vld [vmem:[%s15 + $0x78] sm:$0xff]
        %v1068 = vrot.slane %v1036, 7
        %v1069 = vrot.slane %v1037, 7
        %v1070 = vrot.slane %v1038, 7
        %v1071 = vrot.slane %v1039, 7
        %v1072 = vrot.slane %v1040, 7
        %v1073 = vrot.slane %v1041, 7
        %v1074 = vrot.slane %v1042, 7
        %v1075 = vrot.slane %v1043, 7
        %v1076 = vrot.slane %v1044, 7
        %v1077 = vrot.slane %v1045, 7
        %v1078 = vrot.slane %v1046, 7
        %v1079 = vrot.slane %v1047, 7
        %v1080 = vrot.slane %v1048, 7
        %v1081 = vrot.slane %v1049, 7
        %v1082 = vrot.slane %v1050, 7
        %v1083 = vrot.slane %v1051, 7
        %v1084 = vlaneseq
        %v1085 = vshrl.u32 %v1084, 7
        %vm1086 = vcmp.lt.s32.totalorder %v1085, 1
        %v1087 = vsel %vm1086, %v1082, %v1083
        %v1088 = vsel %vm1086, %v1081, %v1082
        %v1089 = vsel %vm1086, %v1080, %v1081
        %v1090 = vsel %vm1086, %v1079, %v1080
        %v1091 = vsel %vm1086, %v1078, %v1079
        %v1092 = vsel %vm1086, %v1077, %v1078
        %v1093 = vsel %vm1086, %v1076, %v1077
        %v1094 = vsel %vm1086, %v1075, %v1076
        %v1095 = vsel %vm1086, %v1074, %v1075
        %v1096 = vsel %vm1086, %v1073, %v1074
        %v1097 = vsel %vm1086, %v1072, %v1073
        %v1098 = vsel %vm1086, %v1071, %v1072
        %v1099 = vsel %vm1086, %v1070, %v1071
        %v1100 = vsel %vm1086, %v1069, %v1070
        %v1101 = vsel %vm1086, %v1068, %v1069
        %v1102 = vsel %vm1086, %v1083, %v1068
        %1104 = vset.pattern.permute.xlu0 0
        %1105 = vperm.xlu0 %1104, %v1052
        %v1106 = vpop.permute.xlu0 %1105
        %1109 = vset.pattern.permute.xlu0 0
        %1110 = vperm.xlu0 %1109, %v1053
        %v1111 = vpop.permute.xlu0 %1110
        %1114 = vset.pattern.permute.xlu0 0
        %1115 = vperm.xlu0 %1114, %v1054
        %v1116 = vpop.permute.xlu0 %1115
        %1119 = vset.pattern.permute.xlu0 0
        %1120 = vperm.xlu0 %1119, %v1055
        %v1121 = vpop.permute.xlu0 %1120
        %1124 = vset.pattern.permute.xlu0 0
        %1125 = vperm.xlu0 %1124, %v1056
        %v1126 = vpop.permute.xlu0 %1125
        %1129 = vset.pattern.permute.xlu0 0
        %1130 = vperm.xlu0 %1129, %v1057
        %v1131 = vpop.permute.xlu0 %1130
        %1134 = vset.pattern.permute.xlu0 0
        %1135 = vperm.xlu0 %1134, %v1058
        %v1136 = vpop.permute.xlu0 %1135
        %1139 = vset.pattern.permute.xlu0 0
        %1140 = vperm.xlu0 %1139, %v1059
        %v1141 = vpop.permute.xlu0 %1140
        %1144 = vset.pattern.permute.xlu0 0
        %1145 = vperm.xlu0 %1144, %v1060
        %v1146 = vpop.permute.xlu0 %1145
        %1149 = vset.pattern.permute.xlu0 0
        %1150 = vperm.xlu0 %1149, %v1061
        %v1151 = vpop.permute.xlu0 %1150
        %1154 = vset.pattern.permute.xlu0 0
        %1155 = vperm.xlu0 %1154, %v1062
        %v1156 = vpop.permute.xlu0 %1155
        %1159 = vset.pattern.permute.xlu0 0
        %1160 = vperm.xlu0 %1159, %v1063
        %v1161 = vpop.permute.xlu0 %1160
        %1164 = vset.pattern.permute.xlu0 0
        %1165 = vperm.xlu0 %1164, %v1064
        %v1166 = vpop.permute.xlu0 %1165
        %1169 = vset.pattern.permute.xlu0 0
        %1170 = vperm.xlu0 %1169, %v1065
        %v1171 = vpop.permute.xlu0 %1170
        %1174 = vset.pattern.permute.xlu0 0
        %1175 = vperm.xlu0 %1174, %v1066
        %v1176 = vpop.permute.xlu0 %1175
        %1179 = vset.pattern.permute.xlu0 0
        %1180 = vperm.xlu0 %1179, %v1067
        %v1181 = vpop.permute.xlu0 %1180
        %v1183 = vmul.f32 %v1087, %v1106
        %v1184 = vmul.f32 %v1102, %v1111
        %v1185 = vmul.f32 %v1101, %v1116
        %v1186 = vmul.f32 %v1100, %v1121
        %v1187 = vmul.f32 %v1099, %v1126
        %v1188 = vmul.f32 %v1098, %v1131
        %v1189 = vmul.f32 %v1097, %v1136
        %v1190 = vmul.f32 %v1096, %v1141
        %v1191 = vmul.f32 %v1095, %v1146
        %v1192 = vmul.f32 %v1094, %v1151
        %v1193 = vmul.f32 %v1093, %v1156
        %v1194 = vmul.f32 %v1092, %v1161
        %v1195 = vmul.f32 %v1091, %v1166
        %v1196 = vmul.f32 %v1090, %v1171
        %v1197 = vmul.f32 %v1089, %v1176
        %v1198 = vmul.f32 %v1088, %v1181
        %v1199 = vpack.c.bf16 %v1184, %v1183
        %v1200 = vpack.c.bf16 %v1186, %v1185
        %v1201 = vpack.c.bf16 %v1188, %v1187
        %v1202 = vpack.c.bf16 %v1190, %v1189
        %v1203 = vpack.c.bf16 %v1192, %v1191
        %v1204 = vpack.c.bf16 %v1194, %v1193
        %v1205 = vpack.c.bf16 %v1196, %v1195
        %v1206 = vpack.c.bf16 %v1198, %v1197
        %v1207 = vld [vmem:[#allocation2] sm:$0xf]
        %v1208 = vld [vmem:[#allocation2 + $0x4] sm:$0xf]
        %v1209 = vld [vmem:[#allocation2 + $0x8] sm:$0xf]
        %v1210 = vld [vmem:[#allocation2 + $0xc] sm:$0xf]
        %v1211 = vld [vmem:[#allocation2 + $0x10] sm:$0xf]
        %v1212 = vld [vmem:[#allocation2 + $0x14] sm:$0xf]
        %v1213 = vld [vmem:[#allocation2 + $0x18] sm:$0xf]
        %v1214 = vld [vmem:[#allocation2 + $0x1c] sm:$0xf]
        %v1215 = vld [vmem:[#allocation2 + $0x20] sm:$0xf]
        %v1216 = vld [vmem:[#allocation2 + $0x24] sm:$0xf]
        %v1217 = vld [vmem:[#allocation2 + $0x28] sm:$0xf]
        %v1218 = vld [vmem:[#allocation2 + $0x2c] sm:$0xf]
        %v1219 = vld [vmem:[#allocation2 + $0x30] sm:$0xf]
        %v1220 = vld [vmem:[#allocation2 + $0x34] sm:$0xf]
        %v1221 = vld [vmem:[#allocation2 + $0x38] sm:$0xf]
        %v1222 = vld [vmem:[#allocation2 + $0x3c] sm:$0xf]
        %1223 = vset.pattern.permute.xlu0 1
        %1224 = vperm.xlu0 %1223, %v1052
        %v1225 = vpop.permute.xlu0 %1224
        %1227 = vset.pattern.permute.xlu0 1
        %1228 = vperm.xlu0 %1227, %v1053
        %v1229 = vpop.permute.xlu0 %1228
        %1231 = vset.pattern.permute.xlu0 1
        %1232 = vperm.xlu0 %1231, %v1054
        %v1233 = vpop.permute.xlu0 %1232
        %1235 = vset.pattern.permute.xlu0 1
        %1236 = vperm.xlu0 %1235, %v1055
        %v1237 = vpop.permute.xlu0 %1236
        %1239 = vset.pattern.permute.xlu0 1
        %1240 = vperm.xlu0 %1239, %v1056
        %v1241 = vpop.permute.xlu0 %1240
        %1243 = vset.pattern.permute.xlu0 1
        %1244 = vperm.xlu0 %1243, %v1057
        %v1245 = vpop.permute.xlu0 %1244
        %1247 = vset.pattern.permute.xlu0 1
        %1248 = vperm.xlu0 %1247, %v1058
        %v1249 = vpop.permute.xlu0 %1248
        %1251 = vset.pattern.permute.xlu0 1
        %1252 = vperm.xlu0 %1251, %v1059
        %v1253 = vpop.permute.xlu0 %1252
        %1255 = vset.pattern.permute.xlu0 1
        %1256 = vperm.xlu0 %1255, %v1060
        %v1257 = vpop.permute.xlu0 %1256
        %1259 = vset.pattern.permute.xlu0 1
        %1260 = vperm.xlu0 %1259, %v1061
        %v1261 = vpop.permute.xlu0 %1260
        %1263 = vset.pattern.permute.xlu0 1
        %1264 = vperm.xlu0 %1263, %v1062
        %v1265 = vpop.permute.xlu0 %1264
        %1267 = vset.pattern.permute.xlu0 1
        %1268 = vperm.xlu0 %1267, %v1063
        %v1269 = vpop.permute.xlu0 %1268
        %1271 = vset.pattern.permute.xlu0 1
        %1272 = vperm.xlu0 %1271, %v1064
        %v1273 = vpop.permute.xlu0 %1272
        %1275 = vset.pattern.permute.xlu0 1
        %1276 = vperm.xlu0 %1275, %v1065
        %v1277 = vpop.permute.xlu0 %1276
        %1279 = vset.pattern.permute.xlu0 1
        %1280 = vperm.xlu0 %1279, %v1066
        %v1281 = vpop.permute.xlu0 %1280
        %1283 = vset.pattern.permute.xlu0 1
        %1284 = vperm.xlu0 %1283, %v1067
        %v1285 = vpop.permute.xlu0 %1284
        %v1287 = vmul.f32 %v1051, %v1225
        %v1288 = vmul.f32 %v1036, %v1229
        %v1289 = vmul.f32 %v1037, %v1233
        %v1290 = vmul.f32 %v1038, %v1237
        %v1291 = vmul.f32 %v1039, %v1241
        %v1292 = vmul.f32 %v1040, %v1245
        %v1293 = vmul.f32 %v1041, %v1249
        %v1294 = vmul.f32 %v1042, %v1253
        %v1295 = vmul.f32 %v1043, %v1257
        %v1296 = vmul.f32 %v1044, %v1261
        %v1297 = vmul.f32 %v1045, %v1265
        %v1298 = vmul.f32 %v1046, %v1269
        %v1299 = vmul.f32 %v1047, %v1273
        %v1300 = vmul.f32 %v1048, %v1277
        %v1301 = vmul.f32 %v1049, %v1281
        %v1302 = vmul.f32 %v1050, %v1285
        %v1303 = vpack.c.bf16 %v1288, %v1287
        %v1304 = vpack.c.bf16 %v1290, %v1289
        %v1305 = vpack.c.bf16 %v1292, %v1291
        %v1306 = vpack.c.bf16 %v1294, %v1293
        %v1307 = vpack.c.bf16 %v1296, %v1295
        %v1308 = vpack.c.bf16 %v1298, %v1297
        %v1309 = vpack.c.bf16 %v1300, %v1299
        %v1310 = vpack.c.bf16 %v1302, %v1301
        %s1311 = scalar_lea.vmem [#allocation2], 64
        %v1312 = vld [vmem:[%s1311] sm:$0xf]
        %v1313 = vld [vmem:[%s1311 + $0x4] sm:$0xf]
        %v1314 = vld [vmem:[%s1311 + $0x8] sm:$0xf]
        %v1315 = vld [vmem:[%s1311 + $0xc] sm:$0xf]
        %v1316 = vld [vmem:[%s1311 + $0x10] sm:$0xf]
        %v1317 = vld [vmem:[%s1311 + $0x14] sm:$0xf]
        %v1318 = vld [vmem:[%s1311 + $0x18] sm:$0xf]
        %v1319 = vld [vmem:[%s1311 + $0x1c] sm:$0xf]
        %v1320 = vld [vmem:[%s1311 + $0x20] sm:$0xf]
        %v1321 = vld [vmem:[%s1311 + $0x24] sm:$0xf]
        %v1322 = vld [vmem:[%s1311 + $0x28] sm:$0xf]
        %v1323 = vld [vmem:[%s1311 + $0x2c] sm:$0xf]
        %v1324 = vld [vmem:[%s1311 + $0x30] sm:$0xf]
        %v1325 = vld [vmem:[%s1311 + $0x34] sm:$0xf]
        %v1326 = vld [vmem:[%s1311 + $0x38] sm:$0xf]
        %v1327 = vld [vmem:[%s1311 + $0x3c] sm:$0xf]
        %v1344 = vunpack.c.l.b16 %v1312
        %v1345 = vunpack.c.l.b16 %v1313
        %v1346 = vunpack.c.l.b16 %v1314
        %v1347 = vunpack.c.l.b16 %v1315
        %v1348 = vunpack.c.l.b16 %v1316
        %v1349 = vunpack.c.l.b16 %v1317
        %v1350 = vunpack.c.l.b16 %v1318
        %v1351 = vunpack.c.l.b16 %v1319
        %v1352 = vunpack.c.l.b16 %v1320
        %v1353 = vunpack.c.l.b16 %v1321
        %v1354 = vunpack.c.l.b16 %v1322
        %v1355 = vunpack.c.l.b16 %v1323
        %v1356 = vunpack.c.l.b16 %v1324
        %v1357 = vunpack.c.l.b16 %v1325
        %v1358 = vunpack.c.l.b16 %v1326
        %v1359 = vunpack.c.l.b16 %v1327
        %v1360 = vpack.c.b16 %v1345, %v1344
        %v1361 = vpack.c.b16 %v1347, %v1346
        %v1362 = vpack.c.b16 %v1349, %v1348
        %v1363 = vpack.c.b16 %v1351, %v1350
        %v1364 = vpack.c.b16 %v1353, %v1352
        %v1365 = vpack.c.b16 %v1355, %v1354
        %v1366 = vpack.c.b16 %v1357, %v1356
        %v1367 = vpack.c.b16 %v1359, %v1358
        %1376 = vmatprep.subr.bf16.mxu0 0
        %1377 = vmatpush1.bf16.msra.mxu0 %v1360
        %1378 = vmatprep.subr.bf16.mxu0 0
        %1379 = vmatpush1.bf16.msra.mxu0 %v1361
        %1380 = vmatprep.subr.bf16.mxu0 0
        %1381 = vmatpush1.bf16.msra.mxu0 %v1362
        %1382 = vmatprep.subr.bf16.mxu0 0
        %1383 = vmatpush1.bf16.msra.mxu0 %v1363
        %1384 = vmatprep.subr.bf16.mxu0 0
        %1385 = vmatpush1.bf16.msra.mxu0 %v1364
        %1386 = vmatprep.subr.bf16.mxu0 0
        %1387 = vmatpush1.bf16.msra.mxu0 %v1365
        %1388 = vmatprep.subr.bf16.mxu0 0
        %1389 = vmatpush1.bf16.msra.mxu0 %v1366
        %1390 = vmatprep.subr.bf16.mxu0 0
        %1391 = vmatpush1.bf16.msra.mxu0 %v1367
        %1392 = vmatprep.subr.bf16.mxu0 0
        %1393 = vmatpush1.bf16.msra.mxu0 0
        %1394 = vmatprep.subr.bf16.mxu0 0
        %1395 = vmatpush1.bf16.msra.mxu0 0
        %1396 = vmatprep.subr.bf16.mxu0 0
        %1397 = vmatpush1.bf16.msra.mxu0 0
        %1398 = vmatprep.subr.bf16.mxu0 0
        %1399 = vmatpush1.bf16.msra.mxu0 0
        %1400 = vmatprep.subr.bf16.mxu0 0
        %1401 = vmatpush1.bf16.msra.mxu0 0
        %1402 = vmatprep.subr.bf16.mxu0 0
        %1403 = vmatpush1.bf16.msra.mxu0 0
        %1404 = vmatprep.subr.bf16.mxu0 0
        %1405 = vmatpush1.bf16.msra.mxu0 0
        %1406 = vmatprep.subr.bf16.mxu0 0
        %1407 = vmatpush1.bf16.msra.mxu0 0
        %1408 = vmatprep.mubr.bf16.mxu0 0
        %1409 = vmatmul.mubr.bf16.gmra.mrb[0].mxu0 %v1303
        %v1410 = vpop.f32.mrb[0].mxu0
        %v1411 = vadd.f32 0.0, %v1410
        %v1412 = vpop.f32.mrb[0].mxu0
        %v1413 = vpop.f32.mrb[0].mxu0
        %v1414 = vadd.f32 0.0, %v1413
        %v1415 = vpop.f32.mrb[0].mxu0
        %1416 = vmatprep.mubr.bf16.mxu0 0
        %1417 = vmatmul.mubr.bf16.gmra.mrb[0].mxu0 %v1304
        %v1418 = vpop.f32.mrb[0].mxu0
        %v1419 = vadd.f32 0.0, %v1418
        %v1420 = vpop.f32.mrb[0].mxu0
        %v1421 = vpop.f32.mrb[0].mxu0
        %v1422 = vadd.f32 0.0, %v1421
        %v1423 = vpop.f32.mrb[0].mxu0
        %1424 = vmatprep.mubr.bf16.mxu0 0
        %1425 = vmatmul.mubr.bf16.gmra.mrb[0].mxu0 %v1305
        %v1426 = vpop.f32.mrb[0].mxu0
        %v1427 = vadd.f32 0.0, %v1426
        %v1428 = vpop.f32.mrb[0].mxu0
        %v1429 = vpop.f32.mrb[0].mxu0
        %v1430 = vadd.f32 0.0, %v1429
        %v1431 = vpop.f32.mrb[0].mxu0
        %1432 = vmatprep.mubr.bf16.mxu0 0
        %1433 = vmatmul.mubr.bf16.gmra.mrb[0].mxu0 %v1306
        %v1434 = vpop.f32.mrb[0].mxu0
        %v1435 = vadd.f32 0.0, %v1434
        %v1436 = vpop.f32.mrb[0].mxu0
        %v1437 = vpop.f32.mrb[0].mxu0
        %v1438 = vadd.f32 0.0, %v1437
        %v1439 = vpop.f32.mrb[0].mxu0
        %1440 = vmatprep.mubr.bf16.mxu0 0
        %1441 = vmatmul.mubr.bf16.gmra.mrb[0].mxu0 %v1307
        %v1442 = vpop.f32.mrb[0].mxu0
        %v1443 = vadd.f32 0.0, %v1442
        %v1444 = vpop.f32.mrb[0].mxu0
        %v1445 = vpop.f32.mrb[0].mxu0
        %v1446 = vadd.f32 0.0, %v1445
        %v1447 = vpop.f32.mrb[0].mxu0
        %1448 = vmatprep.mubr.bf16.mxu0 0
        %1449 = vmatmul.mubr.bf16.gmra.mrb[0].mxu0 %v1308
        %v1450 = vpop.f32.mrb[0].mxu0
        %v1451 = vadd.f32 0.0, %v1450
        %v1452 = vpop.f32.mrb[0].mxu0
        %v1453 = vpop.f32.mrb[0].mxu0
        %v1454 = vadd.f32 0.0, %v1453
        %v1455 = vpop.f32.mrb[0].mxu0
        %1456 = vmatprep.mubr.bf16.mxu0 0
        %1457 = vmatmul.mubr.bf16.gmra.mrb[0].mxu0 %v1309
        %v1458 = vpop.f32.mrb[0].mxu0
        %v1459 = vadd.f32 0.0, %v1458
        %v1460 = vpop.f32.mrb[0].mxu0
        %v1461 = vpop.f32.mrb[0].mxu0
        %v1462 = vadd.f32 0.0, %v1461
        %v1463 = vpop.f32.mrb[0].mxu0
        %1464 = vmatprep.mubr.bf16.mxu0 0
        %1465 = vmatmul.mubr.bf16.gmra.mrb[0].mxu0 %v1310
        %v1466 = vpop.f32.mrb[0].mxu0
        %v1467 = vadd.f32 0.0, %v1466
        %v1468 = vpop.f32.mrb[0].mxu0
        %v1469 = vpop.f32.mrb[0].mxu0
        %v1470 = vadd.f32 0.0, %v1469
        %v1471 = vpop.f32.mrb[0].mxu0
        %1472 = vdwg.mxu0
        %v1489 = vunpack.c.l.b16 %v1207
        %v1490 = vunpack.c.l.b16 %v1208
        %v1491 = vunpack.c.l.b16 %v1209
        %v1492 = vunpack.c.l.b16 %v1210
        %v1493 = vunpack.c.l.b16 %v1211
        %v1494 = vunpack.c.l.b16 %v1212
        %v1495 = vunpack.c.l.b16 %v1213
        %v1496 = vunpack.c.l.b16 %v1214
        %v1497 = vunpack.c.l.b16 %v1215
        %v1498 = vunpack.c.l.b16 %v1216
        %v1499 = vunpack.c.l.b16 %v1217
        %v1500 = vunpack.c.l.b16 %v1218
        %v1501 = vunpack.c.l.b16 %v1219
        %v1502 = vunpack.c.l.b16 %v1220
        %v1503 = vunpack.c.l.b16 %v1221
        %v1504 = vunpack.c.l.b16 %v1222
        %v1505 = vpack.c.b16 %v1490, %v1489
        %v1506 = vpack.c.b16 %v1492, %v1491
        %v1507 = vpack.c.b16 %v1494, %v1493
        %v1508 = vpack.c.b16 %v1496, %v1495
        %v1509 = vpack.c.b16 %v1498, %v1497
        %v1510 = vpack.c.b16 %v1500, %v1499
        %v1511 = vpack.c.b16 %v1502, %v1501
        %v1512 = vpack.c.b16 %v1504, %v1503
        %1521 = vmatprep.subr.bf16.mxu0 0
        %1522 = vmatpush1.bf16.msra.mxu0 %v1505
        %1523 = vmatprep.subr.bf16.mxu0 0
        %1524 = vmatpush1.bf16.msra.mxu0 %v1506
        %1525 = vmatprep.subr.bf16.mxu0 0
        %1526 = vmatpush1.bf16.msra.mxu0 %v1507
        %1527 = vmatprep.subr.bf16.mxu0 0
        %1528 = vmatpush1.bf16.msra.mxu0 %v1508
        %1529 = vmatprep.subr.bf16.mxu0 0
        %1530 = vmatpush1.bf16.msra.mxu0 %v1509
        %1531 = vmatprep.subr.bf16.mxu0 0
        %1532 = vmatpush1.bf16.msra.mxu0 %v1510
        %1533 = vmatprep.subr.bf16.mxu0 0
        %1534 = vmatpush1.bf16.msra.mxu0 %v1511
        %1535 = vmatprep.subr.bf16.mxu0 0
        %1536 = vmatpush1.bf16.msra.mxu0 %v1512
        %1537 = vmatprep.subr.bf16.mxu0 0
        %1538 = vmatpush1.bf16.msra.mxu0 0
        %1539 = vmatprep.subr.bf16.mxu0 0
        %1540 = vmatpush1.bf16.msra.mxu0 0
        %1541 = vmatprep.subr.bf16.mxu0 0
        %1542 = vmatpush1.bf16.msra.mxu0 0
        %1543 = vmatprep.subr.bf16.mxu0 0
        %1544 = vmatpush1.bf16.msra.mxu0 0
        %1545 = vmatprep.subr.bf16.mxu0 0
        %1546 = vmatpush1.bf16.msra.mxu0 0
        %1547 = vmatprep.subr.bf16.mxu0 0
        %1548 = vmatpush1.bf16.msra.mxu0 0
        %1549 = vmatprep.subr.bf16.mxu0 0
        %1550 = vmatpush1.bf16.msra.mxu0 0
        %1551 = vmatprep.subr.bf16.mxu0 0
        %1552 = vmatpush1.bf16.msra.mxu0 0
        %1553 = vmatprep.mubr.bf16.mxu0 0
        %1554 = vmatmul.mubr.bf16.gmra.mrb[0].mxu0 %v1199
        %v1555 = vpop.f32.mrb[0].mxu0
        %v1556 = vadd.f32 %v1411, %v1555
        %v1557 = vpop.f32.mrb[0].mxu0
        %v1558 = vpop.f32.mrb[0].mxu0
        %v1559 = vadd.f32 %v1414, %v1558
        %v1560 = vpop.f32.mrb[0].mxu0
        %1561 = vmatprep.mubr.bf16.mxu0 0
        %1562 = vmatmul.mubr.bf16.gmra.mrb[0].mxu0 %v1200
        %v1563 = vpop.f32.mrb[0].mxu0
        %v1564 = vadd.f32 %v1419, %v1563
        %v1565 = vpop.f32.mrb[0].mxu0
        %v1566 = vpop.f32.mrb[0].mxu0
        %v1567 = vadd.f32 %v1422, %v1566
        %v1568 = vpop.f32.mrb[0].mxu0
        %1569 = vmatprep.mubr.bf16.mxu0 0
        %1570 = vmatmul.mubr.bf16.gmra.mrb[0].mxu0 %v1201
        %v1571 = vpop.f32.mrb[0].mxu0
        %v1572 = vadd.f32 %v1427, %v1571
        %v1573 = vpop.f32.mrb[0].mxu0
        %v1574 = vpop.f32.mrb[0].mxu0
        %v1575 = vadd.f32 %v1430, %v1574
        %v1576 = vpop.f32.mrb[0].mxu0
        %1577 = vmatprep.mubr.bf16.mxu0 0
        %1578 = vmatmul.mubr.bf16.gmra.mrb[0].mxu0 %v1202
        %v1579 = vpop.f32.mrb[0].mxu0
        %v1580 = vadd.f32 %v1435, %v1579
        %v1581 = vpop.f32.mrb[0].mxu0
        %v1582 = vpop.f32.mrb[0].mxu0
        %v1583 = vadd.f32 %v1438, %v1582
        %v1584 = vpop.f32.mrb[0].mxu0
        %1585 = vmatprep.mubr.bf16.mxu0 0
        %1586 = vmatmul.mubr.bf16.gmra.mrb[0].mxu0 %v1203
        %v1587 = vpop.f32.mrb[0].mxu0
        %v1588 = vadd.f32 %v1443, %v1587
        %v1589 = vpop.f32.mrb[0].mxu0
        %v1590 = vpop.f32.mrb[0].mxu0
        %v1591 = vadd.f32 %v1446, %v1590
        %v1592 = vpop.f32.mrb[0].mxu0
        %1593 = vmatprep.mubr.bf16.mxu0 0
        %1594 = vmatmul.mubr.bf16.gmra.mrb[0].mxu0 %v1204
        %v1595 = vpop.f32.mrb[0].mxu0
        %v1596 = vadd.f32 %v1451, %v1595
        %v1597 = vpop.f32.mrb[0].mxu0
        %v1598 = vpop.f32.mrb[0].mxu0
        %v1599 = vadd.f32 %v1454, %v1598
        %v1600 = vpop.f32.mrb[0].mxu0
        %1601 = vmatprep.mubr.bf16.mxu0 0
        %1602 = vmatmul.mubr.bf16.gmra.mrb[0].mxu0 %v1205
        %v1603 = vpop.f32.mrb[0].mxu0
        %v1604 = vadd.f32 %v1459, %v1603
        %v1605 = vpop.f32.mrb[0].mxu0
        %v1606 = vpop.f32.mrb[0].mxu0
        %v1607 = vadd.f32 %v1462, %v1606
        %v1608 = vpop.f32.mrb[0].mxu0
        %1609 = vmatprep.mubr.bf16.mxu0 0
        %1610 = vmatmul.mubr.bf16.gmra.mrb[0].mxu0 %v1206
        %v1611 = vpop.f32.mrb[0].mxu0
        %v1612 = vadd.f32 %v1467, %v1611
        %v1613 = vpop.f32.mrb[0].mxu0
        %v1614 = vpop.f32.mrb[0].mxu0
        %v1615 = vadd.f32 %v1470, %v1614
        %v1616 = vpop.f32.mrb[0].mxu0
        %1617 = vdwg.mxu0
        %v1618 = vrot.slane %v1036, 1
        %v1619 = vrot.slane %v1037, 1
        %v1620 = vrot.slane %v1038, 1
        %v1621 = vrot.slane %v1039, 1
        %v1622 = vrot.slane %v1040, 1
        %v1623 = vrot.slane %v1041, 1
        %v1624 = vrot.slane %v1042, 1
        %v1625 = vrot.slane %v1043, 1
        %v1626 = vrot.slane %v1044, 1
        %v1627 = vrot.slane %v1045, 1
        %v1628 = vrot.slane %v1046, 1
        %v1629 = vrot.slane %v1047, 1
        %v1630 = vrot.slane %v1048, 1
        %v1631 = vrot.slane %v1049, 1
        %v1632 = vrot.slane %v1050, 1
        %v1633 = vrot.slane %v1051, 1
        %vm1634 = vcmp.lt.s32.totalorder %v1085, 7
        %v1635 = vsel %vm1634, %v1632, %v1633
        %v1636 = vsel %vm1634, %v1631, %v1632
        %v1637 = vsel %vm1634, %v1630, %v1631
        %v1638 = vsel %vm1634, %v1629, %v1630
        %v1639 = vsel %vm1634, %v1628, %v1629
        %v1640 = vsel %vm1634, %v1627, %v1628
        %v1641 = vsel %vm1634, %v1626, %v1627
        %v1642 = vsel %vm1634, %v1625, %v1626
        %v1643 = vsel %vm1634, %v1624, %v1625
        %v1644 = vsel %vm1634, %v1623, %v1624
        %v1645 = vsel %vm1634, %v1622, %v1623
        %v1646 = vsel %vm1634, %v1621, %v1622
        %v1647 = vsel %vm1634, %v1620, %v1621
        %v1648 = vsel %vm1634, %v1619, %v1620
        %v1649 = vsel %vm1634, %v1618, %v1619
        %v1650 = vsel %vm1634, %v1633, %v1618
        %1651 = vset.pattern.permute.xlu0 2
        %1652 = vperm.xlu0 %1651, %v1052
        %v1653 = vpop.permute.xlu0 %1652
        %1655 = vset.pattern.permute.xlu0 2
        %1656 = vperm.xlu0 %1655, %v1053
        %v1657 = vpop.permute.xlu0 %1656
        %1659 = vset.pattern.permute.xlu0 2
        %1660 = vperm.xlu0 %1659, %v1054
        %v1661 = vpop.permute.xlu0 %1660
        %1663 = vset.pattern.permute.xlu0 2
        %1664 = vperm.xlu0 %1663, %v1055
        %v1665 = vpop.permute.xlu0 %1664
        %1667 = vset.pattern.permute.xlu0 2
        %1668 = vperm.xlu0 %1667, %v1056
        %v1669 = vpop.permute.xlu0 %1668
        %1671 = vset.pattern.permute.xlu0 2
        %1672 = vperm.xlu0 %1671, %v1057
        %v1673 = vpop.permute.xlu0 %1672
        %1675 = vset.pattern.permute.xlu0 2
        %1676 = vperm.xlu0 %1675, %v1058
        %v1677 = vpop.permute.xlu0 %1676
        %1679 = vset.pattern.permute.xlu0 2
        %1680 = vperm.xlu0 %1679, %v1059
        %v1681 = vpop.permute.xlu0 %1680
        %1683 = vset.pattern.permute.xlu0 2
        %1684 = vperm.xlu0 %1683, %v1060
        %v1685 = vpop.permute.xlu0 %1684
        %1687 = vset.pattern.permute.xlu0 2
        %1688 = vperm.xlu0 %1687, %v1061
        %v1689 = vpop.permute.xlu0 %1688
        %1691 = vset.pattern.permute.xlu0 2
        %1692 = vperm.xlu0 %1691, %v1062
        %v1693 = vpop.permute.xlu0 %1692
        %1695 = vset.pattern.permute.xlu0 2
        %1696 = vperm.xlu0 %1695, %v1063
        %v1697 = vpop.permute.xlu0 %1696
        %1699 = vset.pattern.permute.xlu0 2
        %1700 = vperm.xlu0 %1699, %v1064
        %v1701 = vpop.permute.xlu0 %1700
        %1703 = vset.pattern.permute.xlu0 2
        %1704 = vperm.xlu0 %1703, %v1065
        %v1705 = vpop.permute.xlu0 %1704
        %1707 = vset.pattern.permute.xlu0 2
        %1708 = vperm.xlu0 %1707, %v1066
        %v1709 = vpop.permute.xlu0 %1708
        %1711 = vset.pattern.permute.xlu0 2
        %1712 = vperm.xlu0 %1711, %v1067
        %v1713 = vpop.permute.xlu0 %1712
        %v1715 = vmul.f32 %v1650, %v1653
        %v1716 = vmul.f32 %v1649, %v1657
        %v1717 = vmul.f32 %v1648, %v1661
        %v1718 = vmul.f32 %v1647, %v1665
        %v1719 = vmul.f32 %v1646, %v1669
        %v1720 = vmul.f32 %v1645, %v1673
        %v1721 = vmul.f32 %v1644, %v1677
        %v1722 = vmul.f32 %v1643, %v1681
        %v1723 = vmul.f32 %v1642, %v1685
        %v1724 = vmul.f32 %v1641, %v1689
        %v1725 = vmul.f32 %v1640, %v1693
        %v1726 = vmul.f32 %v1639, %v1697
        %v1727 = vmul.f32 %v1638, %v1701
        %v1728 = vmul.f32 %v1637, %v1705
        %v1729 = vmul.f32 %v1636, %v1709
        %v1730 = vmul.f32 %v1635, %v1713
        %v1731 = vpack.c.bf16 %v1716, %v1715
        %v1732 = vpack.c.bf16 %v1718, %v1717
        %v1733 = vpack.c.bf16 %v1720, %v1719
        %v1734 = vpack.c.bf16 %v1722, %v1721
        %v1735 = vpack.c.bf16 %v1724, %v1723
        %v1736 = vpack.c.bf16 %v1726, %v1725
        %v1737 = vpack.c.bf16 %v1728, %v1727
        %v1738 = vpack.c.bf16 %v1730, %v1729
        %s1739 = scalar_lea.vmem [#allocation2], 128
        %v1740 = vld [vmem:[%s1739] sm:$0xf]
        %v1741 = vld [vmem:[%s1739 + $0x4] sm:$0xf]
        %v1742 = vld [vmem:[%s1739 + $0x8] sm:$0xf]
        %v1743 = vld [vmem:[%s1739 + $0xc] sm:$0xf]
        %v1744 = vld [vmem:[%s1739 + $0x10] sm:$0xf]
        %v1745 = vld [vmem:[%s1739 + $0x14] sm:$0xf]
        %v1746 = vld [vmem:[%s1739 + $0x18] sm:$0xf]
        %v1747 = vld [vmem:[%s1739 + $0x1c] sm:$0xf]
        %v1748 = vld [vmem:[%s1739 + $0x20] sm:$0xf]
        %v1749 = vld [vmem:[%s1739 + $0x24] sm:$0xf]
        %v1750 = vld [vmem:[%s1739 + $0x28] sm:$0xf]
        %v1751 = vld [vmem:[%s1739 + $0x2c] sm:$0xf]
        %v1752 = vld [vmem:[%s1739 + $0x30] sm:$0xf]
        %v1753 = vld [vmem:[%s1739 + $0x34] sm:$0xf]
        %v1754 = vld [vmem:[%s1739 + $0x38] sm:$0xf]
        %v1755 = vld [vmem:[%s1739 + $0x3c] sm:$0xf]
        %v1772 = vunpack.c.l.b16 %v1740
        %v1773 = vunpack.c.l.b16 %v1741
        %v1774 = vunpack.c.l.b16 %v1742
        %v1775 = vunpack.c.l.b16 %v1743
        %v1776 = vunpack.c.l.b16 %v1744
        %v1777 = vunpack.c.l.b16 %v1745
        %v1778 = vunpack.c.l.b16 %v1746
        %v1779 = vunpack.c.l.b16 %v1747
        %v1780 = vunpack.c.l.b16 %v1748
        %v1781 = vunpack.c.l.b16 %v1749
        %v1782 = vunpack.c.l.b16 %v1750
        %v1783 = vunpack.c.l.b16 %v1751
        %v1784 = vunpack.c.l.b16 %v1752
        %v1785 = vunpack.c.l.b16 %v1753
        %v1786 = vunpack.c.l.b16 %v1754
        %v1787 = vunpack.c.l.b16 %v1755
        %v1788 = vpack.c.b16 %v1773, %v1772
        %v1789 = vpack.c.b16 %v1775, %v1774
        %v1790 = vpack.c.b16 %v1777, %v1776
        %v1791 = vpack.c.b16 %v1779, %v1778
        %v1792 = vpack.c.b16 %v1781, %v1780
        %v1793 = vpack.c.b16 %v1783, %v1782
        %v1794 = vpack.c.b16 %v1785, %v1784
        %v1795 = vpack.c.b16 %v1787, %v1786
        %1804 = vmatprep.subr.bf16.mxu0 0
        %1805 = vmatpush1.bf16.msra.mxu0 %v1788
        %1806 = vmatprep.subr.bf16.mxu0 0
        %1807 = vmatpush1.bf16.msra.mxu0 %v1789
        %1808 = vmatprep.subr.bf16.mxu0 0
        %1809 = vmatpush1.bf16.msra.mxu0 %v1790
        %1810 = vmatprep.subr.bf16.mxu0 0
        %1811 = vmatpush1.bf16.msra.mxu0 %v1791
        %1812 = vmatprep.subr.bf16.mxu0 0
        %1813 = vmatpush1.bf16.msra.mxu0 %v1792
        %1814 = vmatprep.subr.bf16.mxu0 0
        %1815 = vmatpush1.bf16.msra.mxu0 %v1793
        %1816 = vmatprep.subr.bf16.mxu0 0
        %1817 = vmatpush1.bf16.msra.mxu0 %v1794
        %1818 = vmatprep.subr.bf16.mxu0 0
        %1819 = vmatpush1.bf16.msra.mxu0 %v1795
        %1820 = vmatprep.subr.bf16.mxu0 0
        %1821 = vmatpush1.bf16.msra.mxu0 0
        %1822 = vmatprep.subr.bf16.mxu0 0
        %1823 = vmatpush1.bf16.msra.mxu0 0
        %1824 = vmatprep.subr.bf16.mxu0 0
        %1825 = vmatpush1.bf16.msra.mxu0 0
        %1826 = vmatprep.subr.bf16.mxu0 0
        %1827 = vmatpush1.bf16.msra.mxu0 0
        %1828 = vmatprep.subr.bf16.mxu0 0
        %1829 = vmatpush1.bf16.msra.mxu0 0
        %1830 = vmatprep.subr.bf16.mxu0 0
        %1831 = vmatpush1.bf16.msra.mxu0 0
        %1832 = vmatprep.subr.bf16.mxu0 0
        %1833 = vmatpush1.bf16.msra.mxu0 0
        %1834 = vmatprep.subr.bf16.mxu0 0
        %1835 = vmatpush1.bf16.msra.mxu0 0
        %1836 = vmatprep.mubr.bf16.mxu0 0
        %1837 = vmatmul.mubr.bf16.gmra.mrb[0].mxu0 %v1731
        %v1838 = vpop.f32.mrb[0].mxu0
        %v1839 = vadd.f32 0.0, %v1838
        %v1840 = vpop.f32.mrb[0].mxu0
        %v1841 = vpop.f32.mrb[0].mxu0
        %v1842 = vadd.f32 0.0, %v1841
        %v1843 = vpop.f32.mrb[0].mxu0
        %1844 = vmatprep.mubr.bf16.mxu0 0
        %1845 = vmatmul.mubr.bf16.gmra.mrb[0].mxu0 %v1732
        %v1846 = vpop.f32.mrb[0].mxu0
        %v1847 = vadd.f32 0.0, %v1846
        %v1848 = vpop.f32.mrb[0].mxu0
        %v1849 = vpop.f32.mrb[0].mxu0
        %v1850 = vadd.f32 0.0, %v1849
        %v1851 = vpop.f32.mrb[0].mxu0
        %1852 = vmatprep.mubr.bf16.mxu0 0
        %1853 = vmatmul.mubr.bf16.gmra.mrb[0].mxu0 %v1733
        %v1854 = vpop.f32.mrb[0].mxu0
        %v1855 = vadd.f32 0.0, %v1854
        %v1856 = vpop.f32.mrb[0].mxu0
        %v1857 = vpop.f32.mrb[0].mxu0
        %v1858 = vadd.f32 0.0, %v1857
        %v1859 = vpop.f32.mrb[0].mxu0
        %1860 = vmatprep.mubr.bf16.mxu0 0
        %1861 = vmatmul.mubr.bf16.gmra.mrb[0].mxu0 %v1734
        %v1862 = vpop.f32.mrb[0].mxu0
        %v1863 = vadd.f32 0.0, %v1862
        %v1864 = vpop.f32.mrb[0].mxu0
        %v1865 = vpop.f32.mrb[0].mxu0
        %v1866 = vadd.f32 0.0, %v1865
        %v1867 = vpop.f32.mrb[0].mxu0
        %1868 = vmatprep.mubr.bf16.mxu0 0
        %1869 = vmatmul.mubr.bf16.gmra.mrb[0].mxu0 %v1735
        %v1870 = vpop.f32.mrb[0].mxu0
        %v1871 = vadd.f32 0.0, %v1870
        %v1872 = vpop.f32.mrb[0].mxu0
        %v1873 = vpop.f32.mrb[0].mxu0
        %v1874 = vadd.f32 0.0, %v1873
        %v1875 = vpop.f32.mrb[0].mxu0
        %1876 = vmatprep.mubr.bf16.mxu0 0
        %1877 = vmatmul.mubr.bf16.gmra.mrb[0].mxu0 %v1736
        %v1878 = vpop.f32.mrb[0].mxu0
        %v1879 = vadd.f32 0.0, %v1878
        %v1880 = vpop.f32.mrb[0].mxu0
        %v1881 = vpop.f32.mrb[0].mxu0
        %v1882 = vadd.f32 0.0, %v1881
        %v1883 = vpop.f32.mrb[0].mxu0
        %1884 = vmatprep.mubr.bf16.mxu0 0
        %1885 = vmatmul.mubr.bf16.gmra.mrb[0].mxu0 %v1737
        %v1886 = vpop.f32.mrb[0].mxu0
        %v1887 = vadd.f32 0.0, %v1886
        %v1888 = vpop.f32.mrb[0].mxu0
        %v1889 = vpop.f32.mrb[0].mxu0
        %v1890 = vadd.f32 0.0, %v1889
        %v1891 = vpop.f32.mrb[0].mxu0
        %1892 = vmatprep.mubr.bf16.mxu0 0
        %1893 = vmatmul.mubr.bf16.gmra.mrb[0].mxu0 %v1738
        %v1894 = vpop.f32.mrb[0].mxu0
        %v1895 = vadd.f32 0.0, %v1894
        %v1896 = vpop.f32.mrb[0].mxu0
        %v1897 = vpop.f32.mrb[0].mxu0
        %v1898 = vadd.f32 0.0, %v1897
        %v1899 = vpop.f32.mrb[0].mxu0
        %1900 = vdwg.mxu0
        %v1901 = vadd.f32 %v1556, %v1839
        %v1902 = vadd.f32 %v1559, %v1842
        %v1903 = vadd.f32 %v1564, %v1847
        %v1904 = vadd.f32 %v1567, %v1850
        %v1905 = vadd.f32 %v1572, %v1855
        %v1906 = vadd.f32 %v1575, %v1858
        %v1907 = vadd.f32 %v1580, %v1863
        %v1908 = vadd.f32 %v1583, %v1866
        %v1909 = vadd.f32 %v1588, %v1871
        %v1910 = vadd.f32 %v1591, %v1874
        %v1911 = vadd.f32 %v1596, %v1879
        %v1912 = vadd.f32 %v1599, %v1882
        %v1913 = vadd.f32 %v1604, %v1887
        %v1914 = vadd.f32 %v1607, %v1890
        %v1915 = vadd.f32 %v1612, %v1895
        %v1916 = vadd.f32 %v1615, %v1898
        %1917 = vset.pattern.permute.xlu0 3
        %1918 = vperm.xlu0 %1917, %v1052
        %v1919 = vpop.permute.xlu0 %1918
        %1921 = vset.pattern.permute.xlu0 3
        %1922 = vperm.xlu0 %1921, %v1053
        %v1923 = vpop.permute.xlu0 %1922
        %1925 = vset.pattern.permute.xlu0 3
        %1926 = vperm.xlu0 %1925, %v1054
        %v1927 = vpop.permute.xlu0 %1926
        %1929 = vset.pattern.permute.xlu0 3
        %1930 = vperm.xlu0 %1929, %v1055
        %v1931 = vpop.permute.xlu0 %1930
        %1933 = vset.pattern.permute.xlu0 3
        %1934 = vperm.xlu0 %1933, %v1056
        %v1935 = vpop.permute.xlu0 %1934
        %1937 = vset.pattern.permute.xlu0 3
        %1938 = vperm.xlu0 %1937, %v1057
        %v1939 = vpop.permute.xlu0 %1938
        %1941 = vset.pattern.permute.xlu0 3
        %1942 = vperm.xlu0 %1941, %v1058
        %v1943 = vpop.permute.xlu0 %1942
        %1945 = vset.pattern.permute.xlu0 3
        %1946 = vperm.xlu0 %1945, %v1059
        %v1947 = vpop.permute.xlu0 %1946
        %1949 = vset.pattern.permute.xlu0 3
        %1950 = vperm.xlu0 %1949, %v1060
        %v1951 = vpop.permute.xlu0 %1950
        %1953 = vset.pattern.permute.xlu0 3
        %1954 = vperm.xlu0 %1953, %v1061
        %v1955 = vpop.permute.xlu0 %1954
        %1957 = vset.pattern.permute.xlu0 3
        %1958 = vperm.xlu0 %1957, %v1062
        %v1959 = vpop.permute.xlu0 %1958
        %1961 = vset.pattern.permute.xlu0 3
        %1962 = vperm.xlu0 %1961, %v1063
        %v1963 = vpop.permute.xlu0 %1962
        %1965 = vset.pattern.permute.xlu0 3
        %1966 = vperm.xlu0 %1965, %v1064
        %v1967 = vpop.permute.xlu0 %1966
        %1969 = vset.pattern.permute.xlu0 3
        %1970 = vperm.xlu0 %1969, %v1065
        %v1971 = vpop.permute.xlu0 %1970
        %1973 = vset.pattern.permute.xlu0 3
        %1974 = vperm.xlu0 %1973, %v1066
        %v1975 = vpop.permute.xlu0 %1974
        %1977 = vset.pattern.permute.xlu0 3
        %1978 = vperm.xlu0 %1977, %v1067
        %v1979 = vpop.permute.xlu0 %1978
        %v1981 = vmul.f32 %v1102, %v1919
        %v1982 = vmul.f32 %v1101, %v1923
        %v1983 = vmul.f32 %v1100, %v1927
        %v1984 = vmul.f32 %v1099, %v1931
        %v1985 = vmul.f32 %v1098, %v1935
        %v1986 = vmul.f32 %v1097, %v1939
        %v1987 = vmul.f32 %v1096, %v1943
        %v1988 = vmul.f32 %v1095, %v1947
        %v1989 = vmul.f32 %v1094, %v1951
        %v1990 = vmul.f32 %v1093, %v1955
        %v1991 = vmul.f32 %v1092, %v1959
        %v1992 = vmul.f32 %v1091, %v1963
        %v1993 = vmul.f32 %v1090, %v1967
        %v1994 = vmul.f32 %v1089, %v1971
        %v1995 = vmul.f32 %v1088, %v1975
        %v1996 = vmul.f32 %v1087, %v1979
        %v1997 = vpack.c.bf16 %v1982, %v1981
        %v1998 = vpack.c.bf16 %v1984, %v1983
        %v1999 = vpack.c.bf16 %v1986, %v1985
        %v2000 = vpack.c.bf16 %v1988, %v1987
        %v2001 = vpack.c.bf16 %v1990, %v1989
        %v2002 = vpack.c.bf16 %v1992, %v1991
        %v2003 = vpack.c.bf16 %v1994, %v1993
        %v2004 = vpack.c.bf16 %v1996, %v1995
        %s2005 = scalar_lea.vmem [#allocation2], 192
        %v2006 = vld [vmem:[%s2005] sm:$0xf]
        %v2007 = vld [vmem:[%s2005 + $0x4] sm:$0xf]
        %v2008 = vld [vmem:[%s2005 + $0x8] sm:$0xf]
        %v2009 = vld [vmem:[%s2005 + $0xc] sm:$0xf]
        %v2010 = vld [vmem:[%s2005 + $0x10] sm:$0xf]
        %v2011 = vld [vmem:[%s2005 + $0x14] sm:$0xf]
        %v2012 = vld [vmem:[%s2005 + $0x18] sm:$0xf]
        %v2013 = vld [vmem:[%s2005 + $0x1c] sm:$0xf]
        %v2014 = vld [vmem:[%s2005 + $0x20] sm:$0xf]
        %v2015 = vld [vmem:[%s2005 + $0x24] sm:$0xf]
        %v2016 = vld [vmem:[%s2005 + $0x28] sm:$0xf]
        %v2017 = vld [vmem:[%s2005 + $0x2c] sm:$0xf]
        %v2018 = vld [vmem:[%s2005 + $0x30] sm:$0xf]
        %v2019 = vld [vmem:[%s2005 + $0x34] sm:$0xf]
        %v2020 = vld [vmem:[%s2005 + $0x38] sm:$0xf]
        %v2021 = vld [vmem:[%s2005 + $0x3c] sm:$0xf]
        %v2038 = vunpack.c.l.b16 %v2006
        %v2039 = vunpack.c.l.b16 %v2007
        %v2040 = vunpack.c.l.b16 %v2008
        %v2041 = vunpack.c.l.b16 %v2009
        %v2042 = vunpack.c.l.b16 %v2010
        %v2043 = vunpack.c.l.b16 %v2011
        %v2044 = vunpack.c.l.b16 %v2012
        %v2045 = vunpack.c.l.b16 %v2013
        %v2046 = vunpack.c.l.b16 %v2014
        %v2047 = vunpack.c.l.b16 %v2015
        %v2048 = vunpack.c.l.b16 %v2016
        %v2049 = vunpack.c.l.b16 %v2017
        %v2050 = vunpack.c.l.b16 %v2018
        %v2051 = vunpack.c.l.b16 %v2019
        %v2052 = vunpack.c.l.b16 %v2020
        %v2053 = vunpack.c.l.b16 %v2021
        %v2054 = vpack.c.b16 %v2039, %v2038
        %v2055 = vpack.c.b16 %v2041, %v2040
        %v2056 = vpack.c.b16 %v2043, %v2042
        %v2057 = vpack.c.b16 %v2045, %v2044
        %v2058 = vpack.c.b16 %v2047, %v2046
        %v2059 = vpack.c.b16 %v2049, %v2048
        %v2060 = vpack.c.b16 %v2051, %v2050
        %v2061 = vpack.c.b16 %v2053, %v2052
        %2070 = vmatprep.subr.bf16.mxu0 0
        %2071 = vmatpush1.bf16.msra.mxu0 %v2054
        %2072 = vmatprep.subr.bf16.mxu0 0
        %2073 = vmatpush1.bf16.msra.mxu0 %v2055
        %2074 = vmatprep.subr.bf16.mxu0 0
        %2075 = vmatpush1.bf16.msra.mxu0 %v2056
        %2076 = vmatprep.subr.bf16.mxu0 0
        %2077 = vmatpush1.bf16.msra.mxu0 %v2057
        %2078 = vmatprep.subr.bf16.mxu0 0
        %2079 = vmatpush1.bf16.msra.mxu0 %v2058
        %2080 = vmatprep.subr.bf16.mxu0 0
        %2081 = vmatpush1.bf16.msra.mxu0 %v2059
        %2082 = vmatprep.subr.bf16.mxu0 0
        %2083 = vmatpush1.bf16.msra.mxu0 %v2060
        %2084 = vmatprep.subr.bf16.mxu0 0
        %2085 = vmatpush1.bf16.msra.mxu0 %v2061
        %2086 = vmatprep.subr.bf16.mxu0 0
        %2087 = vmatpush1.bf16.msra.mxu0 0
        %2088 = vmatprep.subr.bf16.mxu0 0
        %2089 = vmatpush1.bf16.msra.mxu0 0
        %2090 = vmatprep.subr.bf16.mxu0 0
        %2091 = vmatpush1.bf16.msra.mxu0 0
        %2092 = vmatprep.subr.bf16.mxu0 0
        %2093 = vmatpush1.bf16.msra.mxu0 0
        %2094 = vmatprep.subr.bf16.mxu0 0
        %2095 = vmatpush1.bf16.msra.mxu0 0
        %2096 = vmatprep.subr.bf16.mxu0 0
        %2097 = vmatpush1.bf16.msra.mxu0 0
        %2098 = vmatprep.subr.bf16.mxu0 0
        %2099 = vmatpush1.bf16.msra.mxu0 0
        %2100 = vmatprep.subr.bf16.mxu0 0
        %2101 = vmatpush1.bf16.msra.mxu0 0
        %2102 = vmatprep.mubr.bf16.mxu0 0
        %2103 = vmatmul.mubr.bf16.gmra.mrb[0].mxu0 %v1997
        %v2104 = vpop.f32.mrb[0].mxu0
        %v2105 = vadd.f32 0.0, %v2104
        %v2106 = vpop.f32.mrb[0].mxu0
        %v2107 = vpop.f32.mrb[0].mxu0
        %v2108 = vadd.f32 0.0, %v2107
        %v2109 = vpop.f32.mrb[0].mxu0
        %2110 = vmatprep.mubr.bf16.mxu0 0
        %2111 = vmatmul.mubr.bf16.gmra.mrb[0].mxu0 %v1998
        %v2112 = vpop.f32.mrb[0].mxu0
        %v2113 = vadd.f32 0.0, %v2112
        %v2114 = vpop.f32.mrb[0].mxu0
        %v2115 = vpop.f32.mrb[0].mxu0
        %v2116 = vadd.f32 0.0, %v2115
        %v2117 = vpop.f32.mrb[0].mxu0
        %2118 = vmatprep.mubr.bf16.mxu0 0
        %2119 = vmatmul.mubr.bf16.gmra.mrb[0].mxu0 %v1999
        %v2120 = vpop.f32.mrb[0].mxu0
        %v2121 = vadd.f32 0.0, %v2120
        %v2122 = vpop.f32.mrb[0].mxu0
        %v2123 = vpop.f32.mrb[0].mxu0
        %v2124 = vadd.f32 0.0, %v2123
        %v2125 = vpop.f32.mrb[0].mxu0
        %2126 = vmatprep.mubr.bf16.mxu0 0
        %2127 = vmatmul.mubr.bf16.gmra.mrb[0].mxu0 %v2000
        %v2128 = vpop.f32.mrb[0].mxu0
        %v2129 = vadd.f32 0.0, %v2128
        %v2130 = vpop.f32.mrb[0].mxu0
        %v2131 = vpop.f32.mrb[0].mxu0
        %v2132 = vadd.f32 0.0, %v2131
        %v2133 = vpop.f32.mrb[0].mxu0
        %2134 = vmatprep.mubr.bf16.mxu0 0
        %2135 = vmatmul.mubr.bf16.gmra.mrb[0].mxu0 %v2001
        %v2136 = vpop.f32.mrb[0].mxu0
        %v2137 = vadd.f32 0.0, %v2136
        %v2138 = vpop.f32.mrb[0].mxu0
        %v2139 = vpop.f32.mrb[0].mxu0
        %v2140 = vadd.f32 0.0, %v2139
        %v2141 = vpop.f32.mrb[0].mxu0
        %2142 = vmatprep.mubr.bf16.mxu0 0
        %2143 = vmatmul.mubr.bf16.gmra.mrb[0].mxu0 %v2002
        %v2144 = vpop.f32.mrb[0].mxu0
        %v2145 = vadd.f32 0.0, %v2144
        %v2146 = vpop.f32.mrb[0].mxu0
        %v2147 = vpop.f32.mrb[0].mxu0
        %v2148 = vadd.f32 0.0, %v2147
        %v2149 = vpop.f32.mrb[0].mxu0
        %2150 = vmatprep.mubr.bf16.mxu0 0
        %2151 = vmatmul.mubr.bf16.gmra.mrb[0].mxu0 %v2003
        %v2152 = vpop.f32.mrb[0].mxu0
        %v2153 = vadd.f32 0.0, %v2152
        %v2154 = vpop.f32.mrb[0].mxu0
        %v2155 = vpop.f32.mrb[0].mxu0
        %v2156 = vadd.f32 0.0, %v2155
        %v2157 = vpop.f32.mrb[0].mxu0
        %2158 = vmatprep.mubr.bf16.mxu0 0
        %2159 = vmatmul.mubr.bf16.gmra.mrb[0].mxu0 %v2004
        %v2160 = vpop.f32.mrb[0].mxu0
        %v2161 = vadd.f32 0.0, %v2160
        %v2162 = vpop.f32.mrb[0].mxu0
        %v2163 = vpop.f32.mrb[0].mxu0
        %v2164 = vadd.f32 0.0, %v2163
        %v2165 = vpop.f32.mrb[0].mxu0
        %2166 = vdwg.mxu0
        %v2167 = vadd.f32 %v1901, %v2105
        %v2168 = vadd.f32 %v1902, %v2108
        %v2169 = vadd.f32 %v1903, %v2113
        %v2170 = vadd.f32 %v1904, %v2116
        %v2171 = vadd.f32 %v1905, %v2121
        %v2172 = vadd.f32 %v1906, %v2124
        %v2173 = vadd.f32 %v1907, %v2129
        %v2174 = vadd.f32 %v1908, %v2132
        %v2175 = vadd.f32 %v1909, %v2137
        %v2176 = vadd.f32 %v1910, %v2140
        %v2177 = vadd.f32 %v1911, %v2145
        %v2178 = vadd.f32 %v1912, %v2148
        %v2179 = vadd.f32 %v1913, %v2153
        %v2180 = vadd.f32 %v1914, %v2156
        %v2181 = vadd.f32 %v1915, %v2161
        %v2182 = vadd.f32 %v1916, %v2164
        %v2183 = vpack.c.bf16 %v1037, %v1036
        %v2184 = vpack.c.bf16 %v1039, %v1038
        %v2185 = vpack.c.bf16 %v1041, %v1040
        %v2186 = vpack.c.bf16 %v1043, %v1042
        %v2187 = vpack.c.bf16 %v1045, %v1044
        %v2188 = vpack.c.bf16 %v1047, %v1046
        %v2189 = vpack.c.bf16 %v1049, %v1048
        %v2190 = vpack.c.bf16 %v1051, %v1050
        %s2191 = scalar_lea.vmem [#allocation2], 256
        %v2192 = vld [vmem:[%s2191] sm:$0xf]
        %v2193 = vld [vmem:[%s2191 + $0x4] sm:$0xf]
        %v2194 = vld [vmem:[%s2191 + $0x8] sm:$0xf]
        %v2195 = vld [vmem:[%s2191 + $0xc] sm:$0xf]
        %v2196 = vld [vmem:[%s2191 + $0x10] sm:$0xf]
        %v2197 = vld [vmem:[%s2191 + $0x14] sm:$0xf]
        %v2198 = vld [vmem:[%s2191 + $0x18] sm:$0xf]
        %v2199 = vld [vmem:[%s2191 + $0x1c] sm:$0xf]
        %v2200 = vld [vmem:[%s2191 + $0x20] sm:$0xf]
        %v2201 = vld [vmem:[%s2191 + $0x24] sm:$0xf]
        %v2202 = vld [vmem:[%s2191 + $0x28] sm:$0xf]
        %v2203 = vld [vmem:[%s2191 + $0x2c] sm:$0xf]
        %v2204 = vld [vmem:[%s2191 + $0x30] sm:$0xf]
        %v2205 = vld [vmem:[%s2191 + $0x34] sm:$0xf]
        %v2206 = vld [vmem:[%s2191 + $0x38] sm:$0xf]
        %v2207 = vld [vmem:[%s2191 + $0x3c] sm:$0xf]
        %v2224 = vunpack.c.l.b16 %v2192
        %v2225 = vunpack.c.l.b16 %v2193
        %v2226 = vunpack.c.l.b16 %v2194
        %v2227 = vunpack.c.l.b16 %v2195
        %v2228 = vunpack.c.l.b16 %v2196
        %v2229 = vunpack.c.l.b16 %v2197
        %v2230 = vunpack.c.l.b16 %v2198
        %v2231 = vunpack.c.l.b16 %v2199
        %v2232 = vunpack.c.l.b16 %v2200
        %v2233 = vunpack.c.l.b16 %v2201
        %v2234 = vunpack.c.l.b16 %v2202
        %v2235 = vunpack.c.l.b16 %v2203
        %v2236 = vunpack.c.l.b16 %v2204
        %v2237 = vunpack.c.l.b16 %v2205
        %v2238 = vunpack.c.l.b16 %v2206
        %v2239 = vunpack.c.l.b16 %v2207
        %v2240 = vpack.c.b16 %v2225, %v2224
        %v2241 = vpack.c.b16 %v2227, %v2226
        %v2242 = vpack.c.b16 %v2229, %v2228
        %v2243 = vpack.c.b16 %v2231, %v2230
        %v2244 = vpack.c.b16 %v2233, %v2232
        %v2245 = vpack.c.b16 %v2235, %v2234
        %v2246 = vpack.c.b16 %v2237, %v2236
        %v2247 = vpack.c.b16 %v2239, %v2238
        %2256 = vmatprep.subr.bf16.mxu0 0
        %2257 = vmatpush1.bf16.msra.mxu0 %v2240
        %2258 = vmatprep.subr.bf16.mxu0 0
        %2259 = vmatpush1.bf16.msra.mxu0 %v2241
        %2260 = vmatprep.subr.bf16.mxu0 0
        %2261 = vmatpush1.bf16.msra.mxu0 %v2242
        %2262 = vmatprep.subr.bf16.mxu0 0
        %2263 = vmatpush1.bf16.msra.mxu0 %v2243
        %2264 = vmatprep.subr.bf16.mxu0 0
        %2265 = vmatpush1.bf16.msra.mxu0 %v2244
        %2266 = vmatprep.subr.bf16.mxu0 0
        %2267 = vmatpush1.bf16.msra.mxu0 %v2245
        %2268 = vmatprep.subr.bf16.mxu0 0
        %2269 = vmatpush1.bf16.msra.mxu0 %v2246
        %2270 = vmatprep.subr.bf16.mxu0 0
        %2271 = vmatpush1.bf16.msra.mxu0 %v2247
        %2272 = vmatprep.subr.bf16.mxu0 0
        %2273 = vmatpush1.bf16.msra.mxu0 0
        %2274 = vmatprep.subr.bf16.mxu0 0
        %2275 = vmatpush1.bf16.msra.mxu0 0
        %2276 = vmatprep.subr.bf16.mxu0 0
        %2277 = vmatpush1.bf16.msra.mxu0 0
        %2278 = vmatprep.subr.bf16.mxu0 0
        %2279 = vmatpush1.bf16.msra.mxu0 0
        %2280 = vmatprep.subr.bf16.mxu0 0
        %2281 = vmatpush1.bf16.msra.mxu0 0
        %2282 = vmatprep.subr.bf16.mxu0 0
        %2283 = vmatpush1.bf16.msra.mxu0 0
        %2284 = vmatprep.subr.bf16.mxu0 0
        %2285 = vmatpush1.bf16.msra.mxu0 0
        %2286 = vmatprep.subr.bf16.mxu0 0
        %2287 = vmatpush1.bf16.msra.mxu0 0
        %2288 = vmatprep.mubr.bf16.mxu0 0
        %2289 = vmatmul.mubr.bf16.gmra.mrb[0].mxu0 %v2183
        %v2290 = vpop.f32.mrb[0].mxu0
        %v2291 = vadd.f32 0.0, %v2290
        %v2292 = vpop.f32.mrb[0].mxu0
        %v2293 = vpop.f32.mrb[0].mxu0
        %v2294 = vadd.f32 0.0, %v2293
        %v2295 = vpop.f32.mrb[0].mxu0
        %2296 = vmatprep.mubr.bf16.mxu0 0
        %2297 = vmatmul.mubr.bf16.gmra.mrb[0].mxu0 %v2184
        %v2298 = vpop.f32.mrb[0].mxu0
        %v2299 = vadd.f32 0.0, %v2298
        %v2300 = vpop.f32.mrb[0].mxu0
        %v2301 = vpop.f32.mrb[0].mxu0
        %v2302 = vadd.f32 0.0, %v2301
        %v2303 = vpop.f32.mrb[0].mxu0
        %2304 = vmatprep.mubr.bf16.mxu0 0
        %2305 = vmatmul.mubr.bf16.gmra.mrb[0].mxu0 %v2185
        %v2306 = vpop.f32.mrb[0].mxu0
        %v2307 = vadd.f32 0.0, %v2306
        %v2308 = vpop.f32.mrb[0].mxu0
        %v2309 = vpop.f32.mrb[0].mxu0
        %v2310 = vadd.f32 0.0, %v2309
        %v2311 = vpop.f32.mrb[0].mxu0
        %2312 = vmatprep.mubr.bf16.mxu0 0
        %2313 = vmatmul.mubr.bf16.gmra.mrb[0].mxu0 %v2186
        %v2314 = vpop.f32.mrb[0].mxu0
        %v2315 = vadd.f32 0.0, %v2314
        %v2316 = vpop.f32.mrb[0].mxu0
        %v2317 = vpop.f32.mrb[0].mxu0
        %v2318 = vadd.f32 0.0, %v2317
        %v2319 = vpop.f32.mrb[0].mxu0
        %2320 = vmatprep.mubr.bf16.mxu0 0
        %2321 = vmatmul.mubr.bf16.gmra.mrb[0].mxu0 %v2187
        %v2322 = vpop.f32.mrb[0].mxu0
        %v2323 = vadd.f32 0.0, %v2322
        %v2324 = vpop.f32.mrb[0].mxu0
        %v2325 = vpop.f32.mrb[0].mxu0
        %v2326 = vadd.f32 0.0, %v2325
        %v2327 = vpop.f32.mrb[0].mxu0
        %2328 = vmatprep.mubr.bf16.mxu0 0
        %2329 = vmatmul.mubr.bf16.gmra.mrb[0].mxu0 %v2188
        %v2330 = vpop.f32.mrb[0].mxu0
        %v2331 = vadd.f32 0.0, %v2330
        %v2332 = vpop.f32.mrb[0].mxu0
        %v2333 = vpop.f32.mrb[0].mxu0
        %v2334 = vadd.f32 0.0, %v2333
        %v2335 = vpop.f32.mrb[0].mxu0
        %2336 = vmatprep.mubr.bf16.mxu0 0
        %2337 = vmatmul.mubr.bf16.gmra.mrb[0].mxu0 %v2189
        %v2338 = vpop.f32.mrb[0].mxu0
        %v2339 = vadd.f32 0.0, %v2338
        %v2340 = vpop.f32.mrb[0].mxu0
        %v2341 = vpop.f32.mrb[0].mxu0
        %v2342 = vadd.f32 0.0, %v2341
        %v2343 = vpop.f32.mrb[0].mxu0
        %2344 = vmatprep.mubr.bf16.mxu0 0
        %2345 = vmatmul.mubr.bf16.gmra.mrb[0].mxu0 %v2190
        %v2346 = vpop.f32.mrb[0].mxu0
        %v2347 = vadd.f32 0.0, %v2346
        %v2348 = vpop.f32.mrb[0].mxu0
        %v2349 = vpop.f32.mrb[0].mxu0
        %v2350 = vadd.f32 0.0, %v2349
        %v2351 = vpop.f32.mrb[0].mxu0
        %2352 = vdwg.mxu0
        %v2353 = vadd.f32 %v2167, %v2291
        %v2354 = vadd.f32 %v2168, %v2294
        %v2355 = vadd.f32 %v2169, %v2299
        %v2356 = vadd.f32 %v2170, %v2302
        %v2357 = vadd.f32 %v2171, %v2307
        %v2358 = vadd.f32 %v2172, %v2310
        %v2359 = vadd.f32 %v2173, %v2315
        %v2360 = vadd.f32 %v2174, %v2318
        %v2361 = vadd.f32 %v2175, %v2323
        %v2362 = vadd.f32 %v2176, %v2326
        %v2363 = vadd.f32 %v2177, %v2331
        %v2364 = vadd.f32 %v2178, %v2334
        %v2365 = vadd.f32 %v2179, %v2339
        %v2366 = vadd.f32 %v2180, %v2342
        %v2367 = vadd.f32 %v2181, %v2347
        %v2368 = vadd.f32 %v2182, %v2350
        %2369 = vset.pattern.permute.xlu0 5
        %2370 = vperm.xlu0 %2369, %v1052
        %v2371 = vpop.permute.xlu0 %2370
        %2373 = vset.pattern.permute.xlu0 5
        %2374 = vperm.xlu0 %2373, %v1053
        %v2375 = vpop.permute.xlu0 %2374
        %2377 = vset.pattern.permute.xlu0 5
        %2378 = vperm.xlu0 %2377, %v1054
        %v2379 = vpop.permute.xlu0 %2378
        %2381 = vset.pattern.permute.xlu0 5
        %2382 = vperm.xlu0 %2381, %v1055
        %v2383 = vpop.permute.xlu0 %2382
        %2385 = vset.pattern.permute.xlu0 5
        %2386 = vperm.xlu0 %2385, %v1056
        %v2387 = vpop.permute.xlu0 %2386
        %2389 = vset.pattern.permute.xlu0 5
        %2390 = vperm.xlu0 %2389, %v1057
        %v2391 = vpop.permute.xlu0 %2390
        %2393 = vset.pattern.permute.xlu0 5
        %2394 = vperm.xlu0 %2393, %v1058
        %v2395 = vpop.permute.xlu0 %2394
        %2397 = vset.pattern.permute.xlu0 5
        %2398 = vperm.xlu0 %2397, %v1059
        %v2399 = vpop.permute.xlu0 %2398
        %2401 = vset.pattern.permute.xlu0 5
        %2402 = vperm.xlu0 %2401, %v1060
        %v2403 = vpop.permute.xlu0 %2402
        %2405 = vset.pattern.permute.xlu0 5
        %2406 = vperm.xlu0 %2405, %v1061
        %v2407 = vpop.permute.xlu0 %2406
        %2409 = vset.pattern.permute.xlu0 5
        %2410 = vperm.xlu0 %2409, %v1062
        %v2411 = vpop.permute.xlu0 %2410
        %2413 = vset.pattern.permute.xlu0 5
        %2414 = vperm.xlu0 %2413, %v1063
        %v2415 = vpop.permute.xlu0 %2414
        %2417 = vset.pattern.permute.xlu0 5
        %2418 = vperm.xlu0 %2417, %v1064
        %v2419 = vpop.permute.xlu0 %2418
        %2421 = vset.pattern.permute.xlu0 5
        %2422 = vperm.xlu0 %2421, %v1065
        %v2423 = vpop.permute.xlu0 %2422
        %2425 = vset.pattern.permute.xlu0 5
        %2426 = vperm.xlu0 %2425, %v1066
        %v2427 = vpop.permute.xlu0 %2426
        %2429 = vset.pattern.permute.xlu0 5
        %2430 = vperm.xlu0 %2429, %v1067
        %v2431 = vpop.permute.xlu0 %2430
        %v2433 = vmul.f32 %v1649, %v2371
        %v2434 = vmul.f32 %v1648, %v2375
        %v2435 = vmul.f32 %v1647, %v2379
        %v2436 = vmul.f32 %v1646, %v2383
        %v2437 = vmul.f32 %v1645, %v2387
        %v2438 = vmul.f32 %v1644, %v2391
        %v2439 = vmul.f32 %v1643, %v2395
        %v2440 = vmul.f32 %v1642, %v2399
        %v2441 = vmul.f32 %v1641, %v2403
        %v2442 = vmul.f32 %v1640, %v2407
        %v2443 = vmul.f32 %v1639, %v2411
        %v2444 = vmul.f32 %v1638, %v2415
        %v2445 = vmul.f32 %v1637, %v2419
        %v2446 = vmul.f32 %v1636, %v2423
        %v2447 = vmul.f32 %v1635, %v2427
        %v2448 = vmul.f32 %v1650, %v2431
        %v2449 = vpack.c.bf16 %v2434, %v2433
        %v2450 = vpack.c.bf16 %v2436, %v2435
        %v2451 = vpack.c.bf16 %v2438, %v2437
        %v2452 = vpack.c.bf16 %v2440, %v2439
        %v2453 = vpack.c.bf16 %v2442, %v2441
        %v2454 = vpack.c.bf16 %v2444, %v2443
        %v2455 = vpack.c.bf16 %v2446, %v2445
        %v2456 = vpack.c.bf16 %v2448, %v2447
        %s2457 = scalar_lea.vmem [#allocation2], 320
        %v2458 = vld [vmem:[%s2457] sm:$0xf]
        %v2459 = vld [vmem:[%s2457 + $0x4] sm:$0xf]
        %v2460 = vld [vmem:[%s2457 + $0x8] sm:$0xf]
        %v2461 = vld [vmem:[%s2457 + $0xc] sm:$0xf]
        %v2462 = vld [vmem:[%s2457 + $0x10] sm:$0xf]
        %v2463 = vld [vmem:[%s2457 + $0x14] sm:$0xf]
        %v2464 = vld [vmem:[%s2457 + $0x18] sm:$0xf]
        %v2465 = vld [vmem:[%s2457 + $0x1c] sm:$0xf]
        %v2466 = vld [vmem:[%s2457 + $0x20] sm:$0xf]
        %v2467 = vld [vmem:[%s2457 + $0x24] sm:$0xf]
        %v2468 = vld [vmem:[%s2457 + $0x28] sm:$0xf]
        %v2469 = vld [vmem:[%s2457 + $0x2c] sm:$0xf]
        %v2470 = vld [vmem:[%s2457 + $0x30] sm:$0xf]
        %v2471 = vld [vmem:[%s2457 + $0x34] sm:$0xf]
        %v2472 = vld [vmem:[%s2457 + $0x38] sm:$0xf]
        %v2473 = vld [vmem:[%s2457 + $0x3c] sm:$0xf]
        %v2490 = vunpack.c.l.b16 %v2458
        %v2491 = vunpack.c.l.b16 %v2459
        %v2492 = vunpack.c.l.b16 %v2460
        %v2493 = vunpack.c.l.b16 %v2461
        %v2494 = vunpack.c.l.b16 %v2462
        %v2495 = vunpack.c.l.b16 %v2463
        %v2496 = vunpack.c.l.b16 %v2464
        %v2497 = vunpack.c.l.b16 %v2465
        %v2498 = vunpack.c.l.b16 %v2466
        %v2499 = vunpack.c.l.b16 %v2467
        %v2500 = vunpack.c.l.b16 %v2468
        %v2501 = vunpack.c.l.b16 %v2469
        %v2502 = vunpack.c.l.b16 %v2470
        %v2503 = vunpack.c.l.b16 %v2471
        %v2504 = vunpack.c.l.b16 %v2472
        %v2505 = vunpack.c.l.b16 %v2473
        %v2506 = vpack.c.b16 %v2491, %v2490
        %v2507 = vpack.c.b16 %v2493, %v2492
        %v2508 = vpack.c.b16 %v2495, %v2494
        %v2509 = vpack.c.b16 %v2497, %v2496
        %v2510 = vpack.c.b16 %v2499, %v2498
        %v2511 = vpack.c.b16 %v2501, %v2500
        %v2512 = vpack.c.b16 %v2503, %v2502
        %v2513 = vpack.c.b16 %v2505, %v2504
        %2522 = vmatprep.subr.bf16.mxu0 0
        %2523 = vmatpush1.bf16.msra.mxu0 %v2506
        %2524 = vmatprep.subr.bf16.mxu0 0
        %2525 = vmatpush1.bf16.msra.mxu0 %v2507
        %2526 = vmatprep.subr.bf16.mxu0 0
        %2527 = vmatpush1.bf16.msra.mxu0 %v2508
        %2528 = vmatprep.subr.bf16.mxu0 0
        %2529 = vmatpush1.bf16.msra.mxu0 %v2509
        %2530 = vmatprep.subr.bf16.mxu0 0
        %2531 = vmatpush1.bf16.msra.mxu0 %v2510
        %2532 = vmatprep.subr.bf16.mxu0 0
        %2533 = vmatpush1.bf16.msra.mxu0 %v2511
        %2534 = vmatprep.subr.bf16.mxu0 0
        %2535 = vmatpush1.bf16.msra.mxu0 %v2512
        %2536 = vmatprep.subr.bf16.mxu0 0
        %2537 = vmatpush1.bf16.msra.mxu0 %v2513
        %2538 = vmatprep.subr.bf16.mxu0 0
        %2539 = vmatpush1.bf16.msra.mxu0 0
        %2540 = vmatprep.subr.bf16.mxu0 0
        %2541 = vmatpush1.bf16.msra.mxu0 0
        %2542 = vmatprep.subr.bf16.mxu0 0
        %2543 = vmatpush1.bf16.msra.mxu0 0
        %2544 = vmatprep.subr.bf16.mxu0 0
        %2545 = vmatpush1.bf16.msra.mxu0 0
        %2546 = vmatprep.subr.bf16.mxu0 0
        %2547 = vmatpush1.bf16.msra.mxu0 0
        %2548 = vmatprep.subr.bf16.mxu0 0
        %2549 = vmatpush1.bf16.msra.mxu0 0
        %2550 = vmatprep.subr.bf16.mxu0 0
        %2551 = vmatpush1.bf16.msra.mxu0 0
        %2552 = vmatprep.subr.bf16.mxu0 0
        %2553 = vmatpush1.bf16.msra.mxu0 0
        %2554 = vmatprep.mubr.bf16.mxu0 0
        %2555 = vmatmul.mubr.bf16.gmra.mrb[0].mxu0 %v2449
        %v2556 = vpop.f32.mrb[0].mxu0
        %v2557 = vadd.f32 0.0, %v2556
        %v2558 = vpop.f32.mrb[0].mxu0
        %v2559 = vpop.f32.mrb[0].mxu0
        %v2560 = vadd.f32 0.0, %v2559
        %v2561 = vpop.f32.mrb[0].mxu0
        %2562 = vmatprep.mubr.bf16.mxu0 0
        %2563 = vmatmul.mubr.bf16.gmra.mrb[0].mxu0 %v2450
        %v2564 = vpop.f32.mrb[0].mxu0
        %v2565 = vadd.f32 0.0, %v2564
        %v2566 = vpop.f32.mrb[0].mxu0
        %v2567 = vpop.f32.mrb[0].mxu0
        %v2568 = vadd.f32 0.0, %v2567
        %v2569 = vpop.f32.mrb[0].mxu0
        %2570 = vmatprep.mubr.bf16.mxu0 0
        %2571 = vmatmul.mubr.bf16.gmra.mrb[0].mxu0 %v2451
        %v2572 = vpop.f32.mrb[0].mxu0
        %v2573 = vadd.f32 0.0, %v2572
        %v2574 = vpop.f32.mrb[0].mxu0
        %v2575 = vpop.f32.mrb[0].mxu0
        %v2576 = vadd.f32 0.0, %v2575
        %v2577 = vpop.f32.mrb[0].mxu0
        %2578 = vmatprep.mubr.bf16.mxu0 0
        %2579 = vmatmul.mubr.bf16.gmra.mrb[0].mxu0 %v2452
        %v2580 = vpop.f32.mrb[0].mxu0
        %v2581 = vadd.f32 0.0, %v2580
        %v2582 = vpop.f32.mrb[0].mxu0
        %v2583 = vpop.f32.mrb[0].mxu0
        %v2584 = vadd.f32 0.0, %v2583
        %v2585 = vpop.f32.mrb[0].mxu0
        %2586 = vmatprep.mubr.bf16.mxu0 0
        %2587 = vmatmul.mubr.bf16.gmra.mrb[0].mxu0 %v2453
        %v2588 = vpop.f32.mrb[0].mxu0
        %v2589 = vadd.f32 0.0, %v2588
        %v2590 = vpop.f32.mrb[0].mxu0
        %v2591 = vpop.f32.mrb[0].mxu0
        %v2592 = vadd.f32 0.0, %v2591
        %v2593 = vpop.f32.mrb[0].mxu0
        %2594 = vmatprep.mubr.bf16.mxu0 0
        %2595 = vmatmul.mubr.bf16.gmra.mrb[0].mxu0 %v2454
        %v2596 = vpop.f32.mrb[0].mxu0
        %v2597 = vadd.f32 0.0, %v2596
        %v2598 = vpop.f32.mrb[0].mxu0
        %v2599 = vpop.f32.mrb[0].mxu0
        %v2600 = vadd.f32 0.0, %v2599
        %v2601 = vpop.f32.mrb[0].mxu0
        %2602 = vmatprep.mubr.bf16.mxu0 0
        %2603 = vmatmul.mubr.bf16.gmra.mrb[0].mxu0 %v2455
        %v2604 = vpop.f32.mrb[0].mxu0
        %v2605 = vadd.f32 0.0, %v2604
        %v2606 = vpop.f32.mrb[0].mxu0
        %v2607 = vpop.f32.mrb[0].mxu0
        %v2608 = vadd.f32 0.0, %v2607
        %v2609 = vpop.f32.mrb[0].mxu0
        %2610 = vmatprep.mubr.bf16.mxu0 0
        %2611 = vmatmul.mubr.bf16.gmra.mrb[0].mxu0 %v2456
        %v2612 = vpop.f32.mrb[0].mxu0
        %v2613 = vadd.f32 0.0, %v2612
        %v2614 = vpop.f32.mrb[0].mxu0
        %v2615 = vpop.f32.mrb[0].mxu0
        %v2616 = vadd.f32 0.0, %v2615
        %v2617 = vpop.f32.mrb[0].mxu0
        %2618 = vdwg.mxu0
        %v2619 = vadd.f32 %v2353, %v2557
        %v2620 = vadd.f32 %v2354, %v2560
        %v2621 = vadd.f32 %v2355, %v2565
        %v2622 = vadd.f32 %v2356, %v2568
        %v2623 = vadd.f32 %v2357, %v2573
        %v2624 = vadd.f32 %v2358, %v2576
        %v2625 = vadd.f32 %v2359, %v2581
        %v2626 = vadd.f32 %v2360, %v2584
        %v2627 = vadd.f32 %v2361, %v2589
        %v2628 = vadd.f32 %v2362, %v2592
        %v2629 = vadd.f32 %v2363, %v2597
        %v2630 = vadd.f32 %v2364, %v2600
        %v2631 = vadd.f32 %v2365, %v2605
        %v2632 = vadd.f32 %v2366, %v2608
        %v2633 = vadd.f32 %v2367, %v2613
        %v2634 = vadd.f32 %v2368, %v2616
        %2635 = vset.pattern.permute.xlu0 6
        %2636 = vperm.xlu0 %2635, %v1052
        %v2637 = vpop.permute.xlu0 %2636
        %2639 = vset.pattern.permute.xlu0 6
        %2640 = vperm.xlu0 %2639, %v1053
        %v2641 = vpop.permute.xlu0 %2640
        %2643 = vset.pattern.permute.xlu0 6
        %2644 = vperm.xlu0 %2643, %v1054
        %v2645 = vpop.permute.xlu0 %2644
        %2647 = vset.pattern.permute.xlu0 6
        %2648 = vperm.xlu0 %2647, %v1055
        %v2649 = vpop.permute.xlu0 %2648
        %2651 = vset.pattern.permute.xlu0 6
        %2652 = vperm.xlu0 %2651, %v1056
        %v2653 = vpop.permute.xlu0 %2652
        %2655 = vset.pattern.permute.xlu0 6
        %2656 = vperm.xlu0 %2655, %v1057
        %v2657 = vpop.permute.xlu0 %2656
        %2659 = vset.pattern.permute.xlu0 6
        %2660 = vperm.xlu0 %2659, %v1058
        %v2661 = vpop.permute.xlu0 %2660
        %2663 = vset.pattern.permute.xlu0 6
        %2664 = vperm.xlu0 %2663, %v1059
        %v2665 = vpop.permute.xlu0 %2664
        %2667 = vset.pattern.permute.xlu0 6
        %2668 = vperm.xlu0 %2667, %v1060
        %v2669 = vpop.permute.xlu0 %2668
        %2671 = vset.pattern.permute.xlu0 6
        %2672 = vperm.xlu0 %2671, %v1061
        %v2673 = vpop.permute.xlu0 %2672
        %2675 = vset.pattern.permute.xlu0 6
        %2676 = vperm.xlu0 %2675, %v1062
        %v2677 = vpop.permute.xlu0 %2676
        %2679 = vset.pattern.permute.xlu0 6
        %2680 = vperm.xlu0 %2679, %v1063
        %v2681 = vpop.permute.xlu0 %2680
        %2683 = vset.pattern.permute.xlu0 6
        %2684 = vperm.xlu0 %2683, %v1064
        %v2685 = vpop.permute.xlu0 %2684
        %2687 = vset.pattern.permute.xlu0 6
        %2688 = vperm.xlu0 %2687, %v1065
        %v2689 = vpop.permute.xlu0 %2688
        %2691 = vset.pattern.permute.xlu0 6
        %2692 = vperm.xlu0 %2691, %v1066
        %v2693 = vpop.permute.xlu0 %2692
        %2695 = vset.pattern.permute.xlu0 6
        %2696 = vperm.xlu0 %2695, %v1067
        %v2697 = vpop.permute.xlu0 %2696
        %v2699 = vmul.f32 %v1101, %v2637
        %v2700 = vmul.f32 %v1100, %v2641
        %v2701 = vmul.f32 %v1099, %v2645
        %v2702 = vmul.f32 %v1098, %v2649
        %v2703 = vmul.f32 %v1097, %v2653
        %v2704 = vmul.f32 %v1096, %v2657
        %v2705 = vmul.f32 %v1095, %v2661
        %v2706 = vmul.f32 %v1094, %v2665
        %v2707 = vmul.f32 %v1093, %v2669
        %v2708 = vmul.f32 %v1092, %v2673
        %v2709 = vmul.f32 %v1091, %v2677
        %v2710 = vmul.f32 %v1090, %v2681
        %v2711 = vmul.f32 %v1089, %v2685
        %v2712 = vmul.f32 %v1088, %v2689
        %v2713 = vmul.f32 %v1087, %v2693
        %v2714 = vmul.f32 %v1102, %v2697
        %v2715 = vpack.c.bf16 %v2700, %v2699
        %v2716 = vpack.c.bf16 %v2702, %v2701
        %v2717 = vpack.c.bf16 %v2704, %v2703
        %v2718 = vpack.c.bf16 %v2706, %v2705
        %v2719 = vpack.c.bf16 %v2708, %v2707
        %v2720 = vpack.c.bf16 %v2710, %v2709
        %v2721 = vpack.c.bf16 %v2712, %v2711
        %v2722 = vpack.c.bf16 %v2714, %v2713
        %s2723 = scalar_lea.vmem [#allocation2], 384
        %v2724 = vld [vmem:[%s2723] sm:$0xf]
        %v2725 = vld [vmem:[%s2723 + $0x4] sm:$0xf]
        %v2726 = vld [vmem:[%s2723 + $0x8] sm:$0xf]
        %v2727 = vld [vmem:[%s2723 + $0xc] sm:$0xf]
        %v2728 = vld [vmem:[%s2723 + $0x10] sm:$0xf]
        %v2729 = vld [vmem:[%s2723 + $0x14] sm:$0xf]
        %v2730 = vld [vmem:[%s2723 + $0x18] sm:$0xf]
        %v2731 = vld [vmem:[%s2723 + $0x1c] sm:$0xf]
        %v2732 = vld [vmem:[%s2723 + $0x20] sm:$0xf]
        %v2733 = vld [vmem:[%s2723 + $0x24] sm:$0xf]
        %v2734 = vld [vmem:[%s2723 + $0x28] sm:$0xf]
        %v2735 = vld [vmem:[%s2723 + $0x2c] sm:$0xf]
        %v2736 = vld [vmem:[%s2723 + $0x30] sm:$0xf]
        %v2737 = vld [vmem:[%s2723 + $0x34] sm:$0xf]
        %v2738 = vld [vmem:[%s2723 + $0x38] sm:$0xf]
        %v2739 = vld [vmem:[%s2723 + $0x3c] sm:$0xf]
        %v2756 = vunpack.c.l.b16 %v2724
        %v2757 = vunpack.c.l.b16 %v2725
        %v2758 = vunpack.c.l.b16 %v2726
        %v2759 = vunpack.c.l.b16 %v2727
        %v2760 = vunpack.c.l.b16 %v2728
        %v2761 = vunpack.c.l.b16 %v2729
        %v2762 = vunpack.c.l.b16 %v2730
        %v2763 = vunpack.c.l.b16 %v2731
        %v2764 = vunpack.c.l.b16 %v2732
        %v2765 = vunpack.c.l.b16 %v2733
        %v2766 = vunpack.c.l.b16 %v2734
        %v2767 = vunpack.c.l.b16 %v2735
        %v2768 = vunpack.c.l.b16 %v2736
        %v2769 = vunpack.c.l.b16 %v2737
        %v2770 = vunpack.c.l.b16 %v2738
        %v2771 = vunpack.c.l.b16 %v2739
        %v2772 = vpack.c.b16 %v2757, %v2756
        %v2773 = vpack.c.b16 %v2759, %v2758
        %v2774 = vpack.c.b16 %v2761, %v2760
        %v2775 = vpack.c.b16 %v2763, %v2762
        %v2776 = vpack.c.b16 %v2765, %v2764
        %v2777 = vpack.c.b16 %v2767, %v2766
        %v2778 = vpack.c.b16 %v2769, %v2768
        %v2779 = vpack.c.b16 %v2771, %v2770
        %2788 = vmatprep.subr.bf16.mxu0 0
        %2789 = vmatpush1.bf16.msra.mxu0 %v2772
        %2790 = vmatprep.subr.bf16.mxu0 0
        %2791 = vmatpush1.bf16.msra.mxu0 %v2773
        %2792 = vmatprep.subr.bf16.mxu0 0
        %2793 = vmatpush1.bf16.msra.mxu0 %v2774
        %2794 = vmatprep.subr.bf16.mxu0 0
        %2795 = vmatpush1.bf16.msra.mxu0 %v2775
        %2796 = vmatprep.subr.bf16.mxu0 0
        %2797 = vmatpush1.bf16.msra.mxu0 %v2776
        %2798 = vmatprep.subr.bf16.mxu0 0
        %2799 = vmatpush1.bf16.msra.mxu0 %v2777
        %2800 = vmatprep.subr.bf16.mxu0 0
        %2801 = vmatpush1.bf16.msra.mxu0 %v2778
        %2802 = vmatprep.subr.bf16.mxu0 0
        %2803 = vmatpush1.bf16.msra.mxu0 %v2779
        %2804 = vmatprep.subr.bf16.mxu0 0
        %2805 = vmatpush1.bf16.msra.mxu0 0
        %2806 = vmatprep.subr.bf16.mxu0 0
        %2807 = vmatpush1.bf16.msra.mxu0 0
        %2808 = vmatprep.subr.bf16.mxu0 0
        %2809 = vmatpush1.bf16.msra.mxu0 0
        %2810 = vmatprep.subr.bf16.mxu0 0
        %2811 = vmatpush1.bf16.msra.mxu0 0
        %2812 = vmatprep.subr.bf16.mxu0 0
        %2813 = vmatpush1.bf16.msra.mxu0 0
        %2814 = vmatprep.subr.bf16.mxu0 0
        %2815 = vmatpush1.bf16.msra.mxu0 0
        %2816 = vmatprep.subr.bf16.mxu0 0
        %2817 = vmatpush1.bf16.msra.mxu0 0
        %2818 = vmatprep.subr.bf16.mxu0 0
        %2819 = vmatpush1.bf16.msra.mxu0 0
        %2820 = vmatprep.mubr.bf16.mxu0 0
        %2821 = vmatmul.mubr.bf16.gmra.mrb[0].mxu0 %v2715
        %v2822 = vpop.f32.mrb[0].mxu0
        %v2823 = vadd.f32 0.0, %v2822
        %v2824 = vpop.f32.mrb[0].mxu0
        %v2825 = vpop.f32.mrb[0].mxu0
        %v2826 = vadd.f32 0.0, %v2825
        %v2827 = vpop.f32.mrb[0].mxu0
        %2828 = vmatprep.mubr.bf16.mxu0 0
        %2829 = vmatmul.mubr.bf16.gmra.mrb[0].mxu0 %v2716
        %v2830 = vpop.f32.mrb[0].mxu0
        %v2831 = vadd.f32 0.0, %v2830
        %v2832 = vpop.f32.mrb[0].mxu0
        %v2833 = vpop.f32.mrb[0].mxu0
        %v2834 = vadd.f32 0.0, %v2833
        %v2835 = vpop.f32.mrb[0].mxu0
        %2836 = vmatprep.mubr.bf16.mxu0 0
        %2837 = vmatmul.mubr.bf16.gmra.mrb[0].mxu0 %v2717
        %v2838 = vpop.f32.mrb[0].mxu0
        %v2839 = vadd.f32 0.0, %v2838
        %v2840 = vpop.f32.mrb[0].mxu0
        %v2841 = vpop.f32.mrb[0].mxu0
        %v2842 = vadd.f32 0.0, %v2841
        %v2843 = vpop.f32.mrb[0].mxu0
        %2844 = vmatprep.mubr.bf16.mxu0 0
        %2845 = vmatmul.mubr.bf16.gmra.mrb[0].mxu0 %v2718
        %v2846 = vpop.f32.mrb[0].mxu0
        %v2847 = vadd.f32 0.0, %v2846
        %v2848 = vpop.f32.mrb[0].mxu0
        %v2849 = vpop.f32.mrb[0].mxu0
        %v2850 = vadd.f32 0.0, %v2849
        %v2851 = vpop.f32.mrb[0].mxu0
        %2852 = vmatprep.mubr.bf16.mxu0 0
        %2853 = vmatmul.mubr.bf16.gmra.mrb[0].mxu0 %v2719
        %v2854 = vpop.f32.mrb[0].mxu0
        %v2855 = vadd.f32 0.0, %v2854
        %v2856 = vpop.f32.mrb[0].mxu0
        %v2857 = vpop.f32.mrb[0].mxu0
        %v2858 = vadd.f32 0.0, %v2857
        %v2859 = vpop.f32.mrb[0].mxu0
        %2860 = vmatprep.mubr.bf16.mxu0 0
        %2861 = vmatmul.mubr.bf16.gmra.mrb[0].mxu0 %v2720
        %v2862 = vpop.f32.mrb[0].mxu0
        %v2863 = vadd.f32 0.0, %v2862
        %v2864 = vpop.f32.mrb[0].mxu0
        %v2865 = vpop.f32.mrb[0].mxu0
        %v2866 = vadd.f32 0.0, %v2865
        %v2867 = vpop.f32.mrb[0].mxu0
        %2868 = vmatprep.mubr.bf16.mxu0 0
        %2869 = vmatmul.mubr.bf16.gmra.mrb[0].mxu0 %v2721
        %v2870 = vpop.f32.mrb[0].mxu0
        %v2871 = vadd.f32 0.0, %v2870
        %v2872 = vpop.f32.mrb[0].mxu0
        %v2873 = vpop.f32.mrb[0].mxu0
        %v2874 = vadd.f32 0.0, %v2873
        %v2875 = vpop.f32.mrb[0].mxu0
        %2876 = vmatprep.mubr.bf16.mxu0 0
        %2877 = vmatmul.mubr.bf16.gmra.mrb[0].mxu0 %v2722
        %v2878 = vpop.f32.mrb[0].mxu0
        %v2879 = vadd.f32 0.0, %v2878
        %v2880 = vpop.f32.mrb[0].mxu0
        %v2881 = vpop.f32.mrb[0].mxu0
        %v2882 = vadd.f32 0.0, %v2881
        %v2883 = vpop.f32.mrb[0].mxu0
        %2884 = vdwg.mxu0
        %v2885 = vadd.f32 %v2619, %v2823
        %v2886 = vadd.f32 %v2620, %v2826
        %v2887 = vadd.f32 %v2621, %v2831
        %v2888 = vadd.f32 %v2622, %v2834
        %v2889 = vadd.f32 %v2623, %v2839
        %v2890 = vadd.f32 %v2624, %v2842
        %v2891 = vadd.f32 %v2625, %v2847
        %v2892 = vadd.f32 %v2626, %v2850
        %v2893 = vadd.f32 %v2627, %v2855
        %v2894 = vadd.f32 %v2628, %v2858
        %v2895 = vadd.f32 %v2629, %v2863
        %v2896 = vadd.f32 %v2630, %v2866
        %v2897 = vadd.f32 %v2631, %v2871
        %v2898 = vadd.f32 %v2632, %v2874
        %v2899 = vadd.f32 %v2633, %v2879
        %v2900 = vadd.f32 %v2634, %v2882
        %2901 = vset.pattern.permute.xlu0 7
        %2902 = vperm.xlu0 %2901, %v1052
        %v2903 = vpop.permute.xlu0 %2902
        %2905 = vset.pattern.permute.xlu0 7
        %2906 = vperm.xlu0 %2905, %v1053
        %v2907 = vpop.permute.xlu0 %2906
        %2909 = vset.pattern.permute.xlu0 7
        %2910 = vperm.xlu0 %2909, %v1054
        %v2911 = vpop.permute.xlu0 %2910
        %2913 = vset.pattern.permute.xlu0 7
        %2914 = vperm.xlu0 %2913, %v1055
        %v2915 = vpop.permute.xlu0 %2914
        %2917 = vset.pattern.permute.xlu0 7
        %2918 = vperm.xlu0 %2917, %v1056
        %v2919 = vpop.permute.xlu0 %2918
        %2921 = vset.pattern.permute.xlu0 7
        %2922 = vperm.xlu0 %2921, %v1057
        %v2923 = vpop.permute.xlu0 %2922
        %2925 = vset.pattern.permute.xlu0 7
        %2926 = vperm.xlu0 %2925, %v1058
        %v2927 = vpop.permute.xlu0 %2926
        %2929 = vset.pattern.permute.xlu0 7
        %2930 = vperm.xlu0 %2929, %v1059
        %v2931 = vpop.permute.xlu0 %2930
        %2933 = vset.pattern.permute.xlu0 7
        %2934 = vperm.xlu0 %2933, %v1060
        %v2935 = vpop.permute.xlu0 %2934
        %2937 = vset.pattern.permute.xlu0 7
        %2938 = vperm.xlu0 %2937, %v1061
        %v2939 = vpop.permute.xlu0 %2938
        %2941 = vset.pattern.permute.xlu0 7
        %2942 = vperm.xlu0 %2941, %v1062
        %v2943 = vpop.permute.xlu0 %2942
        %2945 = vset.pattern.permute.xlu0 7
        %2946 = vperm.xlu0 %2945, %v1063
        %v2947 = vpop.permute.xlu0 %2946
        %2949 = vset.pattern.permute.xlu0 7
        %2950 = vperm.xlu0 %2949, %v1064
        %v2951 = vpop.permute.xlu0 %2950
        %2953 = vset.pattern.permute.xlu0 7
        %2954 = vperm.xlu0 %2953, %v1065
        %v2955 = vpop.permute.xlu0 %2954
        %2957 = vset.pattern.permute.xlu0 7
        %2958 = vperm.xlu0 %2957, %v1066
        %v2959 = vpop.permute.xlu0 %2958
        %2961 = vset.pattern.permute.xlu0 7
        %2962 = vperm.xlu0 %2961, %v1067
        %v2963 = vpop.permute.xlu0 %2962
        %v2965 = vmul.f32 %v1037, %v2903
        %v2966 = vmul.f32 %v1038, %v2907
        %v2967 = vmul.f32 %v1039, %v2911
        %v2968 = vmul.f32 %v1040, %v2915
        %v2969 = vmul.f32 %v1041, %v2919
        %v2970 = vmul.f32 %v1042, %v2923
        %v2971 = vmul.f32 %v1043, %v2927
        %v2972 = vmul.f32 %v1044, %v2931
        %v2973 = vmul.f32 %v1045, %v2935
        %v2974 = vmul.f32 %v1046, %v2939
        %v2975 = vmul.f32 %v1047, %v2943
        %v2976 = vmul.f32 %v1048, %v2947
        %v2977 = vmul.f32 %v1049, %v2951
        %v2978 = vmul.f32 %v1050, %v2955
        %v2979 = vmul.f32 %v1051, %v2959
        %v2980 = vmul.f32 %v1036, %v2963
        %v2981 = vpack.c.bf16 %v2966, %v2965
        %v2982 = vpack.c.bf16 %v2968, %v2967
        %v2983 = vpack.c.bf16 %v2970, %v2969
        %v2984 = vpack.c.bf16 %v2972, %v2971
        %v2985 = vpack.c.bf16 %v2974, %v2973
        %v2986 = vpack.c.bf16 %v2976, %v2975
        %v2987 = vpack.c.bf16 %v2978, %v2977
        %v2988 = vpack.c.bf16 %v2980, %v2979
        %s2989 = scalar_lea.vmem [#allocation2], 448
        %v2990 = vld [vmem:[%s2989] sm:$0xf]
        %v2991 = vld [vmem:[%s2989 + $0x4] sm:$0xf]
        %v2992 = vld [vmem:[%s2989 + $0x8] sm:$0xf]
        %v2993 = vld [vmem:[%s2989 + $0xc] sm:$0xf]
        %v2994 = vld [vmem:[%s2989 + $0x10] sm:$0xf]
        %v2995 = vld [vmem:[%s2989 + $0x14] sm:$0xf]
        %v2996 = vld [vmem:[%s2989 + $0x18] sm:$0xf]
        %v2997 = vld [vmem:[%s2989 + $0x1c] sm:$0xf]
        %v2998 = vld [vmem:[%s2989 + $0x20] sm:$0xf]
        %v2999 = vld [vmem:[%s2989 + $0x24] sm:$0xf]
        %v3000 = vld [vmem:[%s2989 + $0x28] sm:$0xf]
        %v3001 = vld [vmem:[%s2989 + $0x2c] sm:$0xf]
        %v3002 = vld [vmem:[%s2989 + $0x30] sm:$0xf]
        %v3003 = vld [vmem:[%s2989 + $0x34] sm:$0xf]
        %v3004 = vld [vmem:[%s2989 + $0x38] sm:$0xf]
        %v3005 = vld [vmem:[%s2989 + $0x3c] sm:$0xf]
        %v3022 = vunpack.c.l.b16 %v2990
        %v3023 = vunpack.c.l.b16 %v2991
        %v3024 = vunpack.c.l.b16 %v2992
        %v3025 = vunpack.c.l.b16 %v2993
        %v3026 = vunpack.c.l.b16 %v2994
        %v3027 = vunpack.c.l.b16 %v2995
        %v3028 = vunpack.c.l.b16 %v2996
        %v3029 = vunpack.c.l.b16 %v2997
        %v3030 = vunpack.c.l.b16 %v2998
        %v3031 = vunpack.c.l.b16 %v2999
        %v3032 = vunpack.c.l.b16 %v3000
        %v3033 = vunpack.c.l.b16 %v3001
        %v3034 = vunpack.c.l.b16 %v3002
        %v3035 = vunpack.c.l.b16 %v3003
        %v3036 = vunpack.c.l.b16 %v3004
        %v3037 = vunpack.c.l.b16 %v3005
        %v3038 = vpack.c.b16 %v3023, %v3022
        %v3039 = vpack.c.b16 %v3025, %v3024
        %v3040 = vpack.c.b16 %v3027, %v3026
        %v3041 = vpack.c.b16 %v3029, %v3028
        %v3042 = vpack.c.b16 %v3031, %v3030
        %v3043 = vpack.c.b16 %v3033, %v3032
        %v3044 = vpack.c.b16 %v3035, %v3034
        %v3045 = vpack.c.b16 %v3037, %v3036
        %3054 = vmatprep.subr.bf16.mxu0 0
        %3055 = vmatpush1.bf16.msra.mxu0 %v3038
        %3056 = vmatprep.subr.bf16.mxu0 0
        %3057 = vmatpush1.bf16.msra.mxu0 %v3039
        %3058 = vmatprep.subr.bf16.mxu0 0
        %3059 = vmatpush1.bf16.msra.mxu0 %v3040
        %3060 = vmatprep.subr.bf16.mxu0 0
        %3061 = vmatpush1.bf16.msra.mxu0 %v3041
        %3062 = vmatprep.subr.bf16.mxu0 0
        %3063 = vmatpush1.bf16.msra.mxu0 %v3042
        %3064 = vmatprep.subr.bf16.mxu0 0
        %3065 = vmatpush1.bf16.msra.mxu0 %v3043
        %3066 = vmatprep.subr.bf16.mxu0 0
        %3067 = vmatpush1.bf16.msra.mxu0 %v3044
        %3068 = vmatprep.subr.bf16.mxu0 0
        %3069 = vmatpush1.bf16.msra.mxu0 %v3045
        %3070 = vmatprep.subr.bf16.mxu0 0
        %3071 = vmatpush1.bf16.msra.mxu0 0
        %3072 = vmatprep.subr.bf16.mxu0 0
        %3073 = vmatpush1.bf16.msra.mxu0 0
        %3074 = vmatprep.subr.bf16.mxu0 0
        %3075 = vmatpush1.bf16.msra.mxu0 0
        %3076 = vmatprep.subr.bf16.mxu0 0
        %3077 = vmatpush1.bf16.msra.mxu0 0
        %3078 = vmatprep.subr.bf16.mxu0 0
        %3079 = vmatpush1.bf16.msra.mxu0 0
        %3080 = vmatprep.subr.bf16.mxu0 0
        %3081 = vmatpush1.bf16.msra.mxu0 0
        %3082 = vmatprep.subr.bf16.mxu0 0
        %3083 = vmatpush1.bf16.msra.mxu0 0
        %3084 = vmatprep.subr.bf16.mxu0 0
        %3085 = vmatpush1.bf16.msra.mxu0 0
        %3086 = vmatprep.mubr.bf16.mxu0 0
        %3087 = vmatmul.mubr.bf16.gmra.mrb[0].mxu0 %v2981
        %v3088 = vpop.f32.mrb[0].mxu0
        %v3089 = vadd.f32 0.0, %v3088
        %v3090 = vpop.f32.mrb[0].mxu0
        %v3091 = vpop.f32.mrb[0].mxu0
        %v3092 = vadd.f32 0.0, %v3091
        %v3093 = vpop.f32.mrb[0].mxu0
        %3094 = vmatprep.mubr.bf16.mxu0 0
        %3095 = vmatmul.mubr.bf16.gmra.mrb[0].mxu0 %v2982
        %v3096 = vpop.f32.mrb[0].mxu0
        %v3097 = vadd.f32 0.0, %v3096
        %v3098 = vpop.f32.mrb[0].mxu0
        %v3099 = vpop.f32.mrb[0].mxu0
        %v3100 = vadd.f32 0.0, %v3099
        %v3101 = vpop.f32.mrb[0].mxu0
        %3102 = vmatprep.mubr.bf16.mxu0 0
        %3103 = vmatmul.mubr.bf16.gmra.mrb[0].mxu0 %v2983
        %v3104 = vpop.f32.mrb[0].mxu0
        %v3105 = vadd.f32 0.0, %v3104
        %v3106 = vpop.f32.mrb[0].mxu0
        %v3107 = vpop.f32.mrb[0].mxu0
        %v3108 = vadd.f32 0.0, %v3107
        %v3109 = vpop.f32.mrb[0].mxu0
        %3110 = vmatprep.mubr.bf16.mxu0 0
        %3111 = vmatmul.mubr.bf16.gmra.mrb[0].mxu0 %v2984
        %v3112 = vpop.f32.mrb[0].mxu0
        %v3113 = vadd.f32 0.0, %v3112
        %v3114 = vpop.f32.mrb[0].mxu0
        %v3115 = vpop.f32.mrb[0].mxu0
        %v3116 = vadd.f32 0.0, %v3115
        %v3117 = vpop.f32.mrb[0].mxu0
        %3118 = vmatprep.mubr.bf16.mxu0 0
        %3119 = vmatmul.mubr.bf16.gmra.mrb[0].mxu0 %v2985
        %v3120 = vpop.f32.mrb[0].mxu0
        %v3121 = vadd.f32 0.0, %v3120
        %v3122 = vpop.f32.mrb[0].mxu0
        %v3123 = vpop.f32.mrb[0].mxu0
        %v3124 = vadd.f32 0.0, %v3123
        %v3125 = vpop.f32.mrb[0].mxu0
        %3126 = vmatprep.mubr.bf16.mxu0 0
        %3127 = vmatmul.mubr.bf16.gmra.mrb[0].mxu0 %v2986
        %v3128 = vpop.f32.mrb[0].mxu0
        %v3129 = vadd.f32 0.0, %v3128
        %v3130 = vpop.f32.mrb[0].mxu0
        %v3131 = vpop.f32.mrb[0].mxu0
        %v3132 = vadd.f32 0.0, %v3131
        %v3133 = vpop.f32.mrb[0].mxu0
        %3134 = vmatprep.mubr.bf16.mxu0 0
        %3135 = vmatmul.mubr.bf16.gmra.mrb[0].mxu0 %v2987
        %v3136 = vpop.f32.mrb[0].mxu0
        %v3137 = vadd.f32 0.0, %v3136
        %v3138 = vpop.f32.mrb[0].mxu0
        %v3139 = vpop.f32.mrb[0].mxu0
        %v3140 = vadd.f32 0.0, %v3139
        %v3141 = vpop.f32.mrb[0].mxu0
        %3142 = vmatprep.mubr.bf16.mxu0 0
        %3143 = vmatmul.mubr.bf16.gmra.mrb[0].mxu0 %v2988
        %v3144 = vpop.f32.mrb[0].mxu0
        %v3145 = vadd.f32 0.0, %v3144
        %v3146 = vpop.f32.mrb[0].mxu0
        %v3147 = vpop.f32.mrb[0].mxu0
        %v3148 = vadd.f32 0.0, %v3147
        %v3149 = vpop.f32.mrb[0].mxu0
        %3150 = vdwg.mxu0
        %v3151 = vadd.f32 %v2885, %v3089
        %v3152 = vadd.f32 %v2886, %v3092
        %v3153 = vadd.f32 %v2887, %v3097
        %v3154 = vadd.f32 %v2888, %v3100
        %v3155 = vadd.f32 %v2889, %v3105
        %v3156 = vadd.f32 %v2890, %v3108
        %v3157 = vadd.f32 %v2891, %v3113
        %v3158 = vadd.f32 %v2892, %v3116
        %v3159 = vadd.f32 %v2893, %v3121
        %v3160 = vadd.f32 %v2894, %v3124
        %v3161 = vadd.f32 %v2895, %v3129
        %v3162 = vadd.f32 %v2896, %v3132
        %v3163 = vadd.f32 %v2897, %v3137
        %v3164 = vadd.f32 %v2898, %v3140
        %v3165 = vadd.f32 %v2899, %v3145
        %v3166 = vadd.f32 %v2900, %v3148
        %3167 = vset.pattern.permute.xlu0 8
        %3168 = vperm.xlu0 %3167, %v1052
        %v3169 = vpop.permute.xlu0 %3168
        %3171 = vset.pattern.permute.xlu0 8
        %3172 = vperm.xlu0 %3171, %v1053
        %v3173 = vpop.permute.xlu0 %3172
        %3175 = vset.pattern.permute.xlu0 8
        %3176 = vperm.xlu0 %3175, %v1054
        %v3177 = vpop.permute.xlu0 %3176
        %3179 = vset.pattern.permute.xlu0 8
        %3180 = vperm.xlu0 %3179, %v1055
        %v3181 = vpop.permute.xlu0 %3180
        %3183 = vset.pattern.permute.xlu0 8
        %3184 = vperm.xlu0 %3183, %v1056
        %v3185 = vpop.permute.xlu0 %3184
        %3187 = vset.pattern.permute.xlu0 8
        %3188 = vperm.xlu0 %3187, %v1057
        %v3189 = vpop.permute.xlu0 %3188
        %3191 = vset.pattern.permute.xlu0 8
        %3192 = vperm.xlu0 %3191, %v1058
        %v3193 = vpop.permute.xlu0 %3192
        %3195 = vset.pattern.permute.xlu0 8
        %3196 = vperm.xlu0 %3195, %v1059
        %v3197 = vpop.permute.xlu0 %3196
        %3199 = vset.pattern.permute.xlu0 8
        %3200 = vperm.xlu0 %3199, %v1060
        %v3201 = vpop.permute.xlu0 %3200
        %3203 = vset.pattern.permute.xlu0 8
        %3204 = vperm.xlu0 %3203, %v1061
        %v3205 = vpop.permute.xlu0 %3204
        %3207 = vset.pattern.permute.xlu0 8
        %3208 = vperm.xlu0 %3207, %v1062
        %v3209 = vpop.permute.xlu0 %3208
        %3211 = vset.pattern.permute.xlu0 8
        %3212 = vperm.xlu0 %3211, %v1063
        %v3213 = vpop.permute.xlu0 %3212
        %3215 = vset.pattern.permute.xlu0 8
        %3216 = vperm.xlu0 %3215, %v1064
        %v3217 = vpop.permute.xlu0 %3216
        %3219 = vset.pattern.permute.xlu0 8
        %3220 = vperm.xlu0 %3219, %v1065
        %v3221 = vpop.permute.xlu0 %3220
        %3223 = vset.pattern.permute.xlu0 8
        %3224 = vperm.xlu0 %3223, %v1066
        %v3225 = vpop.permute.xlu0 %3224
        %3227 = vset.pattern.permute.xlu0 8
        %3228 = vperm.xlu0 %3227, %v1067
        %v3229 = vpop.permute.xlu0 %3228
        %v3231 = vmul.f32 %v1648, %v3169
        %v3232 = vmul.f32 %v1647, %v3173
        %v3233 = vmul.f32 %v1646, %v3177
        %v3234 = vmul.f32 %v1645, %v3181
        %v3235 = vmul.f32 %v1644, %v3185
        %v3236 = vmul.f32 %v1643, %v3189
        %v3237 = vmul.f32 %v1642, %v3193
        %v3238 = vmul.f32 %v1641, %v3197
        %v3239 = vmul.f32 %v1640, %v3201
        %v3240 = vmul.f32 %v1639, %v3205
        %v3241 = vmul.f32 %v1638, %v3209
        %v3242 = vmul.f32 %v1637, %v3213
        %v3243 = vmul.f32 %v1636, %v3217
        %v3244 = vmul.f32 %v1635, %v3221
        %v3245 = vmul.f32 %v1650, %v3225
        %v3246 = vmul.f32 %v1649, %v3229
        %v3247 = vpack.c.bf16 %v3232, %v3231
        %v3248 = vpack.c.bf16 %v3234, %v3233
        %v3249 = vpack.c.bf16 %v3236, %v3235
        %v3250 = vpack.c.bf16 %v3238, %v3237
        %v3251 = vpack.c.bf16 %v3240, %v3239
        %v3252 = vpack.c.bf16 %v3242, %v3241
        %v3253 = vpack.c.bf16 %v3244, %v3243
        %v3254 = vpack.c.bf16 %v3246, %v3245
        %s3255 = scalar_lea.vmem [#allocation2], 512
        %v3256 = vld [vmem:[%s3255] sm:$0xf]
        %v3257 = vld [vmem:[%s3255 + $0x4] sm:$0xf]
        %v3258 = vld [vmem:[%s3255 + $0x8] sm:$0xf]
        %v3259 = vld [vmem:[%s3255 + $0xc] sm:$0xf]
        %v3260 = vld [vmem:[%s3255 + $0x10] sm:$0xf]
        %v3261 = vld [vmem:[%s3255 + $0x14] sm:$0xf]
        %v3262 = vld [vmem:[%s3255 + $0x18] sm:$0xf]
        %v3263 = vld [vmem:[%s3255 + $0x1c] sm:$0xf]
        %v3264 = vld [vmem:[%s3255 + $0x20] sm:$0xf]
        %v3265 = vld [vmem:[%s3255 + $0x24] sm:$0xf]
        %v3266 = vld [vmem:[%s3255 + $0x28] sm:$0xf]
        %v3267 = vld [vmem:[%s3255 + $0x2c] sm:$0xf]
        %v3268 = vld [vmem:[%s3255 + $0x30] sm:$0xf]
        %v3269 = vld [vmem:[%s3255 + $0x34] sm:$0xf]
        %v3270 = vld [vmem:[%s3255 + $0x38] sm:$0xf]
        %v3271 = vld [vmem:[%s3255 + $0x3c] sm:$0xf]
        %v3288 = vunpack.c.l.b16 %v3256
        %v3289 = vunpack.c.l.b16 %v3257
        %v3290 = vunpack.c.l.b16 %v3258
        %v3291 = vunpack.c.l.b16 %v3259
        %v3292 = vunpack.c.l.b16 %v3260
        %v3293 = vunpack.c.l.b16 %v3261
        %v3294 = vunpack.c.l.b16 %v3262
        %v3295 = vunpack.c.l.b16 %v3263
        %v3296 = vunpack.c.l.b16 %v3264
        %v3297 = vunpack.c.l.b16 %v3265
        %v3298 = vunpack.c.l.b16 %v3266
        %v3299 = vunpack.c.l.b16 %v3267
        %v3300 = vunpack.c.l.b16 %v3268
        %v3301 = vunpack.c.l.b16 %v3269
        %v3302 = vunpack.c.l.b16 %v3270
        %v3303 = vunpack.c.l.b16 %v3271
        %v3304 = vpack.c.b16 %v3289, %v3288
        %v3305 = vpack.c.b16 %v3291, %v3290
        %v3306 = vpack.c.b16 %v3293, %v3292
        %v3307 = vpack.c.b16 %v3295, %v3294
        %v3308 = vpack.c.b16 %v3297, %v3296
        %v3309 = vpack.c.b16 %v3299, %v3298
        %v3310 = vpack.c.b16 %v3301, %v3300
        %v3311 = vpack.c.b16 %v3303, %v3302
        %3320 = vmatprep.subr.bf16.mxu0 0
        %3321 = vmatpush1.bf16.msra.mxu0 %v3304
        %3322 = vmatprep.subr.bf16.mxu0 0
        %3323 = vmatpush1.bf16.msra.mxu0 %v3305
        %3324 = vmatprep.subr.bf16.mxu0 0
        %3325 = vmatpush1.bf16.msra.mxu0 %v3306
        %3326 = vmatprep.subr.bf16.mxu0 0
        %3327 = vmatpush1.bf16.msra.mxu0 %v3307
        %3328 = vmatprep.subr.bf16.mxu0 0
        %3329 = vmatpush1.bf16.msra.mxu0 %v3308
        %3330 = vmatprep.subr.bf16.mxu0 0
        %3331 = vmatpush1.bf16.msra.mxu0 %v3309
        %3332 = vmatprep.subr.bf16.mxu0 0
        %3333 = vmatpush1.bf16.msra.mxu0 %v3310
        %3334 = vmatprep.subr.bf16.mxu0 0
        %3335 = vmatpush1.bf16.msra.mxu0 %v3311
        %3336 = vmatprep.subr.bf16.mxu0 0
        %3337 = vmatpush1.bf16.msra.mxu0 0
        %3338 = vmatprep.subr.bf16.mxu0 0
        %3339 = vmatpush1.bf16.msra.mxu0 0
        %3340 = vmatprep.subr.bf16.mxu0 0
        %3341 = vmatpush1.bf16.msra.mxu0 0
        %3342 = vmatprep.subr.bf16.mxu0 0
        %3343 = vmatpush1.bf16.msra.mxu0 0
        %3344 = vmatprep.subr.bf16.mxu0 0
        %3345 = vmatpush1.bf16.msra.mxu0 0
        %3346 = vmatprep.subr.bf16.mxu0 0
        %3347 = vmatpush1.bf16.msra.mxu0 0
        %3348 = vmatprep.subr.bf16.mxu0 0
        %3349 = vmatpush1.bf16.msra.mxu0 0
        %3350 = vmatprep.subr.bf16.mxu0 0
        %3351 = vmatpush1.bf16.msra.mxu0 0
        %3352 = vmatprep.mubr.bf16.mxu0 0
        %3353 = vmatmul.mubr.bf16.gmra.mrb[0].mxu0 %v3247
        %v3354 = vpop.f32.mrb[0].mxu0
        %v3355 = vadd.f32 0.0, %v3354
        %v3356 = vpop.f32.mrb[0].mxu0
        %v3357 = vpop.f32.mrb[0].mxu0
        %v3358 = vadd.f32 0.0, %v3357
        %v3359 = vpop.f32.mrb[0].mxu0
        %3360 = vmatprep.mubr.bf16.mxu0 0
        %3361 = vmatmul.mubr.bf16.gmra.mrb[0].mxu0 %v3248
        %v3362 = vpop.f32.mrb[0].mxu0
        %v3363 = vadd.f32 0.0, %v3362
        %v3364 = vpop.f32.mrb[0].mxu0
        %v3365 = vpop.f32.mrb[0].mxu0
        %v3366 = vadd.f32 0.0, %v3365
        %v3367 = vpop.f32.mrb[0].mxu0
        %3368 = vmatprep.mubr.bf16.mxu0 0
        %3369 = vmatmul.mubr.bf16.gmra.mrb[0].mxu0 %v3249
        %v3370 = vpop.f32.mrb[0].mxu0
        %v3371 = vadd.f32 0.0, %v3370
        %v3372 = vpop.f32.mrb[0].mxu0
        %v3373 = vpop.f32.mrb[0].mxu0
        %v3374 = vadd.f32 0.0, %v3373
        %v3375 = vpop.f32.mrb[0].mxu0
        %3376 = vmatprep.mubr.bf16.mxu0 0
        %3377 = vmatmul.mubr.bf16.gmra.mrb[0].mxu0 %v3250
        %v3378 = vpop.f32.mrb[0].mxu0
        %v3379 = vadd.f32 0.0, %v3378
        %v3380 = vpop.f32.mrb[0].mxu0
        %v3381 = vpop.f32.mrb[0].mxu0
        %v3382 = vadd.f32 0.0, %v3381
        %v3383 = vpop.f32.mrb[0].mxu0
        %3384 = vmatprep.mubr.bf16.mxu0 0
        %3385 = vmatmul.mubr.bf16.gmra.mrb[0].mxu0 %v3251
        %v3386 = vpop.f32.mrb[0].mxu0
        %v3387 = vadd.f32 0.0, %v3386
        %v3388 = vpop.f32.mrb[0].mxu0
        %v3389 = vpop.f32.mrb[0].mxu0
        %v3390 = vadd.f32 0.0, %v3389
        %v3391 = vpop.f32.mrb[0].mxu0
        %3392 = vmatprep.mubr.bf16.mxu0 0
        %3393 = vmatmul.mubr.bf16.gmra.mrb[0].mxu0 %v3252
        %v3394 = vpop.f32.mrb[0].mxu0
        %v3395 = vadd.f32 0.0, %v3394
        %v3396 = vpop.f32.mrb[0].mxu0
        %v3397 = vpop.f32.mrb[0].mxu0
        %v3398 = vadd.f32 0.0, %v3397
        %v3399 = vpop.f32.mrb[0].mxu0
        %3400 = vmatprep.mubr.bf16.mxu0 0
        %3401 = vmatmul.mubr.bf16.gmra.mrb[0].mxu0 %v3253
        %v3402 = vpop.f32.mrb[0].mxu0
        %v3403 = vadd.f32 0.0, %v3402
        %v3404 = vpop.f32.mrb[0].mxu0
        %v3405 = vpop.f32.mrb[0].mxu0
        %v3406 = vadd.f32 0.0, %v3405
        %v3407 = vpop.f32.mrb[0].mxu0
        %3408 = vmatprep.mubr.bf16.mxu0 0
        %3409 = vmatmul.mubr.bf16.gmra.mrb[0].mxu0 %v3254
        %v3410 = vpop.f32.mrb[0].mxu0
        %v3411 = vadd.f32 0.0, %v3410
        %v3412 = vpop.f32.mrb[0].mxu0
        %v3413 = vpop.f32.mrb[0].mxu0
        %v3414 = vadd.f32 0.0, %v3413
        %v3415 = vpop.f32.mrb[0].mxu0
        %3416 = vdwg.mxu0
        %v3417 = vadd.f32 %v3151, %v3355
        %v3418 = vadd.f32 %v3152, %v3358
        %v3419 = vadd.f32 %v3153, %v3363
        %v3420 = vadd.f32 %v3154, %v3366
        %v3421 = vadd.f32 %v3155, %v3371
        %v3422 = vadd.f32 %v3156, %v3374
        %v3423 = vadd.f32 %v3157, %v3379
        %v3424 = vadd.f32 %v3158, %v3382
        %v3425 = vadd.f32 %v3159, %v3387
        %v3426 = vadd.f32 %v3160, %v3390
        %v3427 = vadd.f32 %v3161, %v3395
        %v3428 = vadd.f32 %v3162, %v3398
        %v3429 = vadd.f32 %v3163, %v3403
        %v3430 = vadd.f32 %v3164, %v3406
        %v3431 = vadd.f32 %v3165, %v3411
        %v3432 = vadd.f32 %v3166, %v3414
        %v3433 = vld [vmem:[%s6] sm:$0x1]
        %v3435 = vlaneseq
        %v3436 = vshrl.u32 %v3435, 7
        %v3437 = vsub.s32 0, %v3436
        %v3438 = vrot.slane %v3433, %v3437
        %v3440 = vadd.f32 %v3417, %v3438
        %v3441 = vadd.f32 %v3418, %v3438
        %v3442 = vadd.f32 %v3419, %v3438
        %v3443 = vadd.f32 %v3420, %v3438
        %v3444 = vadd.f32 %v3421, %v3438
        %v3445 = vadd.f32 %v3422, %v3438
        %v3446 = vadd.f32 %v3423, %v3438
        %v3447 = vadd.f32 %v3424, %v3438
        %v3448 = vadd.f32 %v3425, %v3438
        %v3449 = vadd.f32 %v3426, %v3438
        %v3450 = vadd.f32 %v3427, %v3438
        %v3451 = vadd.f32 %v3428, %v3438
        %v3452 = vadd.f32 %v3429, %v3438
        %v3453 = vadd.f32 %v3430, %v3438
        %v3454 = vadd.f32 %v3431, %v3438
        %v3455 = vadd.f32 %v3432, %v3438
        %v3456 = vld [vmem:[%s7] sm:$0x1]
        %v3457 = vld [vmem:[%s8] sm:$0x1]
        %v3458 = vadd.f32 %v3440, %v3441
        %v3459 = vadd.f32 %v3458, %v3442
        %v3460 = vadd.f32 %v3459, %v3443
        %v3461 = vadd.f32 %v3460, %v3444
        %v3462 = vadd.f32 %v3461, %v3445
        %v3463 = vadd.f32 %v3462, %v3446
        %v3464 = vadd.f32 %v3463, %v3447
        %v3465 = vrot.slane %v3464, 4
        %v3466 = vadd.f32 %v3464, %v3465
        %v3467 = vrot.slane %v3466, 2
        %v3468 = vadd.f32 %v3466, %v3467
        %v3469 = vrot.slane %v3468, 1
        %v3470 = vadd.f32 %v3468, %v3469
        %v3471 = vadd.f32 %v3448, %v3449
        %v3472 = vadd.f32 %v3471, %v3450
        %v3473 = vadd.f32 %v3472, %v3451
        %v3474 = vadd.f32 %v3473, %v3452
        %v3475 = vadd.f32 %v3474, %v3453
        %v3476 = vadd.f32 %v3475, %v3454
        %v3477 = vadd.f32 %v3476, %v3455
        %v3478 = vrot.slane %v3477, 4
        %v3479 = vadd.f32 %v3477, %v3478
        %v3480 = vrot.slane %v3479, 2
        %v3481 = vadd.f32 %v3479, %v3480
        %v3482 = vrot.slane %v3481, 1
        %v3483 = vadd.f32 %v3481, %v3482
        %v3484 = vmul.f32 %v3440, %v3440
        %v3485 = vmul.f32 %v3441, %v3441
        %v3486 = vmul.f32 %v3442, %v3442
        %v3487 = vmul.f32 %v3443, %v3443
        %v3488 = vmul.f32 %v3444, %v3444
        %v3489 = vmul.f32 %v3445, %v3445
        %v3490 = vmul.f32 %v3446, %v3446
        %v3491 = vmul.f32 %v3447, %v3447
        %v3492 = vmul.f32 %v3448, %v3448
        %v3493 = vmul.f32 %v3449, %v3449
        %v3494 = vmul.f32 %v3450, %v3450
        %v3495 = vmul.f32 %v3451, %v3451
        %v3496 = vmul.f32 %v3452, %v3452
        %v3497 = vmul.f32 %v3453, %v3453
        %v3498 = vmul.f32 %v3454, %v3454
        %v3499 = vmul.f32 %v3455, %v3455
        %v3500 = vadd.f32 %v3484, %v3485
        %v3501 = vadd.f32 %v3500, %v3486
        %v3502 = vadd.f32 %v3501, %v3487
        %v3503 = vadd.f32 %v3502, %v3488
        %v3504 = vadd.f32 %v3503, %v3489
        %v3505 = vadd.f32 %v3504, %v3490
        %v3506 = vadd.f32 %v3505, %v3491
        %v3507 = vrot.slane %v3506, 4
        %v3508 = vadd.f32 %v3506, %v3507
        %v3509 = vrot.slane %v3508, 2
        %v3510 = vadd.f32 %v3508, %v3509
        %v3511 = vrot.slane %v3510, 1
        %v3512 = vadd.f32 %v3510, %v3511
        %v3513 = vadd.f32 %v3492, %v3493
        %v3514 = vadd.f32 %v3513, %v3494
        %v3515 = vadd.f32 %v3514, %v3495
        %v3516 = vadd.f32 %v3515, %v3496
        %v3517 = vadd.f32 %v3516, %v3497
        %v3518 = vadd.f32 %v3517, %v3498
        %v3519 = vadd.f32 %v3518, %v3499
        %v3520 = vrot.slane %v3519, 4
        %v3521 = vadd.f32 %v3519, %v3520
        %v3522 = vrot.slane %v3521, 2
        %v3523 = vadd.f32 %v3521, %v3522
        %v3524 = vrot.slane %v3523, 1
        %v3525 = vadd.f32 %v3523, %v3524
        %v3528 = vsel %vm788, %v3483, %v3470
        %3530 = vmatprep.subr.mxu0 0.0
        %3531 = vmatpush1.msra.mxu0 %v702
        %3532 = vmatprep.subr.mxu0 0.0
        %3533 = vmatpush1.msra.mxu0 %v703
        %3534 = vmatprep.subr.mxu0 0.0
        %3535 = vmatpush1.msra.mxu0 %v704
        %3536 = vmatprep.subr.mxu0 0.0
        %3537 = vmatpush1.msra.mxu0 %v705
        %3538 = vmatprep.subr.mxu0 0.0
        %3539 = vmatpush1.msra.mxu0 %v706
        %3540 = vmatprep.subr.mxu0 0.0
        %3541 = vmatpush1.msra.mxu0 %v707
        %3542 = vmatprep.subr.mxu0 0.0
        %3543 = vmatpush1.msra.mxu0 %v708
        %3544 = vmatprep.subr.mxu0 0.0
        %3545 = vmatpush1.msra.mxu0 %v709
        %3546 = vmatprep.subr.mxu0 0.0
        %3547 = vmatpush1.msra.mxu0 %v710
        %3548 = vmatprep.subr.mxu0 0.0
        %3549 = vmatpush1.msra.mxu0 %v711
        %3550 = vmatprep.subr.mxu0 0.0
        %3551 = vmatpush1.msra.mxu0 %v712
        %3552 = vmatprep.subr.mxu0 0.0
        %3553 = vmatpush1.msra.mxu0 %v713
        %3554 = vmatprep.subr.mxu0 0.0
        %3555 = vmatpush1.msra.mxu0 %v714
        %3556 = vmatprep.subr.mxu0 0.0
        %3557 = vmatpush1.msra.mxu0 %v715
        %3558 = vmatprep.subr.mxu0 0.0
        %3559 = vmatpush1.msra.mxu0 %v716
        %3560 = vmatprep.subr.mxu0 0.0
        %3561 = vmatpush1.msra.mxu0 %v717
        %3562 = vmatprep.subr.mxu0 0.0
        %3563 = vmatpush1.msra.mxu0 0.0
        %3564 = vmatprep.subr.mxu0 0.0
        %3565 = vmatpush1.msra.mxu0 0.0
        %3566 = vmatprep.subr.mxu0 0.0
        %3567 = vmatpush1.msra.mxu0 0.0
        %3568 = vmatprep.subr.mxu0 0.0
        %3569 = vmatpush1.msra.mxu0 0.0
        %3570 = vmatprep.subr.mxu0 0.0
        %3571 = vmatpush1.msra.mxu0 0.0
        %3572 = vmatprep.subr.mxu0 0.0
        %3573 = vmatpush1.msra.mxu0 0.0
        %3574 = vmatprep.subr.mxu0 0.0
        %3575 = vmatpush1.msra.mxu0 0.0
        %3576 = vmatprep.subr.mxu0 0.0
        %3577 = vmatpush1.msra.mxu0 0.0
        %3578 = vmatprep.subr.mxu0 0.0
        %3579 = vmatpush1.msra.mxu0 0.0
        %3580 = vmatprep.subr.mxu0 0.0
        %3581 = vmatpush1.msra.mxu0 0.0
        %3582 = vmatprep.subr.mxu0 0.0
        %3583 = vmatpush1.msra.mxu0 0.0
        %3584 = vmatprep.subr.mxu0 0.0
        %3585 = vmatpush1.msra.mxu0 0.0
        %3586 = vmatprep.subr.mxu0 0.0
        %3587 = vmatpush1.msra.mxu0 0.0
        %3588 = vmatprep.subr.mxu0 0.0
        %3589 = vmatpush1.msra.mxu0 0.0
        %3590 = vmatprep.subr.mxu0 0.0
        %3591 = vmatpush1.msra.mxu0 0.0
        %3592 = vmatprep.subr.mxu0 0.0
        %3593 = vmatpush1.msra.mxu0 0.0
        %3594 = vmatprep.mubr.f32.mxu0 0.0
        %3595 = vmatmul.mubr.f32.gmra.mrb[0].mxu0 %v3528
        %v3596 = vpop.f32.mrb[0].mxu0
        %v3597 = vadd.f32 0.0, %v3596
        %v3598 = vpop.f32.mrb[0].mxu0
        %3599 = vdwg.mxu0
        %v3602 = vsel %vm788, %v3525, %v3512
        %3604 = vmatprep.subr.mxu0 0.0
        %3605 = vmatpush1.msra.mxu0 %v702
        %3606 = vmatprep.subr.mxu0 0.0
        %3607 = vmatpush1.msra.mxu0 %v703
        %3608 = vmatprep.subr.mxu0 0.0
        %3609 = vmatpush1.msra.mxu0 %v704
        %3610 = vmatprep.subr.mxu0 0.0
        %3611 = vmatpush1.msra.mxu0 %v705
        %3612 = vmatprep.subr.mxu0 0.0
        %3613 = vmatpush1.msra.mxu0 %v706
        %3614 = vmatprep.subr.mxu0 0.0
        %3615 = vmatpush1.msra.mxu0 %v707
        %3616 = vmatprep.subr.mxu0 0.0
        %3617 = vmatpush1.msra.mxu0 %v708
        %3618 = vmatprep.subr.mxu0 0.0
        %3619 = vmatpush1.msra.mxu0 %v709
        %3620 = vmatprep.subr.mxu0 0.0
        %3621 = vmatpush1.msra.mxu0 %v710
        %3622 = vmatprep.subr.mxu0 0.0
        %3623 = vmatpush1.msra.mxu0 %v711
        %3624 = vmatprep.subr.mxu0 0.0
        %3625 = vmatpush1.msra.mxu0 %v712
        %3626 = vmatprep.subr.mxu0 0.0
        %3627 = vmatpush1.msra.mxu0 %v713
        %3628 = vmatprep.subr.mxu0 0.0
        %3629 = vmatpush1.msra.mxu0 %v714
        %3630 = vmatprep.subr.mxu0 0.0
        %3631 = vmatpush1.msra.mxu0 %v715
        %3632 = vmatprep.subr.mxu0 0.0
        %3633 = vmatpush1.msra.mxu0 %v716
        %3634 = vmatprep.subr.mxu0 0.0
        %3635 = vmatpush1.msra.mxu0 %v717
        %3636 = vmatprep.subr.mxu0 0.0
        %3637 = vmatpush1.msra.mxu0 0.0
        %3638 = vmatprep.subr.mxu0 0.0
        %3639 = vmatpush1.msra.mxu0 0.0
        %3640 = vmatprep.subr.mxu0 0.0
        %3641 = vmatpush1.msra.mxu0 0.0
        %3642 = vmatprep.subr.mxu0 0.0
        %3643 = vmatpush1.msra.mxu0 0.0
        %3644 = vmatprep.subr.mxu0 0.0
        %3645 = vmatpush1.msra.mxu0 0.0
        %3646 = vmatprep.subr.mxu0 0.0
        %3647 = vmatpush1.msra.mxu0 0.0
        %3648 = vmatprep.subr.mxu0 0.0
        %3649 = vmatpush1.msra.mxu0 0.0
        %3650 = vmatprep.subr.mxu0 0.0
        %3651 = vmatpush1.msra.mxu0 0.0
        %3652 = vmatprep.subr.mxu0 0.0
        %3653 = vmatpush1.msra.mxu0 0.0
        %3654 = vmatprep.subr.mxu0 0.0
        %3655 = vmatpush1.msra.mxu0 0.0
        %3656 = vmatprep.subr.mxu0 0.0
        %3657 = vmatpush1.msra.mxu0 0.0
        %3658 = vmatprep.subr.mxu0 0.0
        %3659 = vmatpush1.msra.mxu0 0.0
        %3660 = vmatprep.subr.mxu0 0.0
        %3661 = vmatpush1.msra.mxu0 0.0
        %3662 = vmatprep.subr.mxu0 0.0
        %3663 = vmatpush1.msra.mxu0 0.0
        %3664 = vmatprep.subr.mxu0 0.0
        %3665 = vmatpush1.msra.mxu0 0.0
        %3666 = vmatprep.subr.mxu0 0.0
        %3667 = vmatpush1.msra.mxu0 0.0
        %3668 = vmatprep.mubr.f32.mxu0 0.0
        %3669 = vmatmul.mubr.f32.gmra.mrb[0].mxu0 %v3602
        %v3670 = vpop.f32.mrb[0].mxu0
        %v3671 = vadd.f32 0.0, %v3670
        %v3672 = vpop.f32.mrb[0].mxu0
        %3673 = vdwg.mxu0
        %v3674 = vmul.f32 %v3597, %v3597
        %v3675 = vsub.f32 %v3671, %v3674
        %v3676 = vadd.f32 %v3675, 1e-05
        %v3677 = vrsqrt.pop %v3676
        %v3679 = vlaneseq
        %v3680 = vshrl.u32 %v3679, 7
        %v3681 = vsub.s32 0, %v3680
        %v3682 = vrot.slane %v3456, %v3681
        %v3684 = vmul.f32 %v3677, %v3682
        %v3685 = vmul.f32 %v3597, %v3684
        %v3687 = vlaneseq
        %v3688 = vshrl.u32 %v3687, 7
        %v3689 = vsub.s32 0, %v3688
        %v3690 = vrot.slane %v3457, %v3689
        %v3692 = vsub.f32 %v3690, %v3685
        %v3695 = vunpack.c.l.s4 1966171168
        %v3696 = vunpack.c.0.s8 %v3695
        %v3697 = vlaneseq
        %v3698 = vshrl.u32 %v3697, 7
        %v3699 = vsub.s32 %v3696, %v3698
        %v3700 = vrot.slane %v3684, %v3699
        %v3701 = vcombine.high %v3700, %v3700
        %v3703 = vunpack.c.l.s4 1966171168
        %v3704 = vunpack.c.0.s8 %v3703
        %v3705 = vlaneseq
        %v3706 = vshrl.u32 %v3705, 7
        %v3707 = vsub.s32 %v3704, %v3706
        %v3708 = vrot.slane %v3700, %v3707
        %v3710 = vunpack.c.l.s4 1966171168
        %v3711 = vunpack.c.0.s8 %v3710
        %v3712 = vlaneseq
        %v3713 = vshrl.u32 %v3712, 7
        %v3714 = vsub.s32 %v3711, %v3713
        %v3715 = vrot.slane %v3701, %v3714
        %v3716 = vlaneseq
        %v3717 = vshrl.u32 %v3716, 7
        %v3718 = vsub.s32 0, %v3717
        %v3719 = vrot.slane %v3708, %v3718
        %v3720 = vlaneseq
        %v3721 = vshrl.u32 %v3720, 7
        %v3722 = vsub.s32 0, %v3721
        %v3723 = vrot.slane %v3715, %v3722
        %v3726 = vmul.f32 %v3440, %v3719
        %v3727 = vmul.f32 %v3441, %v3719
        %v3728 = vmul.f32 %v3442, %v3719
        %v3729 = vmul.f32 %v3443, %v3719
        %v3730 = vmul.f32 %v3444, %v3719
        %v3731 = vmul.f32 %v3445, %v3719
        %v3732 = vmul.f32 %v3446, %v3719
        %v3733 = vmul.f32 %v3447, %v3719
        %v3734 = vmul.f32 %v3448, %v3723
        %v3735 = vmul.f32 %v3449, %v3723
        %v3736 = vmul.f32 %v3450, %v3723
        %v3737 = vmul.f32 %v3451, %v3723
        %v3738 = vmul.f32 %v3452, %v3723
        %v3739 = vmul.f32 %v3453, %v3723
        %v3740 = vmul.f32 %v3454, %v3723
        %v3741 = vmul.f32 %v3455, %v3723
        %v3744 = vunpack.c.l.s4 1966171168
        %v3745 = vunpack.c.0.s8 %v3744
        %v3746 = vlaneseq
        %v3747 = vshrl.u32 %v3746, 7
        %v3748 = vsub.s32 %v3745, %v3747
        %v3749 = vrot.slane %v3692, %v3748
        %v3750 = vcombine.high %v3749, %v3749
        %v3752 = vunpack.c.l.s4 1966171168
        %v3753 = vunpack.c.0.s8 %v3752
        %v3754 = vlaneseq
        %v3755 = vshrl.u32 %v3754, 7
        %v3756 = vsub.s32 %v3753, %v3755
        %v3757 = vrot.slane %v3749, %v3756
        %v3759 = vunpack.c.l.s4 1966171168
        %v3760 = vunpack.c.0.s8 %v3759
        %v3761 = vlaneseq
        %v3762 = vshrl.u32 %v3761, 7
        %v3763 = vsub.s32 %v3760, %v3762
        %v3764 = vrot.slane %v3750, %v3763
        %v3765 = vlaneseq
        %v3766 = vshrl.u32 %v3765, 7
        %v3767 = vsub.s32 0, %v3766
        %v3768 = vrot.slane %v3757, %v3767
        %v3769 = vlaneseq
        %v3770 = vshrl.u32 %v3769, 7
        %v3771 = vsub.s32 0, %v3770
        %v3772 = vrot.slane %v3764, %v3771
        %v3775 = vadd.f32 %v3726, %v3768
        %v3776 = vadd.f32 %v3727, %v3768
        %v3777 = vadd.f32 %v3728, %v3768
        %v3778 = vadd.f32 %v3729, %v3768
        %v3779 = vadd.f32 %v3730, %v3768
        %v3780 = vadd.f32 %v3731, %v3768
        %v3781 = vadd.f32 %v3732, %v3768
        %v3782 = vadd.f32 %v3733, %v3768
        %v3783 = vadd.f32 %v3734, %v3772
        %v3784 = vadd.f32 %v3735, %v3772
        %v3785 = vadd.f32 %v3736, %v3772
        %v3786 = vadd.f32 %v3737, %v3772
        %v3787 = vadd.f32 %v3738, %v3772
        %v3788 = vadd.f32 %v3739, %v3772
        %v3789 = vadd.f32 %v3740, %v3772
        %v3790 = vadd.f32 %v3741, %v3772
        %v3791 = vmul.f32 %v3775, 0.70710677
        %v3792 = vmul.f32 %v3776, 0.70710677
        %v3793 = vmul.f32 %v3777, 0.70710677
        %v3794 = vmul.f32 %v3778, 0.70710677
        %v3795 = vmul.f32 %v3779, 0.70710677
        %v3796 = vmul.f32 %v3780, 0.70710677
        %v3797 = vmul.f32 %v3781, 0.70710677
        %v3798 = vmul.f32 %v3782, 0.70710677
        %v3799 = vmul.f32 %v3783, 0.70710677
        %v3800 = vmul.f32 %v3784, 0.70710677
        %v3801 = vmul.f32 %v3785, 0.70710677
        %v3802 = vmul.f32 %v3786, 0.70710677
        %v3803 = vmul.f32 %v3787, 0.70710677
        %v3804 = vmul.f32 %v3788, 0.70710677
        %v3805 = vmul.f32 %v3789, 0.70710677
        %v3806 = vmul.f32 %v3790, 0.70710677
        %vm3807 = vcmp.lt.f32.partialorder %v3791, 0.0
        %vm3808 = vcmp.lt.f32.partialorder %v3792, 0.0
        %vm3809 = vcmp.lt.f32.partialorder %v3793, 0.0
        %vm3810 = vcmp.lt.f32.partialorder %v3794, 0.0
        %vm3811 = vcmp.lt.f32.partialorder %v3795, 0.0
        %vm3812 = vcmp.lt.f32.partialorder %v3796, 0.0
        %vm3813 = vcmp.lt.f32.partialorder %v3797, 0.0
        %vm3814 = vcmp.lt.f32.partialorder %v3798, 0.0
        %vm3815 = vcmp.lt.f32.partialorder %v3799, 0.0
        %vm3816 = vcmp.lt.f32.partialorder %v3800, 0.0
        %vm3817 = vcmp.lt.f32.partialorder %v3801, 0.0
        %vm3818 = vcmp.lt.f32.partialorder %v3802, 0.0
        %vm3819 = vcmp.lt.f32.partialorder %v3803, 0.0
        %vm3820 = vcmp.lt.f32.partialorder %v3804, 0.0
        %vm3821 = vcmp.lt.f32.partialorder %v3805, 0.0
        %vm3822 = vcmp.lt.f32.partialorder %v3806, 0.0
        %v3823 = vsel %vm3807, -1.0, 1.0
        %v3824 = vsel %vm3808, -1.0, 1.0
        %v3825 = vsel %vm3809, -1.0, 1.0
        %v3826 = vsel %vm3810, -1.0, 1.0
        %v3827 = vsel %vm3811, -1.0, 1.0
        %v3828 = vsel %vm3812, -1.0, 1.0
        %v3829 = vsel %vm3813, -1.0, 1.0
        %v3830 = vsel %vm3814, -1.0, 1.0
        %v3831 = vsel %vm3815, -1.0, 1.0
        %v3832 = vsel %vm3816, -1.0, 1.0
        %v3833 = vsel %vm3817, -1.0, 1.0
        %v3834 = vsel %vm3818, -1.0, 1.0
        %v3835 = vsel %vm3819, -1.0, 1.0
        %v3836 = vsel %vm3820, -1.0, 1.0
        %v3837 = vsel %vm3821, -1.0, 1.0
        %v3838 = vsel %vm3822, -1.0, 1.0
        %v3839 = vand.u32 2147483647, %v3791
        %v3840 = vand.u32 2147483647, %v3792
        %v3841 = vand.u32 2147483647, %v3793
        %v3842 = vand.u32 2147483647, %v3794
        %v3843 = vand.u32 2147483647, %v3795
        %v3844 = vand.u32 2147483647, %v3796
        %v3845 = vand.u32 2147483647, %v3797
        %v3846 = vand.u32 2147483647, %v3798
        %v3847 = vand.u32 2147483647, %v3799
        %v3848 = vand.u32 2147483647, %v3800
        %v3849 = vand.u32 2147483647, %v3801
        %v3850 = vand.u32 2147483647, %v3802
        %v3851 = vand.u32 2147483647, %v3803
        %v3852 = vand.u32 2147483647, %v3804
        %v3853 = vand.u32 2147483647, %v3805
        %v3854 = vand.u32 2147483647, %v3806
        %v3855 = vmul.f32 %v3839, 0.3275911
        %v3856 = vmul.f32 %v3840, 0.3275911
        %v3857 = vmul.f32 %v3841, 0.3275911
        %v3858 = vmul.f32 %v3842, 0.3275911
        %v3859 = vmul.f32 %v3843, 0.3275911
        %v3860 = vmul.f32 %v3844, 0.3275911
        %v3861 = vmul.f32 %v3845, 0.3275911
        %v3862 = vmul.f32 %v3846, 0.3275911
        %v3863 = vmul.f32 %v3847, 0.3275911
        %v3864 = vmul.f32 %v3848, 0.3275911
        %v3865 = vmul.f32 %v3849, 0.3275911
        %v3866 = vmul.f32 %v3850, 0.3275911
        %v3867 = vmul.f32 %v3851, 0.3275911
        %v3868 = vmul.f32 %v3852, 0.3275911
        %v3869 = vmul.f32 %v3853, 0.3275911
        %v3870 = vmul.f32 %v3854, 0.3275911
        %v3871 = vadd.f32 %v3855, 1.0
        %v3872 = vadd.f32 %v3856, 1.0
        %v3873 = vadd.f32 %v3857, 1.0
        %v3874 = vadd.f32 %v3858, 1.0
        %v3875 = vadd.f32 %v3859, 1.0
        %v3876 = vadd.f32 %v3860, 1.0
        %v3877 = vadd.f32 %v3861, 1.0
        %v3878 = vadd.f32 %v3862, 1.0
        %v3879 = vadd.f32 %v3863, 1.0
        %v3880 = vadd.f32 %v3864, 1.0
        %v3881 = vadd.f32 %v3865, 1.0
        %v3882 = vadd.f32 %v3866, 1.0
        %v3883 = vadd.f32 %v3867, 1.0
        %v3884 = vadd.f32 %v3868, 1.0
        %v3885 = vadd.f32 %v3869, 1.0
        %v3886 = vadd.f32 %v3870, 1.0
        %v3887 = vrcp.pop %v3871
        %v3888 = vmul.f32 1.0, %v3887
        %v3889 = vrcp.pop %v3872
        %v3890 = vmul.f32 1.0, %v3889
        %v3891 = vrcp.pop %v3873
        %v3892 = vmul.f32 1.0, %v3891
        %v3893 = vrcp.pop %v3874
        %v3894 = vmul.f32 1.0, %v3893
        %v3895 = vrcp.pop %v3875
        %v3896 = vmul.f32 1.0, %v3895
        %v3897 = vrcp.pop %v3876
        %v3898 = vmul.f32 1.0, %v3897
        %v3899 = vrcp.pop %v3877
        %v3900 = vmul.f32 1.0, %v3899
        %v3901 = vrcp.pop %v3878
        %v3902 = vmul.f32 1.0, %v3901
        %v3903 = vrcp.pop %v3879
        %v3904 = vmul.f32 1.0, %v3903
        %v3905 = vrcp.pop %v3880
        %v3906 = vmul.f32 1.0, %v3905
        %v3907 = vrcp.pop %v3881
        %v3908 = vmul.f32 1.0, %v3907
        %v3909 = vrcp.pop %v3882
        %v3910 = vmul.f32 1.0, %v3909
        %v3911 = vrcp.pop %v3883
        %v3912 = vmul.f32 1.0, %v3911
        %v3913 = vrcp.pop %v3884
        %v3914 = vmul.f32 1.0, %v3913
        %v3915 = vrcp.pop %v3885
        %v3916 = vmul.f32 1.0, %v3915
        %v3917 = vrcp.pop %v3886
        %v3918 = vmul.f32 1.0, %v3917
        %v3919 = vmul.f32 %v3888, 1.0614054
        %v3920 = vmul.f32 %v3890, 1.0614054
        %v3921 = vmul.f32 %v3892, 1.0614054
        %v3922 = vmul.f32 %v3894, 1.0614054
        %v3923 = vmul.f32 %v3896, 1.0614054
        %v3924 = vmul.f32 %v3898, 1.0614054
        %v3925 = vmul.f32 %v3900, 1.0614054
        %v3926 = vmul.f32 %v3902, 1.0614054
        %v3927 = vmul.f32 %v3904, 1.0614054
        %v3928 = vmul.f32 %v3906, 1.0614054
        %v3929 = vmul.f32 %v3908, 1.0614054
        %v3930 = vmul.f32 %v3910, 1.0614054
        %v3931 = vmul.f32 %v3912, 1.0614054
        %v3932 = vmul.f32 %v3914, 1.0614054
        %v3933 = vmul.f32 %v3916, 1.0614054
        %v3934 = vmul.f32 %v3918, 1.0614054
        %v3935 = vadd.f32 %v3919, -1.4531521
        %v3936 = vadd.f32 %v3920, -1.4531521
        %v3937 = vadd.f32 %v3921, -1.4531521
        %v3938 = vadd.f32 %v3922, -1.4531521
        %v3939 = vadd.f32 %v3923, -1.4531521
        %v3940 = vadd.f32 %v3924, -1.4531521
        %v3941 = vadd.f32 %v3925, -1.4531521
        %v3942 = vadd.f32 %v3926, -1.4531521
        %v3943 = vadd.f32 %v3927, -1.4531521
        %v3944 = vadd.f32 %v3928, -1.4531521
        %v3945 = vadd.f32 %v3929, -1.4531521
        %v3946 = vadd.f32 %v3930, -1.4531521
        %v3947 = vadd.f32 %v3931, -1.4531521
        %v3948 = vadd.f32 %v3932, -1.4531521
        %v3949 = vadd.f32 %v3933, -1.4531521
        %v3950 = vadd.f32 %v3934, -1.4531521
        %v3951 = vmul.f32 %v3935, %v3888
        %v3952 = vmul.f32 %v3936, %v3890
        %v3953 = vmul.f32 %v3937, %v3892
        %v3954 = vmul.f32 %v3938, %v3894
        %v3955 = vmul.f32 %v3939, %v3896
        %v3956 = vmul.f32 %v3940, %v3898
        %v3957 = vmul.f32 %v3941, %v3900
        %v3958 = vmul.f32 %v3942, %v3902
        %v3959 = vmul.f32 %v3943, %v3904
        %v3960 = vmul.f32 %v3944, %v3906
        %v3961 = vmul.f32 %v3945, %v3908
        %v3962 = vmul.f32 %v3946, %v3910
        %v3963 = vmul.f32 %v3947, %v3912
        %v3964 = vmul.f32 %v3948, %v3914
        %v3965 = vmul.f32 %v3949, %v3916
        %v3966 = vmul.f32 %v3950, %v3918
        %v3967 = vadd.f32 %v3951, 1.4214138
        %v3968 = vadd.f32 %v3952, 1.4214138
        %v3969 = vadd.f32 %v3953, 1.4214138
        %v3970 = vadd.f32 %v3954, 1.4214138
        %v3971 = vadd.f32 %v3955, 1.4214138
        %v3972 = vadd.f32 %v3956, 1.4214138
        %v3973 = vadd.f32 %v3957, 1.4214138
        %v3974 = vadd.f32 %v3958, 1.4214138
        %v3975 = vadd.f32 %v3959, 1.4214138
        %v3976 = vadd.f32 %v3960, 1.4214138
        %v3977 = vadd.f32 %v3961, 1.4214138
        %v3978 = vadd.f32 %v3962, 1.4214138
        %v3979 = vadd.f32 %v3963, 1.4214138
        %v3980 = vadd.f32 %v3964, 1.4214138
        %v3981 = vadd.f32 %v3965, 1.4214138
        %v3982 = vadd.f32 %v3966, 1.4214138
        %v3983 = vmul.f32 %v3967, %v3888
        %v3984 = vmul.f32 %v3968, %v3890
        %v3985 = vmul.f32 %v3969, %v3892
        %v3986 = vmul.f32 %v3970, %v3894
        %v3987 = vmul.f32 %v3971, %v3896
        %v3988 = vmul.f32 %v3972, %v3898
        %v3989 = vmul.f32 %v3973, %v3900
        %v3990 = vmul.f32 %v3974, %v3902
        %v3991 = vmul.f32 %v3975, %v3904
        %v3992 = vmul.f32 %v3976, %v3906
        %v3993 = vmul.f32 %v3977, %v3908
        %v3994 = vmul.f32 %v3978, %v3910
        %v3995 = vmul.f32 %v3979, %v3912
        %v3996 = vmul.f32 %v3980, %v3914
        %v3997 = vmul.f32 %v3981, %v3916
        %v3998 = vmul.f32 %v3982, %v3918
        %v3999 = vadd.f32 %v3983, -0.28449672
        %v4000 = vadd.f32 %v3984, -0.28449672
        %v4001 = vadd.f32 %v3985, -0.28449672
        %v4002 = vadd.f32 %v3986, -0.28449672
        %v4003 = vadd.f32 %v3987, -0.28449672
        %v4004 = vadd.f32 %v3988, -0.28449672
        %v4005 = vadd.f32 %v3989, -0.28449672
        %v4006 = vadd.f32 %v3990, -0.28449672
        %v4007 = vadd.f32 %v3991, -0.28449672
        %v4008 = vadd.f32 %v3992, -0.28449672
        %v4009 = vadd.f32 %v3993, -0.28449672
        %v4010 = vadd.f32 %v3994, -0.28449672
        %v4011 = vadd.f32 %v3995, -0.28449672
        %v4012 = vadd.f32 %v3996, -0.28449672
        %v4013 = vadd.f32 %v3997, -0.28449672
        %v4014 = vadd.f32 %v3998, -0.28449672
        %v4015 = vmul.f32 %v3999, %v3888
        %v4016 = vmul.f32 %v4000, %v3890
        %v4017 = vmul.f32 %v4001, %v3892
        %v4018 = vmul.f32 %v4002, %v3894
        %v4019 = vmul.f32 %v4003, %v3896
        %v4020 = vmul.f32 %v4004, %v3898
        %v4021 = vmul.f32 %v4005, %v3900
        %v4022 = vmul.f32 %v4006, %v3902
        %v4023 = vmul.f32 %v4007, %v3904
        %v4024 = vmul.f32 %v4008, %v3906
        %v4025 = vmul.f32 %v4009, %v3908
        %v4026 = vmul.f32 %v4010, %v3910
        %v4027 = vmul.f32 %v4011, %v3912
        %v4028 = vmul.f32 %v4012, %v3914
        %v4029 = vmul.f32 %v4013, %v3916
        %v4030 = vmul.f32 %v4014, %v3918
        %v4031 = vadd.f32 %v4015, 0.2548296
        %v4032 = vadd.f32 %v4016, 0.2548296
        %v4033 = vadd.f32 %v4017, 0.2548296
        %v4034 = vadd.f32 %v4018, 0.2548296
        %v4035 = vadd.f32 %v4019, 0.2548296
        %v4036 = vadd.f32 %v4020, 0.2548296
        %v4037 = vadd.f32 %v4021, 0.2548296
        %v4038 = vadd.f32 %v4022, 0.2548296
        %v4039 = vadd.f32 %v4023, 0.2548296
        %v4040 = vadd.f32 %v4024, 0.2548296
        %v4041 = vadd.f32 %v4025, 0.2548296
        %v4042 = vadd.f32 %v4026, 0.2548296
        %v4043 = vadd.f32 %v4027, 0.2548296
        %v4044 = vadd.f32 %v4028, 0.2548296
        %v4045 = vadd.f32 %v4029, 0.2548296
        %v4046 = vadd.f32 %v4030, 0.2548296
        %v4047 = vmul.f32 %v4031, %v3888
        %v4048 = vmul.f32 %v4032, %v3890
        %v4049 = vmul.f32 %v4033, %v3892
        %v4050 = vmul.f32 %v4034, %v3894
        %v4051 = vmul.f32 %v4035, %v3896
        %v4052 = vmul.f32 %v4036, %v3898
        %v4053 = vmul.f32 %v4037, %v3900
        %v4054 = vmul.f32 %v4038, %v3902
        %v4055 = vmul.f32 %v4039, %v3904
        %v4056 = vmul.f32 %v4040, %v3906
        %v4057 = vmul.f32 %v4041, %v3908
        %v4058 = vmul.f32 %v4042, %v3910
        %v4059 = vmul.f32 %v4043, %v3912
        %v4060 = vmul.f32 %v4044, %v3914
        %v4061 = vmul.f32 %v4045, %v3916
        %v4062 = vmul.f32 %v4046, %v3918
        %v4063 = vsub.f32 0.0, %v3839
        %v4064 = vsub.f32 0.0, %v3840
        %v4065 = vsub.f32 0.0, %v3841
        %v4066 = vsub.f32 0.0, %v3842
        %v4067 = vsub.f32 0.0, %v3843
        %v4068 = vsub.f32 0.0, %v3844
        %v4069 = vsub.f32 0.0, %v3845
        %v4070 = vsub.f32 0.0, %v3846
        %v4071 = vsub.f32 0.0, %v3847
        %v4072 = vsub.f32 0.0, %v3848
        %v4073 = vsub.f32 0.0, %v3849
        %v4074 = vsub.f32 0.0, %v3850
        %v4075 = vsub.f32 0.0, %v3851
        %v4076 = vsub.f32 0.0, %v3852
        %v4077 = vsub.f32 0.0, %v3853
        %v4078 = vsub.f32 0.0, %v3854
        %v4079 = vmul.f32 %v4063, %v3839
        %v4080 = vmul.f32 %v4064, %v3840
        %v4081 = vmul.f32 %v4065, %v3841
        %v4082 = vmul.f32 %v4066, %v3842
        %v4083 = vmul.f32 %v4067, %v3843
        %v4084 = vmul.f32 %v4068, %v3844
        %v4085 = vmul.f32 %v4069, %v3845
        %v4086 = vmul.f32 %v4070, %v3846
        %v4087 = vmul.f32 %v4071, %v3847
        %v4088 = vmul.f32 %v4072, %v3848
        %v4089 = vmul.f32 %v4073, %v3849
        %v4090 = vmul.f32 %v4074, %v3850
        %v4091 = vmul.f32 %v4075, %v3851
        %v4092 = vmul.f32 %v4076, %v3852
        %v4093 = vmul.f32 %v4077, %v3853
        %v4094 = vmul.f32 %v4078, %v3854
        %v4095 = vmul.f32 %v4079, 1.442695
        %v4096 = vpow.pop %v4095
        %v4097 = vmul.f32 %v4080, 1.442695
        %v4098 = vpow.pop %v4097
        %v4099 = vmul.f32 %v4081, 1.442695
        %v4100 = vpow.pop %v4099
        %v4101 = vmul.f32 %v4082, 1.442695
        %v4102 = vpow.pop %v4101
        %v4103 = vmul.f32 %v4083, 1.442695
        %v4104 = vpow.pop %v4103
        %v4105 = vmul.f32 %v4084, 1.442695
        %v4106 = vpow.pop %v4105
        %v4107 = vmul.f32 %v4085, 1.442695
        %v4108 = vpow.pop %v4107
        %v4109 = vmul.f32 %v4086, 1.442695
        %v4110 = vpow.pop %v4109
        %v4111 = vmul.f32 %v4087, 1.442695
        %v4112 = vpow.pop %v4111
        %v4113 = vmul.f32 %v4088, 1.442695
        %v4114 = vpow.pop %v4113
        %v4115 = vmul.f32 %v4089, 1.442695
        %v4116 = vpow.pop %v4115
        %v4117 = vmul.f32 %v4090, 1.442695
        %v4118 = vpow.pop %v4117
        %v4119 = vmul.f32 %v4091, 1.442695
        %v4120 = vpow.pop %v4119
        %v4121 = vmul.f32 %v4092, 1.442695
        %v4122 = vpow.pop %v4121
        %v4123 = vmul.f32 %v4093, 1.442695
        %v4124 = vpow.pop %v4123
        %v4125 = vmul.f32 %v4094, 1.442695
        %v4126 = vpow.pop %v4125
        %v4127 = vmul.f32 %v4047, %v4096
        %v4128 = vmul.f32 %v4048, %v4098
        %v4129 = vmul.f32 %v4049, %v4100
        %v4130 = vmul.f32 %v4050, %v4102
        %v4131 = vmul.f32 %v4051, %v4104
        %v4132 = vmul.f32 %v4052, %v4106
        %v4133 = vmul.f32 %v4053, %v4108
        %v4134 = vmul.f32 %v4054, %v4110
        %v4135 = vmul.f32 %v4055, %v4112
        %v4136 = vmul.f32 %v4056, %v4114
        %v4137 = vmul.f32 %v4057, %v4116
        %v4138 = vmul.f32 %v4058, %v4118
        %v4139 = vmul.f32 %v4059, %v4120
        %v4140 = vmul.f32 %v4060, %v4122
        %v4141 = vmul.f32 %v4061, %v4124
        %v4142 = vmul.f32 %v4062, %v4126
        %v4143 = vsub.f32 1.0, %v4127
        %v4144 = vsub.f32 1.0, %v4128
        %v4145 = vsub.f32 1.0, %v4129
        %v4146 = vsub.f32 1.0, %v4130
        %v4147 = vsub.f32 1.0, %v4131
        %v4148 = vsub.f32 1.0, %v4132
        %v4149 = vsub.f32 1.0, %v4133
        %v4150 = vsub.f32 1.0, %v4134
        %v4151 = vsub.f32 1.0, %v4135
        %v4152 = vsub.f32 1.0, %v4136
        %v4153 = vsub.f32 1.0, %v4137
        %v4154 = vsub.f32 1.0, %v4138
        %v4155 = vsub.f32 1.0, %v4139
        %v4156 = vsub.f32 1.0, %v4140
        %v4157 = vsub.f32 1.0, %v4141
        %v4158 = vsub.f32 1.0, %v4142
        %v4159 = vmul.f32 %v3823, %v4143
        %v4160 = vmul.f32 %v3824, %v4144
        %v4161 = vmul.f32 %v3825, %v4145
        %v4162 = vmul.f32 %v3826, %v4146
        %v4163 = vmul.f32 %v3827, %v4147
        %v4164 = vmul.f32 %v3828, %v4148
        %v4165 = vmul.f32 %v3829, %v4149
        %v4166 = vmul.f32 %v3830, %v4150
        %v4167 = vmul.f32 %v3831, %v4151
        %v4168 = vmul.f32 %v3832, %v4152
        %v4169 = vmul.f32 %v3833, %v4153
        %v4170 = vmul.f32 %v3834, %v4154
        %v4171 = vmul.f32 %v3835, %v4155
        %v4172 = vmul.f32 %v3836, %v4156
        %v4173 = vmul.f32 %v3837, %v4157
        %v4174 = vmul.f32 %v3838, %v4158
        %v4175 = vmul.f32 %v3775, 0.5
        %v4176 = vmul.f32 %v3776, 0.5
        %v4177 = vmul.f32 %v3777, 0.5
        %v4178 = vmul.f32 %v3778, 0.5
        %v4179 = vmul.f32 %v3779, 0.5
        %v4180 = vmul.f32 %v3780, 0.5
        %v4181 = vmul.f32 %v3781, 0.5
        %v4182 = vmul.f32 %v3782, 0.5
        %v4183 = vmul.f32 %v3783, 0.5
        %v4184 = vmul.f32 %v3784, 0.5
        %v4185 = vmul.f32 %v3785, 0.5
        %v4186 = vmul.f32 %v3786, 0.5
        %v4187 = vmul.f32 %v3787, 0.5
        %v4188 = vmul.f32 %v3788, 0.5
        %v4189 = vmul.f32 %v3789, 0.5
        %v4190 = vmul.f32 %v3790, 0.5
        %v4191 = vadd.f32 %v4159, 1.0
        %v4192 = vadd.f32 %v4160, 1.0
        %v4193 = vadd.f32 %v4161, 1.0
        %v4194 = vadd.f32 %v4162, 1.0
        %v4195 = vadd.f32 %v4163, 1.0
        %v4196 = vadd.f32 %v4164, 1.0
        %v4197 = vadd.f32 %v4165, 1.0
        %v4198 = vadd.f32 %v4166, 1.0
        %v4199 = vadd.f32 %v4167, 1.0
        %v4200 = vadd.f32 %v4168, 1.0
        %v4201 = vadd.f32 %v4169, 1.0
        %v4202 = vadd.f32 %v4170, 1.0
        %v4203 = vadd.f32 %v4171, 1.0
        %v4204 = vadd.f32 %v4172, 1.0
        %v4205 = vadd.f32 %v4173, 1.0
        %v4206 = vadd.f32 %v4174, 1.0
        %v4207 = vmul.f32 %v4175, %v4191
        %v4208 = vmul.f32 %v4176, %v4192
        %v4209 = vmul.f32 %v4177, %v4193
        %v4210 = vmul.f32 %v4178, %v4194
        %v4211 = vmul.f32 %v4179, %v4195
        %v4212 = vmul.f32 %v4180, %v4196
        %v4213 = vmul.f32 %v4181, %v4197
        %v4214 = vmul.f32 %v4182, %v4198
        %v4215 = vmul.f32 %v4183, %v4199
        %v4216 = vmul.f32 %v4184, %v4200
        %v4217 = vmul.f32 %v4185, %v4201
        %v4218 = vmul.f32 %v4186, %v4202
        %v4219 = vmul.f32 %v4187, %v4203
        %v4220 = vmul.f32 %v4188, %v4204
        %v4221 = vmul.f32 %v4189, %v4205
        %v4222 = vmul.f32 %v4190, %v4206
        %v4223 = vpack.c.bf16 %v4208, %v4207
        %v4224 = vpack.c.bf16 %v4210, %v4209
        %v4225 = vpack.c.bf16 %v4212, %v4211
        %v4226 = vpack.c.bf16 %v4214, %v4213
        %v4227 = vpack.c.bf16 %v4216, %v4215
        %v4228 = vpack.c.bf16 %v4218, %v4217
        %v4229 = vpack.c.bf16 %v4220, %v4219
        %v4230 = vpack.c.bf16 %v4222, %v4221
        %v4231 = vld [vmem:[%s9] sm:$0xf]
        %v4232 = vld [vmem:[%s9 + $0x4] sm:$0xf]
        %v4233 = vld [vmem:[%s9 + $0x8] sm:$0xf]
        %v4234 = vld [vmem:[%s9 + $0xc] sm:$0xf]
        %v4235 = vld [vmem:[%s9 + $0x10] sm:$0xf]
        %v4236 = vld [vmem:[%s9 + $0x14] sm:$0xf]
        %v4237 = vld [vmem:[%s9 + $0x18] sm:$0xf]
        %v4238 = vld [vmem:[%s9 + $0x1c] sm:$0xf]
        %v4239 = vld [vmem:[%s9 + $0x20] sm:$0xf]
        %v4240 = vld [vmem:[%s9 + $0x24] sm:$0xf]
        %v4241 = vld [vmem:[%s9 + $0x28] sm:$0xf]
        %v4242 = vld [vmem:[%s9 + $0x2c] sm:$0xf]
        %v4243 = vld [vmem:[%s9 + $0x30] sm:$0xf]
        %v4244 = vld [vmem:[%s9 + $0x34] sm:$0xf]
        %v4245 = vld [vmem:[%s9 + $0x38] sm:$0xf]
        %v4246 = vld [vmem:[%s9 + $0x3c] sm:$0xf]
        %v4247 = vld [vmem:[%s10] sm:$0x1]
        %v4249 = vlaneseq
        %v4250 = vshrl.u32 %v4249, 7
        %v4251 = vsub.s32 0, %v4250
        %v4252 = vrot.slane %v4247, %v4251
        %v4270 = vunpack.c.l.b16 %v4231
        %v4271 = vunpack.c.l.b16 %v4232
        %v4272 = vunpack.c.l.b16 %v4233
        %v4273 = vunpack.c.l.b16 %v4234
        %v4274 = vunpack.c.l.b16 %v4235
        %v4275 = vunpack.c.l.b16 %v4236
        %v4276 = vunpack.c.l.b16 %v4237
        %v4277 = vunpack.c.l.b16 %v4238
        %v4278 = vunpack.c.l.b16 %v4239
        %v4279 = vunpack.c.l.b16 %v4240
        %v4280 = vunpack.c.l.b16 %v4241
        %v4281 = vunpack.c.l.b16 %v4242
        %v4282 = vunpack.c.l.b16 %v4243
        %v4283 = vunpack.c.l.b16 %v4244
        %v4284 = vunpack.c.l.b16 %v4245
        %v4285 = vunpack.c.l.b16 %v4246
        %v4286 = vpack.c.b16 %v4271, %v4270
        %v4287 = vpack.c.b16 %v4273, %v4272
        %v4288 = vpack.c.b16 %v4275, %v4274
        %v4289 = vpack.c.b16 %v4277, %v4276
        %v4290 = vpack.c.b16 %v4279, %v4278
        %v4291 = vpack.c.b16 %v4281, %v4280
        %v4292 = vpack.c.b16 %v4283, %v4282
        %v4293 = vpack.c.b16 %v4285, %v4284
        %4302 = vmatprep.subr.bf16.mxu0 0
        %4303 = vmatpush1.bf16.msra.mxu0 %v4286
        %4304 = vmatprep.subr.bf16.mxu0 0
        %4305 = vmatpush1.bf16.msra.mxu0 %v4287
        %4306 = vmatprep.subr.bf16.mxu0 0
        %4307 = vmatpush1.bf16.msra.mxu0 %v4288
        %4308 = vmatprep.subr.bf16.mxu0 0
        %4309 = vmatpush1.bf16.msra.mxu0 %v4289
        %4310 = vmatprep.subr.bf16.mxu0 0
        %4311 = vmatpush1.bf16.msra.mxu0 %v4290
        %4312 = vmatprep.subr.bf16.mxu0 0
        %4313 = vmatpush1.bf16.msra.mxu0 %v4291
        %4314 = vmatprep.subr.bf16.mxu0 0
        %4315 = vmatpush1.bf16.msra.mxu0 %v4292
        %4316 = vmatprep.subr.bf16.mxu0 0
        %4317 = vmatpush1.bf16.msra.mxu0 %v4293
        %4318 = vmatprep.subr.bf16.mxu0 0
        %4319 = vmatpush1.bf16.msra.mxu0 0
        %4320 = vmatprep.subr.bf16.mxu0 0
        %4321 = vmatpush1.bf16.msra.mxu0 0
        %4322 = vmatprep.subr.bf16.mxu0 0
        %4323 = vmatpush1.bf16.msra.mxu0 0
        %4324 = vmatprep.subr.bf16.mxu0 0
        %4325 = vmatpush1.bf16.msra.mxu0 0
        %4326 = vmatprep.subr.bf16.mxu0 0
        %4327 = vmatpush1.bf16.msra.mxu0 0
        %4328 = vmatprep.subr.bf16.mxu0 0
        %4329 = vmatpush1.bf16.msra.mxu0 0
        %4330 = vmatprep.subr.bf16.mxu0 0
        %4331 = vmatpush1.bf16.msra.mxu0 0
        %4332 = vmatprep.subr.bf16.mxu0 0
        %4333 = vmatpush1.bf16.msra.mxu0 0
        %4334 = vmatprep.mubr.bf16.mxu0 0
        %4335 = vmatmul.mubr.bf16.gmra.mrb[0].mxu0 %v4223
        %v4336 = vpop.f32.mrb[0].mxu0
        %v4337 = vadd.f32 %v4252, %v4336
        %v4338 = vpop.f32.mrb[0].mxu0
        %v4339 = vpop.f32.mrb[0].mxu0
        %v4340 = vadd.f32 %v4252, %v4339
        %v4341 = vpop.f32.mrb[0].mxu0
        %4342 = vmatprep.mubr.bf16.mxu0 0
        %4343 = vmatmul.mubr.bf16.gmra.mrb[0].mxu0 %v4224
        %v4344 = vpop.f32.mrb[0].mxu0
        %v4345 = vadd.f32 %v4252, %v4344
        %v4346 = vpop.f32.mrb[0].mxu0
        %v4347 = vpop.f32.mrb[0].mxu0
        %v4348 = vadd.f32 %v4252, %v4347
        %v4349 = vpop.f32.mrb[0].mxu0
        %4350 = vmatprep.mubr.bf16.mxu0 0
        %4351 = vmatmul.mubr.bf16.gmra.mrb[0].mxu0 %v4225
        %v4352 = vpop.f32.mrb[0].mxu0
        %v4353 = vadd.f32 %v4252, %v4352
        %v4354 = vpop.f32.mrb[0].mxu0
        %v4355 = vpop.f32.mrb[0].mxu0
        %v4356 = vadd.f32 %v4252, %v4355
        %v4357 = vpop.f32.mrb[0].mxu0
        %4358 = vmatprep.mubr.bf16.mxu0 0
        %4359 = vmatmul.mubr.bf16.gmra.mrb[0].mxu0 %v4226
        %v4360 = vpop.f32.mrb[0].mxu0
        %v4361 = vadd.f32 %v4252, %v4360
        %v4362 = vpop.f32.mrb[0].mxu0
        %v4363 = vpop.f32.mrb[0].mxu0
        %v4364 = vadd.f32 %v4252, %v4363
        %v4365 = vpop.f32.mrb[0].mxu0
        %4366 = vmatprep.mubr.bf16.mxu0 0
        %4367 = vmatmul.mubr.bf16.gmra.mrb[0].mxu0 %v4227
        %v4368 = vpop.f32.mrb[0].mxu0
        %v4369 = vadd.f32 %v4252, %v4368
        %v4370 = vpop.f32.mrb[0].mxu0
        %v4371 = vpop.f32.mrb[0].mxu0
        %v4372 = vadd.f32 %v4252, %v4371
        %v4373 = vpop.f32.mrb[0].mxu0
        %4374 = vmatprep.mubr.bf16.mxu0 0
        %4375 = vmatmul.mubr.bf16.gmra.mrb[0].mxu0 %v4228
        %v4376 = vpop.f32.mrb[0].mxu0
        %v4377 = vadd.f32 %v4252, %v4376
        %v4378 = vpop.f32.mrb[0].mxu0
        %v4379 = vpop.f32.mrb[0].mxu0
        %v4380 = vadd.f32 %v4252, %v4379
        %v4381 = vpop.f32.mrb[0].mxu0
        %4382 = vmatprep.mubr.bf16.mxu0 0
        %4383 = vmatmul.mubr.bf16.gmra.mrb[0].mxu0 %v4229
        %v4384 = vpop.f32.mrb[0].mxu0
        %v4385 = vadd.f32 %v4252, %v4384
        %v4386 = vpop.f32.mrb[0].mxu0
        %v4387 = vpop.f32.mrb[0].mxu0
        %v4388 = vadd.f32 %v4252, %v4387
        %v4389 = vpop.f32.mrb[0].mxu0
        %4390 = vmatprep.mubr.bf16.mxu0 0
        %4391 = vmatmul.mubr.bf16.gmra.mrb[0].mxu0 %v4230
        %v4392 = vpop.f32.mrb[0].mxu0
        %v4393 = vadd.f32 %v4252, %v4392
        %v4394 = vpop.f32.mrb[0].mxu0
        %v4395 = vpop.f32.mrb[0].mxu0
        %v4396 = vadd.f32 %v4252, %v4395
        %v4397 = vpop.f32.mrb[0].mxu0
        %4398 = vdwg.mxu0
        %v4399 = vld [vmem:[%s11] sm:$0x1]
        %v4400 = vld [vmem:[%s12] sm:$0x1]
        %v4401 = vld [vmem:[%s14] sm:$0xff]
        %v4402 = vld [vmem:[%s14 + $0x8] sm:$0xff]
        %v4403 = vld [vmem:[%s14 + $0x10] sm:$0xff]
        %v4404 = vld [vmem:[%s14 + $0x18] sm:$0xff]
        %v4405 = vld [vmem:[%s14 + $0x20] sm:$0xff]
        %v4406 = vld [vmem:[%s14 + $0x28] sm:$0xff]
        %v4407 = vld [vmem:[%s14 + $0x30] sm:$0xff]
        %v4408 = vld [vmem:[%s14 + $0x38] sm:$0xff]
        %v4409 = vld [vmem:[%s14 + $0x40] sm:$0xff]
        %v4410 = vld [vmem:[%s14 + $0x48] sm:$0xff]
        %v4411 = vld [vmem:[%s14 + $0x50] sm:$0xff]
        %v4412 = vld [vmem:[%s14 + $0x58] sm:$0xff]
        %v4413 = vld [vmem:[%s14 + $0x60] sm:$0xff]
        %v4414 = vld [vmem:[%s14 + $0x68] sm:$0xff]
        %v4415 = vld [vmem:[%s14 + $0x70] sm:$0xff]
        %v4416 = vld [vmem:[%s14 + $0x78] sm:$0xff]
        %v4417 = vadd.f32 %v4337, %v4340
        %v4418 = vadd.f32 %v4417, %v4345
        %v4419 = vadd.f32 %v4418, %v4348
        %v4420 = vadd.f32 %v4419, %v4353
        %v4421 = vadd.f32 %v4420, %v4356
        %v4422 = vadd.f32 %v4421, %v4361
        %v4423 = vadd.f32 %v4422, %v4364
        %v4424 = vrot.slane %v4423, 4
        %v4425 = vadd.f32 %v4423, %v4424
        %v4426 = vrot.slane %v4425, 2
        %v4427 = vadd.f32 %v4425, %v4426
        %v4428 = vrot.slane %v4427, 1
        %v4429 = vadd.f32 %v4427, %v4428
        %v4430 = vadd.f32 %v4369, %v4372
        %v4431 = vadd.f32 %v4430, %v4377
        %v4432 = vadd.f32 %v4431, %v4380
        %v4433 = vadd.f32 %v4432, %v4385
        %v4434 = vadd.f32 %v4433, %v4388
        %v4435 = vadd.f32 %v4434, %v4393
        %v4436 = vadd.f32 %v4435, %v4396
        %v4437 = vrot.slane %v4436, 4
        %v4438 = vadd.f32 %v4436, %v4437
        %v4439 = vrot.slane %v4438, 2
        %v4440 = vadd.f32 %v4438, %v4439
        %v4441 = vrot.slane %v4440, 1
        %v4442 = vadd.f32 %v4440, %v4441
        %v4443 = vmul.f32 %v4337, %v4337
        %v4444 = vmul.f32 %v4340, %v4340
        %v4445 = vmul.f32 %v4345, %v4345
        %v4446 = vmul.f32 %v4348, %v4348
        %v4447 = vmul.f32 %v4353, %v4353
        %v4448 = vmul.f32 %v4356, %v4356
        %v4449 = vmul.f32 %v4361, %v4361
        %v4450 = vmul.f32 %v4364, %v4364
        %v4451 = vmul.f32 %v4369, %v4369
        %v4452 = vmul.f32 %v4372, %v4372
        %v4453 = vmul.f32 %v4377, %v4377
        %v4454 = vmul.f32 %v4380, %v4380
        %v4455 = vmul.f32 %v4385, %v4385
        %v4456 = vmul.f32 %v4388, %v4388
        %v4457 = vmul.f32 %v4393, %v4393
        %v4458 = vmul.f32 %v4396, %v4396
        %v4459 = vadd.f32 %v4443, %v4444
        %v4460 = vadd.f32 %v4459, %v4445
        %v4461 = vadd.f32 %v4460, %v4446
        %v4462 = vadd.f32 %v4461, %v4447
        %v4463 = vadd.f32 %v4462, %v4448
        %v4464 = vadd.f32 %v4463, %v4449
        %v4465 = vadd.f32 %v4464, %v4450
        %v4466 = vrot.slane %v4465, 4
        %v4467 = vadd.f32 %v4465, %v4466
        %v4468 = vrot.slane %v4467, 2
        %v4469 = vadd.f32 %v4467, %v4468
        %v4470 = vrot.slane %v4469, 1
        %v4471 = vadd.f32 %v4469, %v4470
        %v4472 = vadd.f32 %v4451, %v4452
        %v4473 = vadd.f32 %v4472, %v4453
        %v4474 = vadd.f32 %v4473, %v4454
        %v4475 = vadd.f32 %v4474, %v4455
        %v4476 = vadd.f32 %v4475, %v4456
        %v4477 = vadd.f32 %v4476, %v4457
        %v4478 = vadd.f32 %v4477, %v4458
        %v4479 = vrot.slane %v4478, 4
        %v4480 = vadd.f32 %v4478, %v4479
        %v4481 = vrot.slane %v4480, 2
        %v4482 = vadd.f32 %v4480, %v4481
        %v4483 = vrot.slane %v4482, 1
        %v4484 = vadd.f32 %v4482, %v4483
        %v4487 = vsel %vm788, %v4442, %v4429
        %4489 = vmatprep.subr.mxu0 0.0
        %4490 = vmatpush1.msra.mxu0 %v4401
        %4491 = vmatprep.subr.mxu0 0.0
        %4492 = vmatpush1.msra.mxu0 %v4402
        %4493 = vmatprep.subr.mxu0 0.0
        %4494 = vmatpush1.msra.mxu0 %v4403
        %4495 = vmatprep.subr.mxu0 0.0
        %4496 = vmatpush1.msra.mxu0 %v4404
        %4497 = vmatprep.subr.mxu0 0.0
        %4498 = vmatpush1.msra.mxu0 %v4405
        %4499 = vmatprep.subr.mxu0 0.0
        %4500 = vmatpush1.msra.mxu0 %v4406
        %4501 = vmatprep.subr.mxu0 0.0
        %4502 = vmatpush1.msra.mxu0 %v4407
        %4503 = vmatprep.subr.mxu0 0.0
        %4504 = vmatpush1.msra.mxu0 %v4408
        %4505 = vmatprep.subr.mxu0 0.0
        %4506 = vmatpush1.msra.mxu0 %v4409
        %4507 = vmatprep.subr.mxu0 0.0
        %4508 = vmatpush1.msra.mxu0 %v4410
        %4509 = vmatprep.subr.mxu0 0.0
        %4510 = vmatpush1.msra.mxu0 %v4411
        %4511 = vmatprep.subr.mxu0 0.0
        %4512 = vmatpush1.msra.mxu0 %v4412
        %4513 = vmatprep.subr.mxu0 0.0
        %4514 = vmatpush1.msra.mxu0 %v4413
        %4515 = vmatprep.subr.mxu0 0.0
        %4516 = vmatpush1.msra.mxu0 %v4414
        %4517 = vmatprep.subr.mxu0 0.0
        %4518 = vmatpush1.msra.mxu0 %v4415
        %4519 = vmatprep.subr.mxu0 0.0
        %4520 = vmatpush1.msra.mxu0 %v4416
        %4521 = vmatprep.subr.mxu0 0.0
        %4522 = vmatpush1.msra.mxu0 0.0
        %4523 = vmatprep.subr.mxu0 0.0
        %4524 = vmatpush1.msra.mxu0 0.0
        %4525 = vmatprep.subr.mxu0 0.0
        %4526 = vmatpush1.msra.mxu0 0.0
        %4527 = vmatprep.subr.mxu0 0.0
        %4528 = vmatpush1.msra.mxu0 0.0
        %4529 = vmatprep.subr.mxu0 0.0
        %4530 = vmatpush1.msra.mxu0 0.0
        %4531 = vmatprep.subr.mxu0 0.0
        %4532 = vmatpush1.msra.mxu0 0.0
        %4533 = vmatprep.subr.mxu0 0.0
        %4534 = vmatpush1.msra.mxu0 0.0
        %4535 = vmatprep.subr.mxu0 0.0
        %4536 = vmatpush1.msra.mxu0 0.0
        %4537 = vmatprep.subr.mxu0 0.0
        %4538 = vmatpush1.msra.mxu0 0.0
        %4539 = vmatprep.subr.mxu0 0.0
        %4540 = vmatpush1.msra.mxu0 0.0
        %4541 = vmatprep.subr.mxu0 0.0
        %4542 = vmatpush1.msra.mxu0 0.0
        %4543 = vmatprep.subr.mxu0 0.0
        %4544 = vmatpush1.msra.mxu0 0.0
        %4545 = vmatprep.subr.mxu0 0.0
        %4546 = vmatpush1.msra.mxu0 0.0
        %4547 = vmatprep.subr.mxu0 0.0
        %4548 = vmatpush1.msra.mxu0 0.0
        %4549 = vmatprep.subr.mxu0 0.0
        %4550 = vmatpush1.msra.mxu0 0.0
        %4551 = vmatprep.subr.mxu0 0.0
        %4552 = vmatpush1.msra.mxu0 0.0
        %4553 = vmatprep.mubr.f32.mxu0 0.0
        %4554 = vmatmul.mubr.f32.gmra.mrb[0].mxu0 %v4487
        %v4555 = vpop.f32.mrb[0].mxu0
        %v4556 = vadd.f32 0.0, %v4555
        %v4557 = vpop.f32.mrb[0].mxu0
        %4558 = vdwg.mxu0
        %v4561 = vsel %vm788, %v4484, %v4471
        %4563 = vmatprep.subr.mxu0 0.0
        %4564 = vmatpush1.msra.mxu0 %v4401
        %4565 = vmatprep.subr.mxu0 0.0
        %4566 = vmatpush1.msra.mxu0 %v4402
        %4567 = vmatprep.subr.mxu0 0.0
        %4568 = vmatpush1.msra.mxu0 %v4403
        %4569 = vmatprep.subr.mxu0 0.0
        %4570 = vmatpush1.msra.mxu0 %v4404
        %4571 = vmatprep.subr.mxu0 0.0
        %4572 = vmatpush1.msra.mxu0 %v4405
        %4573 = vmatprep.subr.mxu0 0.0
        %4574 = vmatpush1.msra.mxu0 %v4406
        %4575 = vmatprep.subr.mxu0 0.0
        %4576 = vmatpush1.msra.mxu0 %v4407
        %4577 = vmatprep.subr.mxu0 0.0
        %4578 = vmatpush1.msra.mxu0 %v4408
        %4579 = vmatprep.subr.mxu0 0.0
        %4580 = vmatpush1.msra.mxu0 %v4409
        %4581 = vmatprep.subr.mxu0 0.0
        %4582 = vmatpush1.msra.mxu0 %v4410
        %4583 = vmatprep.subr.mxu0 0.0
        %4584 = vmatpush1.msra.mxu0 %v4411
        %4585 = vmatprep.subr.mxu0 0.0
        %4586 = vmatpush1.msra.mxu0 %v4412
        %4587 = vmatprep.subr.mxu0 0.0
        %4588 = vmatpush1.msra.mxu0 %v4413
        %4589 = vmatprep.subr.mxu0 0.0
        %4590 = vmatpush1.msra.mxu0 %v4414
        %4591 = vmatprep.subr.mxu0 0.0
        %4592 = vmatpush1.msra.mxu0 %v4415
        %4593 = vmatprep.subr.mxu0 0.0
        %4594 = vmatpush1.msra.mxu0 %v4416
        %4595 = vmatprep.subr.mxu0 0.0
        %4596 = vmatpush1.msra.mxu0 0.0
        %4597 = vmatprep.subr.mxu0 0.0
        %4598 = vmatpush1.msra.mxu0 0.0
        %4599 = vmatprep.subr.mxu0 0.0
        %4600 = vmatpush1.msra.mxu0 0.0
        %4601 = vmatprep.subr.mxu0 0.0
        %4602 = vmatpush1.msra.mxu0 0.0
        %4603 = vmatprep.subr.mxu0 0.0
        %4604 = vmatpush1.msra.mxu0 0.0
        %4605 = vmatprep.subr.mxu0 0.0
        %4606 = vmatpush1.msra.mxu0 0.0
        %4607 = vmatprep.subr.mxu0 0.0
        %4608 = vmatpush1.msra.mxu0 0.0
        %4609 = vmatprep.subr.mxu0 0.0
        %4610 = vmatpush1.msra.mxu0 0.0
        %4611 = vmatprep.subr.mxu0 0.0
        %4612 = vmatpush1.msra.mxu0 0.0
        %4613 = vmatprep.subr.mxu0 0.0
        %4614 = vmatpush1.msra.mxu0 0.0
        %4615 = vmatprep.subr.mxu0 0.0
        %4616 = vmatpush1.msra.mxu0 0.0
        %4617 = vmatprep.subr.mxu0 0.0
        %4618 = vmatpush1.msra.mxu0 0.0
        %4619 = vmatprep.subr.mxu0 0.0
        %4620 = vmatpush1.msra.mxu0 0.0
        %4621 = vmatprep.subr.mxu0 0.0
        %4622 = vmatpush1.msra.mxu0 0.0
        %4623 = vmatprep.subr.mxu0 0.0
        %4624 = vmatpush1.msra.mxu0 0.0
        %4625 = vmatprep.subr.mxu0 0.0
        %4626 = vmatpush1.msra.mxu0 0.0
        %4627 = vmatprep.mubr.f32.mxu0 0.0
        %4628 = vmatmul.mubr.f32.gmra.mrb[0].mxu0 %v4561
        %v4629 = vpop.f32.mrb[0].mxu0
        %v4630 = vadd.f32 0.0, %v4629
        %v4631 = vpop.f32.mrb[0].mxu0
        %4632 = vdwg.mxu0
        %v4633 = vmul.f32 %v4556, %v4556
        %v4634 = vsub.f32 %v4630, %v4633
        %v4635 = vadd.f32 %v4634, 1e-05
        %v4636 = vrsqrt.pop %v4635
        %v4638 = vlaneseq
        %v4639 = vshrl.u32 %v4638, 7
        %v4640 = vsub.s32 0, %v4639
        %v4641 = vrot.slane %v4399, %v4640
        %v4643 = vmul.f32 %v4636, %v4641
        %v4644 = vmul.f32 %v4556, %v4643
        %v4646 = vlaneseq
        %v4647 = vshrl.u32 %v4646, 7
        %v4648 = vsub.s32 0, %v4647
        %v4649 = vrot.slane %v4400, %v4648
        %v4651 = vsub.f32 %v4649, %v4644
        %v4654 = vunpack.c.l.s4 1966171168
        %v4655 = vunpack.c.0.s8 %v4654
        %v4656 = vlaneseq
        %v4657 = vshrl.u32 %v4656, 7
        %v4658 = vsub.s32 %v4655, %v4657
        %v4659 = vrot.slane %v4643, %v4658
        %v4660 = vcombine.high %v4659, %v4659
        %v4662 = vunpack.c.l.s4 1966171168
        %v4663 = vunpack.c.0.s8 %v4662
        %v4664 = vlaneseq
        %v4665 = vshrl.u32 %v4664, 7
        %v4666 = vsub.s32 %v4663, %v4665
        %v4667 = vrot.slane %v4659, %v4666
        %v4669 = vunpack.c.l.s4 1966171168
        %v4670 = vunpack.c.0.s8 %v4669
        %v4671 = vlaneseq
        %v4672 = vshrl.u32 %v4671, 7
        %v4673 = vsub.s32 %v4670, %v4672
        %v4674 = vrot.slane %v4660, %v4673
        %v4675 = vlaneseq
        %v4676 = vshrl.u32 %v4675, 7
        %v4677 = vsub.s32 0, %v4676
        %v4678 = vrot.slane %v4667, %v4677
        %v4679 = vlaneseq
        %v4680 = vshrl.u32 %v4679, 7
        %v4681 = vsub.s32 0, %v4680
        %v4682 = vrot.slane %v4674, %v4681
        %v4685 = vmul.f32 %v4337, %v4678
        %v4686 = vmul.f32 %v4340, %v4678
        %v4687 = vmul.f32 %v4345, %v4678
        %v4688 = vmul.f32 %v4348, %v4678
        %v4689 = vmul.f32 %v4353, %v4678
        %v4690 = vmul.f32 %v4356, %v4678
        %v4691 = vmul.f32 %v4361, %v4678
        %v4692 = vmul.f32 %v4364, %v4678
        %v4693 = vmul.f32 %v4369, %v4682
        %v4694 = vmul.f32 %v4372, %v4682
        %v4695 = vmul.f32 %v4377, %v4682
        %v4696 = vmul.f32 %v4380, %v4682
        %v4697 = vmul.f32 %v4385, %v4682
        %v4698 = vmul.f32 %v4388, %v4682
        %v4699 = vmul.f32 %v4393, %v4682
        %v4700 = vmul.f32 %v4396, %v4682
        %v4703 = vunpack.c.l.s4 1966171168
        %v4704 = vunpack.c.0.s8 %v4703
        %v4705 = vlaneseq
        %v4706 = vshrl.u32 %v4705, 7
        %v4707 = vsub.s32 %v4704, %v4706
        %v4708 = vrot.slane %v4651, %v4707
        %v4709 = vcombine.high %v4708, %v4708
        %v4711 = vunpack.c.l.s4 1966171168
        %v4712 = vunpack.c.0.s8 %v4711
        %v4713 = vlaneseq
        %v4714 = vshrl.u32 %v4713, 7
        %v4715 = vsub.s32 %v4712, %v4714
        %v4716 = vrot.slane %v4708, %v4715
        %v4718 = vunpack.c.l.s4 1966171168
        %v4719 = vunpack.c.0.s8 %v4718
        %v4720 = vlaneseq
        %v4721 = vshrl.u32 %v4720, 7
        %v4722 = vsub.s32 %v4719, %v4721
        %v4723 = vrot.slane %v4709, %v4722
        %v4724 = vlaneseq
        %v4725 = vshrl.u32 %v4724, 7
        %v4726 = vsub.s32 0, %v4725
        %v4727 = vrot.slane %v4716, %v4726
        %v4728 = vlaneseq
        %v4729 = vshrl.u32 %v4728, 7
        %v4730 = vsub.s32 0, %v4729
        %v4731 = vrot.slane %v4723, %v4730
        %v4734 = vadd.f32 %v4685, %v4727
        %v4735 = vadd.f32 %v4686, %v4727
        %v4736 = vadd.f32 %v4687, %v4727
        %v4737 = vadd.f32 %v4688, %v4727
        %v4738 = vadd.f32 %v4689, %v4727
        %v4739 = vadd.f32 %v4690, %v4727
        %v4740 = vadd.f32 %v4691, %v4727
        %v4741 = vadd.f32 %v4692, %v4727
        %v4742 = vadd.f32 %v4693, %v4731
        %v4743 = vadd.f32 %v4694, %v4731
        %v4744 = vadd.f32 %v4695, %v4731
        %v4745 = vadd.f32 %v4696, %v4731
        %v4746 = vadd.f32 %v4697, %v4731
        %v4747 = vadd.f32 %v4698, %v4731
        %v4748 = vadd.f32 %v4699, %v4731
        %v4749 = vadd.f32 %v4700, %v4731
        %4750 = vst [vmem:[%s530] sm:$0xff] %v4734
        %4751 = vst [vmem:[%s530 + $0x8] sm:$0xff] %v4735
        %4752 = vst [vmem:[%s530 + $0x10] sm:$0xff] %v4736
        %4753 = vst [vmem:[%s530 + $0x18] sm:$0xff] %v4737
        %4754 = vst [vmem:[%s530 + $0x20] sm:$0xff] %v4738
        %4755 = vst [vmem:[%s530 + $0x28] sm:$0xff] %v4739
        %4756 = vst [vmem:[%s530 + $0x30] sm:$0xff] %v4740
        %4757 = vst [vmem:[%s530 + $0x38] sm:$0xff] %v4741
        %4758 = vst [vmem:[%s530 + $0x40] sm:$0xff] %v4742
        %4759 = vst [vmem:[%s530 + $0x48] sm:$0xff] %v4743
        %4760 = vst [vmem:[%s530 + $0x50] sm:$0xff] %v4744
        %4761 = vst [vmem:[%s530 + $0x58] sm:$0xff] %v4745
        %4762 = vst [vmem:[%s530 + $0x60] sm:$0xff] %v4746
        %4763 = vst [vmem:[%s530 + $0x68] sm:$0xff] %v4747
        %4764 = vst [vmem:[%s530 + $0x70] sm:$0xff] %v4748
        %4765 = vst [vmem:[%s530 + $0x78] sm:$0xff] %v4749
        %s4766 = sand.u32 %s380, 1
        %s4767 = scalar_lea.sflag [#allocation4], %s4766
        %s4768 = sand.u32 %s380, 1
        %s4769 = smul.addr %s4768, 128
        %s4770 = scalar_lea.vmem [#allocation5], %s4769
        // Predicated region
        $region89: #{tpu_custom_call.1} parent=83 // pred_check
          %p4771 = pneg %p390
        $region90: #{tpu_custom_call.1} parent=83 // pred_check_branch
          %4773 = sbr.rel (%p4771) target = $region92
        $region91: #{tpu_custom_call.1} parent=83 // pred_region
          %s4774 = smul.u32 16, %s31
          %s4776 = ssub.s32 2048, 2048
          %4777 = vsyncadd %s4767, %s4776
          %s4778 = smul.addr %s4774, 128
          %s4779 = scalar_lea.hbm %s16, %s4778
          %s4780 = sshll.u32 %s4770, 4
          %s4781 = int_to_ptr.vmem [resolvable:$true] %s4780
          %4786 = dma.vmem_to_hbm [thread:$0]  %s4781, 2048, %s4779, %s4767, 128, 128, 8
        $region92: #{tpu_custom_call.1} parent=83 // pred_fallthru
          _
      $region84: #{tpu_custom_call.1} parent=5 // pred_fallthru
        _
      %p4787 = scmp.le.s32.totalorder 2, %s26
      // Predicated region
      $region93: #{tpu_custom_call.1} parent=5 // pred_check
        %p4788 = pneg %p4787
      $region94: #{tpu_custom_call.1} parent=5 // pred_check_branch
        %4790 = sbr.rel (%p4788) target = $region96
      $region95: #{tpu_custom_call.1} parent=5 // pred_region
        %s4791 = ssub.s32 %s26, 2
        // Predicated region
        $region97: #{tpu_custom_call.1} parent=95 // pred_check
          %p4792 = pneg %p396
        $region98: #{tpu_custom_call.1} parent=95 // pred_check_branch
          %4794 = sbr.rel (%p4792) target = $region100
        $region99: #{tpu_custom_call.1} parent=95 // pred_region
          %s4795 = sand.u32 %s381, 1
          %s4796 = scalar_lea.sflag [#allocation4], %s4795
          %s4797 = sand.u32 %s381, 1
          %s4798 = smul.addr %s4797, 128
          %s4799 = scalar_lea.vmem [#allocation5], %s4798
          %4800 = dma.done %s4796, 2048
        $region100: #{tpu_custom_call.1} parent=95 // pred_fallthru
          _
      $region96: #{tpu_custom_call.1} parent=5 // pred_fallthru
        _
    $region6: #{tpu_custom_call.1} parent=1 // loop_footer
      %s30 = sadd.s32 1, %s26
    $region7: #{tpu_custom_call.1} parent=1 // loop_footer_branch
      %25 = sbr.rel target = $region3
    $region8: #{tpu_custom_call.1} parent=1 // loop_exit
      _
    %4801 = vsyncpa [#allocation3], 1
    %s4802 = scalar_lea.sflag [#allocation3], 1
    %4803 = vsyncpa %s4802, 1
    %4804 = vsyncpa [#allocation4], 1
    %s4805 = scalar_lea.sflag [#allocation4], 1
    %4806 = vsyncpa %s4805, 1

</llo_original>
